<compile_context>
chip_gen: v7x
topology: tpu7x:2x2x1
jax: 0.10.0
libtpu: 0.0.40
codegen_flags: <defaults>
</compile_context>

<pallas_src>
import functools
import numpy as np
import jax
import jax.numpy as jnp
from jax import lax
from jax.experimental import pallas as pl
from jax.experimental.pallas import tpu as pltpu  # noqa: F401  (imported per template)


# ---------------------------------------------------------------------------
# Config:  filters_enc=[6,8], filters_dec=[8,8,6], latent=16,
#          num_neighbors=[4,4], sizes=[15,7]  -> P0=16 points (N=15 + pad), P1=8.
# ---------------------------------------------------------------------------
P0, P1, KNBR, B_ENC = 16, 8, 4, 3
F_IN, F_ENC, LATENT, F_DEC = 6, 8, 16, 8
F_PAD = 8                       # encoder input features padded 6 -> 8 (sublane aligned)


# ---------------------------------------------------------------------------
# Fused Pallas kernel
# ---------------------------------------------------------------------------
def _elu(v):
    # ELU(alpha=1); min() guards exp() on the (unselected) positive branch.
    return jnp.where(v > 0.0, v, jnp.exp(jnp.minimum(v, 0.0)) - 1.0)


def _paiconv(xz, gmat, wc, bc, wm, bm, mask, fin, use_elu):
    """One PaiConv layer on flattened rows (all 2-D math).

    xz   : (R, fin)        zero-padded (masked) input rows
    gmat : (KNBR*R, R)     fused (neighbor-gather @ adjweight), tap-major row blocks
    wc   : (KNBR*fin, out_c), bc (1, out_c)   conv Linear (transposed torch weight)
    wm   : (fin, out_c),      bm (1, out_c)   mlp_out Linear
    mask : (R, 1)          zero_padding row mask
    """
    act = _elu if use_elu else (lambda v: v)
    R = xz.shape[0]
    out_c = wc.shape[1]
    # All KNBR gather+adjweight taps in ONE MXU matmul.
    y = act(jnp.dot(gmat, xz, preferred_element_type=jnp.float32))       # (K*R, fin)
    acc = jnp.zeros((R, out_c), jnp.float32)
    for t in range(KNBR):                                                 # 8-aligned slices
        acc = acc + jnp.dot(y[t * R:(t + 1) * R, :],
                            wc[t * fin:(t + 1) * fin, :],
                            preferred_element_type=jnp.float32)
    out_feat = act(acc + bc) * mask
    x_res = jnp.dot(xz, wm, preferred_element_type=jnp.float32) + bm
    return out_feat + x_res


def _fused_forward_kernel(
        xp_ref, genc_ref,
        wce_ref, bce_ref, wme_ref, bme_ref,
        dcomb_ref, wfe_ref, bfe_ref,
        wfd_ref, bfd_ref, u0_ref,
        gd0_ref, wcd0_ref, bcd0_ref, wmd0_ref, bmd0_ref,
        gd1_ref, wcd1_ref, bcd1_ref, wmd1_ref, bmd1_ref,
        o_ref):
    f32 = jnp.float32
    RB = P0 * B_ENC

    # ----- encoder PaiConv(6->8, elu) on the 3 inputs at once (point-major rows) -----
    row_e = lax.broadcasted_iota(jnp.int32, (RB, 1), 0)
    mask_e = jnp.where(row_e < (P0 - 1) * B_ENC, 1.0, 0.0)               # zero_padding
    xz = xp_ref[...] * mask_e
    h = _paiconv(xz, genc_ref[...], wce_ref[...], bce_ref[...],
                 wme_ref[...], bme_ref[...], mask_e, F_PAD, True)        # (48, 8)

    # ----- latent: z0 = fc_enc(D @ (h3 + h2 - h1)) + b  (combine folded into Dcomb) ---
    pooled = jnp.dot(dcomb_ref[...], h, preferred_element_type=f32)      # (8, 8)
    wfe = wfe_ref[...]
    z0 = bfe_ref[...]                                                    # (1, 16)
    for p1 in range(P1):
        z0 = z0 + jnp.dot(pooled[p1:p1 + 1, :],
                          wfe[p1 * F_ENC:(p1 + 1) * F_ENC, :],
                          preferred_element_type=f32)

    # ----- fc_latent_dec (one matmul) fused with poolwT(U) -----------------------------
    xd_all = jnp.dot(z0, wfd_ref[...], preferred_element_type=f32) + bfd_ref[...]  # (1,64)
    u0 = u0_ref[...]
    xu = jnp.zeros((P0, F_DEC), f32)
    for p1 in range(P1):
        xu = xu + u0[:, p1:p1 + 1] * xd_all[:, p1 * F_DEC:(p1 + 1) * F_DEC]

    # ----- decoder PaiConv(8->8, elu) then PaiConv(8->6, identity) ---------------------
    row_d = lax.broadcasted_iota(jnp.int32, (P0, 1), 0)
    mask_d = jnp.where(row_d < P0 - 1, 1.0, 0.0)
    h0 = _paiconv(xu * mask_d, gd0_ref[...], wcd0_ref[...], bcd0_ref[...],
                  wmd0_ref[...], bmd0_ref[...], mask_d, F_DEC, True)     # (16, 8)
    out = _paiconv(h0 * mask_d, gd1_ref[...], wcd1_ref[...], bcd1_ref[...],
                   wmd1_ref[...], bmd1_ref[...], mask_d, F_DEC, False)   # (16, 6)
    o_ref[...] = out


# ---------------------------------------------------------------------------
# Parameter preparation (plain JAX, runs once): fold gather indices, per-point
# adjweights, latent-combine and pooling into dense matmul operands.
# ---------------------------------------------------------------------------
def prepare_params(p):
    def gather_mats(adjw, nbr, batch):
        onehot = jax.nn.one_hot(nbr, P0, dtype=jnp.float32)              # (P0, K, P0)
        a = jnp.einsum('pkt,pkm->tpm', adjw, onehot)                     # (K, P0, P0)
        if batch > 1:                                                    # block-diag over batch
            a = jnp.einsum('tpm,bc->tpbmc', a, jnp.eye(batch, dtype=jnp.float32))
        return a.reshape(KNBR * P0 * batch, P0 * batch)                  # (K*R, R)

    def pad_conv_rows(w, fin):
        # (K*fin, out) -> (K*F_PAD, out): zero rows so every tap slice is 8-aligned.
        out_c = w.shape[1]
        wr = w.reshape(KNBR, fin, out_c)
        return (jnp.zeros((KNBR, F_PAD, out_c), jnp.float32)
                .at[:, :fin, :].set(wr).reshape(KNBR * F_PAD, out_c))

    def pad_mlp_rows(w, fin):
        out_c = w.shape[1]
        return jnp.zeros((F_PAD, out_c), jnp.float32).at[:fin, :].set(w)

    prep = dict(p)
    prep["Genc"] = gather_mats(p["enc_adjw"], p["S0"], B_ENC)            # (192, 48)
    prep["Gdec0"] = gather_mats(p["dec0_adjw"], p["S0"], 1)              # (64, 16)
    prep["Gdec1"] = gather_mats(p["dec1_adjw"], p["S0"], 1)              # (64, 16)
    prep["enc_conv_w"] = pad_conv_rows(p["enc_conv_w"], F_IN)            # (32, 8)
    prep["enc_mlp_w"] = pad_mlp_rows(p["enc_mlp_w"], F_IN)               # (8, 8)
    # z0 = z3 + z2 - z1 is linear in h -> fold the sign-combine into the D pooling.
    sgn = jnp.array([-1.0, 1.0, 1.0], jnp.float32)                       # (x1, x2, x3)
    prep["Dcomb"] = jnp.einsum('pm,b->pmb', p["D0"], sgn).reshape(P1, P0 * B_ENC)
    return prep


# ---------------------------------------------------------------------------
# Forward: one pallas_call for the whole network
# ---------------------------------------------------------------------------
def pai_autoencoder_forward(prep, ratio, x1, x2, x3):
    """Mirrors PaiAutoencoder.forward (ratio is unused by the reference module)."""
    del ratio
    N, D = x1.shape
    assert N + 1 == P0 and D == F_IN
    xs = jnp.stack([x1, x2, x3], axis=0).astype(jnp.float32)             # (3, N, 6)
    xs = jnp.pad(xs, ((0, 0), (0, 1), (0, F_PAD - F_IN)))                # (3, 16, 8)
    xp = jnp.transpose(xs, (1, 0, 2)).reshape(P0 * B_ENC, F_PAD)         # point-major rows

    out = pl.pallas_call(
        _fused_forward_kernel,
        out_shape=jax.ShapeDtypeStruct((P0, F_IN), jnp.float32),
    )(
        xp, prep["Genc"],
        prep["enc_conv_w"], prep["enc_conv_b"], prep["enc_mlp_w"], prep["enc_mlp_b"],
        prep["Dcomb"], prep["fc_enc_w"], prep["fc_enc_b"],
        prep["fc_dec_w"], prep["fc_dec_b"], prep["U0"],
        prep["Gdec0"], prep["dec0_conv_w"], prep["dec0_conv_b"],
        prep["dec0_mlp_w"], prep["dec0_mlp_b"],
        prep["Gdec1"], prep["dec1_conv_w"], prep["dec1_conv_b"],
        prep["dec1_mlp_w"], prep["dec1_mlp_b"],
    )
    return out                                                           # (N+1, D)


# ---------------------------------------------------------------------------
# Parameter init (matches the PyTorch module's shapes / eye adjweight init)
# ---------------------------------------------------------------------------
def init_params(key):
    keys = jax.random.split(key, 12)

    def linear(k, fan_in, fan_out):
        k1, k2 = jax.random.split(k)
        bound = 1.0 / np.sqrt(fan_in)
        w = jax.random.uniform(k1, (fan_in, fan_out), jnp.float32, -bound, bound)
        b = jax.random.uniform(k2, (1, fan_out), jnp.float32, -bound, bound)
        return w, b

    eye = jnp.broadcast_to(jnp.eye(KNBR, dtype=jnp.float32)[None], (P0, KNBR, KNBR))
    p = {}
    # encoder PaiConv (6 -> 8, elu)
    p["enc_conv_w"], p["enc_conv_b"] = linear(keys[0], KNBR * F_IN, F_ENC)
    p["enc_mlp_w"], p["enc_mlp_b"] = linear(keys[1], F_IN, F_ENC)
    p["enc_adjw"] = eye
    # latent FCs
    p["fc_enc_w"], p["fc_enc_b"] = linear(keys[2], P1 * F_ENC, LATENT)
    p["fc_dec_w"], p["fc_dec_b"] = linear(keys[3], LATENT, P1 * F_DEC)
    # decoder PaiConv 0 (8 -> 8, elu)
    p["dec0_conv_w"], p["dec0_conv_b"] = linear(keys[4], KNBR * F_DEC, F_DEC)
    p["dec0_mlp_w"], p["dec0_mlp_b"] = linear(keys[5], F_DEC, F_DEC)
    p["dec0_adjw"] = eye
    # decoder PaiConv 1 (8 -> 6, identity)
    p["dec1_conv_w"], p["dec1_conv_b"] = linear(keys[6], KNBR * F_DEC, F_IN)
    p["dec1_mlp_w"], p["dec1_mlp_b"] = linear(keys[7], F_DEC, F_IN)
    p["dec1_adjw"] = eye
    # dense stand-ins for sparse D / U pooling matrices
    d = jax.random.uniform(keys[8], (P1, P0), jnp.float32, 0.0, 1.0)
    p["D0"] = d / jnp.sum(d, axis=1, keepdims=True)
    u = jax.random.uniform(keys[9], (P0, P1), jnp.float32, 0.0, 1.0)
    p["U0"] = u / jnp.sum(u, axis=1, keepdims=True)
    # neighbor indices: self column [0..P0-2, -1] (wrapped -1 -> P0-1) + random neighbors
    raw = jax.random.randint(keys[10], (P0, KNBR - 1), 0, P0, dtype=jnp.int32)
    self_col = jnp.concatenate([jnp.arange(P0 - 1, dtype=jnp.int32),
                                jnp.array([P0 - 1], dtype=jnp.int32)])[:, None]
    p["S0"] = jnp.concatenate([self_col, raw], axis=1)                   # (P0, KNBR)
    return p


# ---------------------------------------------------------------------------
# Pure-JAX reference (for correctness check)
# ---------------------------------------------------------------------------
def _ref_elu(v):
    return jnp.where(v > 0.0, v, jnp.exp(v) - 1.0)


def _ref_paiconv(x, idx, adjw, wc, bc, wm, bm, use_elu):
    B, P, F = x.shape
    K = idx.shape[-1]
    mask = jnp.ones((1, P, 1), jnp.float32).at[0, -1, 0].set(0.0)
    x = x * mask
    xn = jax.vmap(lambda xb, ib: xb[ib])(x, idx)
    xn = jnp.einsum('bnkf,nkt->bntf', xn, adjw)
    act = _ref_elu if use_elu else (lambda v: v)
    xn = act(xn).reshape(B * P, K * F)
    out = act(xn @ wc + bc).reshape(B, P, -1) * mask
    res = (x.reshape(B * P, F) @ wm + bm).reshape(B, P, -1)
    return out + res


def _ref_forward(p, x1, x2, x3):
    with jax.default_matmul_precision("highest"):
        def ref_pool(x, L):
            return jnp.einsum('pm,bmf->bpf', L, x)

        def ref_encode(x):
            B = x.shape[0]
            idx = jnp.broadcast_to(p["S0"][None], (B,) + p["S0"].shape)
            x = _ref_paiconv(x, idx, p["enc_adjw"], p["enc_conv_w"], p["enc_conv_b"],
                             p["enc_mlp_w"], p["enc_mlp_b"], True)
            x = ref_pool(x, p["D0"])
            return x.reshape(B, -1) @ p["fc_enc_w"] + p["fc_enc_b"]

        def ref_decode(z):
            B = z.shape[0]
            idx = jnp.broadcast_to(p["S0"][None], (B,) + p["S0"].shape)
            x = (z @ p["fc_dec_w"] + p["fc_dec_b"]).reshape(B, P1, -1)
            x = ref_pool(x, p["U0"])
            x = _ref_paiconv(x, idx, p["dec0_adjw"], p["dec0_conv_w"], p["dec0_conv_b"],
                             p["dec0_mlp_w"], p["dec0_mlp_b"], True)
            x = _ref_paiconv(x, idx, p["dec1_adjw"], p["dec1_conv_w"], p["dec1_conv_b"],
                             p["dec1_mlp_w"], p["dec1_mlp_b"], False)
            return x

        N, D = x1.shape

        def pad(v):
            return jnp.zeros((1, N + 1, D), jnp.float32).at[:, :N, :].set(v[None])

        z1, z2, z3 = ref_encode(pad(x1)), ref_encode(pad(x2)), ref_encode(pad(x3))
        return ref_decode(z3 + (z2 - z1)).reshape(-1, D)


# ---------------------------------------------------------------------------
if __name__ == "__main__":
    key = jax.random.PRNGKey(0)
    pkey, k1, k2, k3 = jax.random.split(key, 4)
    params = init_params(pkey)
    prep = prepare_params(params)          # fold gather/adjweight/combine/pooling once

    N, D = P0 - 1, F_IN                    # 15 points, 6 features
    x1 = jax.random.normal(k1, (N, D), jnp.float32)
    x2 = jax.random.normal(k2, (N, D), jnp.float32)
    x3 = jax.random.normal(k3, (N, D), jnp.float32)
    ratio = 0.5

    fwd = jax.jit(functools.partial(pai_autoencoder_forward, prep, ratio))
    out = jax.block_until_ready(fwd(x1, x2, x3))

    ref = _ref_forward(params, x1, x2, x3)
    assert out.shape == (N + 1, D), out.shape
    np.testing.assert_allclose(np.asarray(out), np.asarray(ref), rtol=2e-2, atol=2e-2)
    print("KERNEL_OK")
</pallas_src>

<mosaic_0001>
module attributes {stable_mosaic.version = 11 : i64} {
  func.func @_fused_forward_kernel(%arg0: memref<48x8xf32, #tpu.memory_space<vmem>>, %arg1: memref<192x48xf32, #tpu.memory_space<vmem>>, %arg2: memref<32x8xf32, #tpu.memory_space<vmem>>, %arg3: memref<1x8xf32, #tpu.memory_space<vmem>>, %arg4: memref<8x8xf32, #tpu.memory_space<vmem>>, %arg5: memref<1x8xf32, #tpu.memory_space<vmem>>, %arg6: memref<8x48xf32, #tpu.memory_space<vmem>>, %arg7: memref<64x16xf32, #tpu.memory_space<vmem>>, %arg8: memref<1x16xf32, #tpu.memory_space<vmem>>, %arg9: memref<16x64xf32, #tpu.memory_space<vmem>>, %arg10: memref<1x64xf32, #tpu.memory_space<vmem>>, %arg11: memref<16x8xf32, #tpu.memory_space<vmem>>, %arg12: memref<64x16xf32, #tpu.memory_space<vmem>>, %arg13: memref<32x8xf32, #tpu.memory_space<vmem>>, %arg14: memref<1x8xf32, #tpu.memory_space<vmem>>, %arg15: memref<8x8xf32, #tpu.memory_space<vmem>>, %arg16: memref<1x8xf32, #tpu.memory_space<vmem>>, %arg17: memref<64x16xf32, #tpu.memory_space<vmem>>, %arg18: memref<32x6xf32, #tpu.memory_space<vmem>>, %arg19: memref<1x6xf32, #tpu.memory_space<vmem>>, %arg20: memref<8x6xf32, #tpu.memory_space<vmem>>, %arg21: memref<1x6xf32, #tpu.memory_space<vmem>>, %arg22: memref<16x6xf32, #tpu.memory_space<vmem>>) attributes {dimension_semantics = [], scalar_prefetch = 0 : i64, scratch_operands = 0 : i64, tpu.core_type = #tpu.core_type<tc>} {
    %0 = tpu.iota {dimensions = array<i32: 0>} : vector<48x1xi32>
    %c45_i32 = arith.constant 45 : i32
    %1 = vector.broadcast %c45_i32 : i32 to vector<48x1xi32>
    %2 = arith.cmpi slt, %0, %1 : vector<48x1xi32>
    %cst = arith.constant 1.000000e+00 : f32
    %cst_0 = arith.constant 0.000000e+00 : f32
    %3 = vector.broadcast %cst : f32 to vector<48x1xf32>
    %4 = vector.broadcast %cst_0 : f32 to vector<48x1xf32>
    %5 = arith.select %2, %3, %4 : vector<48x1xi1>, vector<48x1xf32>
    %c0 = arith.constant 0 : index
    %c0_1 = arith.constant 0 : index
    %6 = vector.load %arg0[%c0, %c0_1] : memref<48x8xf32, #tpu.memory_space<vmem>>, vector<48x8xf32>
    %7 = vector.broadcast %5 : vector<48x1xf32> to vector<48x8xf32>
    %8 = arith.mulf %6, %7 : vector<48x8xf32>
    %c0_2 = arith.constant 0 : index
    %c0_3 = arith.constant 0 : index
    %9 = vector.load %arg1[%c0_2, %c0_3] : memref<192x48xf32, #tpu.memory_space<vmem>>, vector<192x48xf32>
    %c0_4 = arith.constant 0 : index
    %c0_5 = arith.constant 0 : index
    %10 = vector.load %arg2[%c0_4, %c0_5] : memref<32x8xf32, #tpu.memory_space<vmem>>, vector<32x8xf32>
    %c0_6 = arith.constant 0 : index
    %c0_7 = arith.constant 0 : index
    %11 = vector.load %arg3[%c0_6, %c0_7] : memref<1x8xf32, #tpu.memory_space<vmem>>, vector<1x8xf32>
    %c0_8 = arith.constant 0 : index
    %c0_9 = arith.constant 0 : index
    %12 = vector.load %arg4[%c0_8, %c0_9] : memref<8x8xf32, #tpu.memory_space<vmem>>, vector<8x8xf32>
    %c0_10 = arith.constant 0 : index
    %c0_11 = arith.constant 0 : index
    %13 = vector.load %arg5[%c0_10, %c0_11] : memref<1x8xf32, #tpu.memory_space<vmem>>, vector<1x8xf32>
    %cst_12 = arith.constant dense<0.000000e+00> : vector<192x8xf32>
    %14 = tpu.matmul %9, %8, %cst_12 {dimension_numbers = #tpu.dot_dimension_numbers<[1], [0], [0], [1], [0, 0, 1, 1], [], []>} : vector<192x48xf32>, vector<48x8xf32>, vector<192x8xf32> -> vector<192x8xf32>
    %cst_13 = arith.constant 0.000000e+00 : f32
    %15 = vector.broadcast %cst_13 : f32 to vector<192x8xf32>
    %16 = arith.cmpf ogt, %14, %15 : vector<192x8xf32>
    %cst_14 = arith.constant 0.000000e+00 : f32
    %17 = vector.broadcast %cst_14 : f32 to vector<192x8xf32>
    %18 = arith.minimumf %14, %17 : vector<192x8xf32>
    %19 = math.exp %18 : vector<192x8xf32>
    %cst_15 = arith.constant 1.000000e+00 : f32
    %20 = vector.broadcast %cst_15 : f32 to vector<192x8xf32>
    %21 = arith.subf %19, %20 : vector<192x8xf32>
    %22 = arith.select %16, %14, %21 : vector<192x8xi1>, vector<192x8xf32>
    %cst_16 = arith.constant 0.000000e+00 : f32
    %23 = vector.broadcast %cst_16 : f32 to vector<48x8xf32>
    %24 = vector.extract_strided_slice %22 {offsets = [0, 0], sizes = [48, 8], strides = [1, 1]} : vector<192x8xf32> to vector<48x8xf32>
    %25 = vector.extract_strided_slice %10 {offsets = [0, 0], sizes = [8, 8], strides = [1, 1]} : vector<32x8xf32> to vector<8x8xf32>
    %cst_17 = arith.constant dense<0.000000e+00> : vector<48x8xf32>
    %26 = tpu.matmul %24, %25, %cst_17 {dimension_numbers = #tpu.dot_dimension_numbers<[1], [0], [0], [1], [0, 0, 1, 1], [], []>} : vector<48x8xf32>, vector<8x8xf32>, vector<48x8xf32> -> vector<48x8xf32>
    %27 = arith.addf %23, %26 : vector<48x8xf32>
    %28 = vector.extract_strided_slice %22 {offsets = [48, 0], sizes = [48, 8], strides = [1, 1]} : vector<192x8xf32> to vector<48x8xf32>
    %29 = vector.extract_strided_slice %10 {offsets = [8, 0], sizes = [8, 8], strides = [1, 1]} : vector<32x8xf32> to vector<8x8xf32>
    %cst_18 = arith.constant dense<0.000000e+00> : vector<48x8xf32>
    %30 = tpu.matmul %28, %29, %cst_18 {dimension_numbers = #tpu.dot_dimension_numbers<[1], [0], [0], [1], [0, 0, 1, 1], [], []>} : vector<48x8xf32>, vector<8x8xf32>, vector<48x8xf32> -> vector<48x8xf32>
    %31 = arith.addf %27, %30 : vector<48x8xf32>
    %32 = vector.extract_strided_slice %22 {offsets = [96, 0], sizes = [48, 8], strides = [1, 1]} : vector<192x8xf32> to vector<48x8xf32>
    %33 = vector.extract_strided_slice %10 {offsets = [16, 0], sizes = [8, 8], strides = [1, 1]} : vector<32x8xf32> to vector<8x8xf32>
    %cst_19 = arith.constant dense<0.000000e+00> : vector<48x8xf32>
    %34 = tpu.matmul %32, %33, %cst_19 {dimension_numbers = #tpu.dot_dimension_numbers<[1], [0], [0], [1], [0, 0, 1, 1], [], []>} : vector<48x8xf32>, vector<8x8xf32>, vector<48x8xf32> -> vector<48x8xf32>
    %35 = arith.addf %31, %34 : vector<48x8xf32>
    %36 = vector.extract_strided_slice %22 {offsets = [144, 0], sizes = [48, 8], strides = [1, 1]} : vector<192x8xf32> to vector<48x8xf32>
    %37 = vector.extract_strided_slice %10 {offsets = [24, 0], sizes = [8, 8], strides = [1, 1]} : vector<32x8xf32> to vector<8x8xf32>
    %cst_20 = arith.constant dense<0.000000e+00> : vector<48x8xf32>
    %38 = tpu.matmul %36, %37, %cst_20 {dimension_numbers = #tpu.dot_dimension_numbers<[1], [0], [0], [1], [0, 0, 1, 1], [], []>} : vector<48x8xf32>, vector<8x8xf32>, vector<48x8xf32> -> vector<48x8xf32>
    %39 = arith.addf %35, %38 : vector<48x8xf32>
    %40 = vector.broadcast %11 : vector<1x8xf32> to vector<48x8xf32>
    %41 = arith.addf %39, %40 : vector<48x8xf32>
    %cst_21 = arith.constant 0.000000e+00 : f32
    %42 = vector.broadcast %cst_21 : f32 to vector<48x8xf32>
    %43 = arith.cmpf ogt, %41, %42 : vector<48x8xf32>
    %cst_22 = arith.constant 0.000000e+00 : f32
    %44 = vector.broadcast %cst_22 : f32 to vector<48x8xf32>
    %45 = arith.minimumf %41, %44 : vector<48x8xf32>
    %46 = math.exp %45 : vector<48x8xf32>
    %cst_23 = arith.constant 1.000000e+00 : f32
    %47 = vector.broadcast %cst_23 : f32 to vector<48x8xf32>
    %48 = arith.subf %46, %47 : vector<48x8xf32>
    %49 = arith.select %43, %41, %48 : vector<48x8xi1>, vector<48x8xf32>
    %50 = vector.broadcast %5 : vector<48x1xf32> to vector<48x8xf32>
    %51 = arith.mulf %49, %50 : vector<48x8xf32>
    %cst_24 = arith.constant dense<0.000000e+00> : vector<48x8xf32>
    %52 = tpu.matmul %8, %12, %cst_24 {dimension_numbers = #tpu.dot_dimension_numbers<[1], [0], [0], [1], [0, 0, 1, 1], [], []>} : vector<48x8xf32>, vector<8x8xf32>, vector<48x8xf32> -> vector<48x8xf32>
    %53 = vector.broadcast %13 : vector<1x8xf32> to vector<48x8xf32>
    %54 = arith.addf %52, %53 : vector<48x8xf32>
    %55 = arith.addf %51, %54 : vector<48x8xf32>
    %c0_25 = arith.constant 0 : index
    %c0_26 = arith.constant 0 : index
    %56 = vector.load %arg6[%c0_25, %c0_26] : memref<8x48xf32, #tpu.memory_space<vmem>>, vector<8x48xf32>
    %cst_27 = arith.constant dense<0.000000e+00> : vector<8x8xf32>
    %57 = tpu.matmul %56, %55, %cst_27 {dimension_numbers = #tpu.dot_dimension_numbers<[1], [0], [0], [1], [0, 0, 1, 1], [], []>} : vector<8x48xf32>, vector<48x8xf32>, vector<8x8xf32> -> vector<8x8xf32>
    %c0_28 = arith.constant 0 : index
    %c0_29 = arith.constant 0 : index
    %58 = vector.load %arg7[%c0_28, %c0_29] : memref<64x16xf32, #tpu.memory_space<vmem>>, vector<64x16xf32>
    %c0_30 = arith.constant 0 : index
    %c0_31 = arith.constant 0 : index
    %59 = vector.load %arg8[%c0_30, %c0_31] : memref<1x16xf32, #tpu.memory_space<vmem>>, vector<1x16xf32>
    %60 = vector.extract_strided_slice %57 {offsets = [0, 0], sizes = [1, 8], strides = [1, 1]} : vector<8x8xf32> to vector<1x8xf32>
    %61 = vector.extract_strided_slice %58 {offsets = [0, 0], sizes = [8, 16], strides = [1, 1]} : vector<64x16xf32> to vector<8x16xf32>
    %cst_32 = arith.constant dense<0.000000e+00> : vector<1x16xf32>
    %62 = tpu.matmul %60, %61, %cst_32 {dimension_numbers = #tpu.dot_dimension_numbers<[1], [0], [0], [1], [0, 0, 1, 1], [], []>} : vector<1x8xf32>, vector<8x16xf32>, vector<1x16xf32> -> vector<1x16xf32>
    %63 = arith.addf %59, %62 : vector<1x16xf32>
    %64 = vector.extract_strided_slice %57 {offsets = [1, 0], sizes = [1, 8], strides = [1, 1]} : vector<8x8xf32> to vector<1x8xf32>
    %65 = vector.extract_strided_slice %58 {offsets = [8, 0], sizes = [8, 16], strides = [1, 1]} : vector<64x16xf32> to vector<8x16xf32>
    %cst_33 = arith.constant dense<0.000000e+00> : vector<1x16xf32>
    %66 = tpu.matmul %64, %65, %cst_33 {dimension_numbers = #tpu.dot_dimension_numbers<[1], [0], [0], [1], [0, 0, 1, 1], [], []>} : vector<1x8xf32>, vector<8x16xf32>, vector<1x16xf32> -> vector<1x16xf32>
    %67 = arith.addf %63, %66 : vector<1x16xf32>
    %68 = vector.extract_strided_slice %57 {offsets = [2, 0], sizes = [1, 8], strides = [1, 1]} : vector<8x8xf32> to vector<1x8xf32>
    %69 = vector.extract_strided_slice %58 {offsets = [16, 0], sizes = [8, 16], strides = [1, 1]} : vector<64x16xf32> to vector<8x16xf32>
    %cst_34 = arith.constant dense<0.000000e+00> : vector<1x16xf32>
    %70 = tpu.matmul %68, %69, %cst_34 {dimension_numbers = #tpu.dot_dimension_numbers<[1], [0], [0], [1], [0, 0, 1, 1], [], []>} : vector<1x8xf32>, vector<8x16xf32>, vector<1x16xf32> -> vector<1x16xf32>
    %71 = arith.addf %67, %70 : vector<1x16xf32>
    %72 = vector.extract_strided_slice %57 {offsets = [3, 0], sizes = [1, 8], strides = [1, 1]} : vector<8x8xf32> to vector<1x8xf32>
    %73 = vector.extract_strided_slice %58 {offsets = [24, 0], sizes = [8, 16], strides = [1, 1]} : vector<64x16xf32> to vector<8x16xf32>
    %cst_35 = arith.constant dense<0.000000e+00> : vector<1x16xf32>
    %74 = tpu.matmul %72, %73, %cst_35 {dimension_numbers = #tpu.dot_dimension_numbers<[1], [0], [0], [1], [0, 0, 1, 1], [], []>} : vector<1x8xf32>, vector<8x16xf32>, vector<1x16xf32> -> vector<1x16xf32>
    %75 = arith.addf %71, %74 : vector<1x16xf32>
    %76 = vector.extract_strided_slice %57 {offsets = [4, 0], sizes = [1, 8], strides = [1, 1]} : vector<8x8xf32> to vector<1x8xf32>
    %77 = vector.extract_strided_slice %58 {offsets = [32, 0], sizes = [8, 16], strides = [1, 1]} : vector<64x16xf32> to vector<8x16xf32>
    %cst_36 = arith.constant dense<0.000000e+00> : vector<1x16xf32>
    %78 = tpu.matmul %76, %77, %cst_36 {dimension_numbers = #tpu.dot_dimension_numbers<[1], [0], [0], [1], [0, 0, 1, 1], [], []>} : vector<1x8xf32>, vector<8x16xf32>, vector<1x16xf32> -> vector<1x16xf32>
    %79 = arith.addf %75, %78 : vector<1x16xf32>
    %80 = vector.extract_strided_slice %57 {offsets = [5, 0], sizes = [1, 8], strides = [1, 1]} : vector<8x8xf32> to vector<1x8xf32>
    %81 = vector.extract_strided_slice %58 {offsets = [40, 0], sizes = [8, 16], strides = [1, 1]} : vector<64x16xf32> to vector<8x16xf32>
    %cst_37 = arith.constant dense<0.000000e+00> : vector<1x16xf32>
    %82 = tpu.matmul %80, %81, %cst_37 {dimension_numbers = #tpu.dot_dimension_numbers<[1], [0], [0], [1], [0, 0, 1, 1], [], []>} : vector<1x8xf32>, vector<8x16xf32>, vector<1x16xf32> -> vector<1x16xf32>
    %83 = arith.addf %79, %82 : vector<1x16xf32>
    %84 = vector.extract_strided_slice %57 {offsets = [6, 0], sizes = [1, 8], strides = [1, 1]} : vector<8x8xf32> to vector<1x8xf32>
    %85 = vector.extract_strided_slice %58 {offsets = [48, 0], sizes = [8, 16], strides = [1, 1]} : vector<64x16xf32> to vector<8x16xf32>
    %cst_38 = arith.constant dense<0.000000e+00> : vector<1x16xf32>
    %86 = tpu.matmul %84, %85, %cst_38 {dimension_numbers = #tpu.dot_dimension_numbers<[1], [0], [0], [1], [0, 0, 1, 1], [], []>} : vector<1x8xf32>, vector<8x16xf32>, vector<1x16xf32> -> vector<1x16xf32>
    %87 = arith.addf %83, %86 : vector<1x16xf32>
    %88 = vector.extract_strided_slice %57 {offsets = [7, 0], sizes = [1, 8], strides = [1, 1]} : vector<8x8xf32> to vector<1x8xf32>
    %89 = vector.extract_strided_slice %58 {offsets = [56, 0], sizes = [8, 16], strides = [1, 1]} : vector<64x16xf32> to vector<8x16xf32>
    %cst_39 = arith.constant dense<0.000000e+00> : vector<1x16xf32>
    %90 = tpu.matmul %88, %89, %cst_39 {dimension_numbers = #tpu.dot_dimension_numbers<[1], [0], [0], [1], [0, 0, 1, 1], [], []>} : vector<1x8xf32>, vector<8x16xf32>, vector<1x16xf32> -> vector<1x16xf32>
    %91 = arith.addf %87, %90 : vector<1x16xf32>
    %c0_40 = arith.constant 0 : index
    %c0_41 = arith.constant 0 : index
    %92 = vector.load %arg9[%c0_40, %c0_41] : memref<16x64xf32, #tpu.memory_space<vmem>>, vector<16x64xf32>
    %cst_42 = arith.constant dense<0.000000e+00> : vector<1x64xf32>
    %93 = tpu.matmul %91, %92, %cst_42 {dimension_numbers = #tpu.dot_dimension_numbers<[1], [0], [0], [1], [0, 0, 1, 1], [], []>} : vector<1x16xf32>, vector<16x64xf32>, vector<1x64xf32> -> vector<1x64xf32>
    %c0_43 = arith.constant 0 : index
    %c0_44 = arith.constant 0 : index
    %94 = vector.load %arg10[%c0_43, %c0_44] : memref<1x64xf32, #tpu.memory_space<vmem>>, vector<1x64xf32>
    %95 = arith.addf %93, %94 : vector<1x64xf32>
    %c0_45 = arith.constant 0 : index
    %c0_46 = arith.constant 0 : index
    %96 = vector.load %arg11[%c0_45, %c0_46] : memref<16x8xf32, #tpu.memory_space<vmem>>, vector<16x8xf32>
    %cst_47 = arith.constant 0.000000e+00 : f32
    %97 = vector.broadcast %cst_47 : f32 to vector<16x8xf32>
    %98 = vector.extract_strided_slice %96 {offsets = [0, 0], sizes = [16, 1], strides = [1, 1]} : vector<16x8xf32> to vector<16x1xf32>
    %99 = vector.extract_strided_slice %95 {offsets = [0, 0], sizes = [1, 8], strides = [1, 1]} : vector<1x64xf32> to vector<1x8xf32>
    %100 = vector.broadcast %98 : vector<16x1xf32> to vector<16x8xf32>
    %101 = vector.broadcast %99 : vector<1x8xf32> to vector<16x8xf32>
    %102 = arith.mulf %100, %101 : vector<16x8xf32>
    %103 = arith.addf %97, %102 : vector<16x8xf32>
    %104 = vector.extract_strided_slice %96 {offsets = [0, 1], sizes = [16, 1], strides = [1, 1]} : vector<16x8xf32> to vector<16x1xf32>
    %105 = vector.extract_strided_slice %95 {offsets = [0, 8], sizes = [1, 8], strides = [1, 1]} : vector<1x64xf32> to vector<1x8xf32>
    %106 = vector.broadcast %104 : vector<16x1xf32> to vector<16x8xf32>
    %107 = vector.broadcast %105 : vector<1x8xf32> to vector<16x8xf32>
    %108 = arith.mulf %106, %107 : vector<16x8xf32>
    %109 = arith.addf %103, %108 : vector<16x8xf32>
    %110 = vector.extract_strided_slice %96 {offsets = [0, 2], sizes = [16, 1], strides = [1, 1]} : vector<16x8xf32> to vector<16x1xf32>
    %111 = vector.extract_strided_slice %95 {offsets = [0, 16], sizes = [1, 8], strides = [1, 1]} : vector<1x64xf32> to vector<1x8xf32>
    %112 = vector.broadcast %110 : vector<16x1xf32> to vector<16x8xf32>
    %113 = vector.broadcast %111 : vector<1x8xf32> to vector<16x8xf32>
    %114 = arith.mulf %112, %113 : vector<16x8xf32>
    %115 = arith.addf %109, %114 : vector<16x8xf32>
    %116 = vector.extract_strided_slice %96 {offsets = [0, 3], sizes = [16, 1], strides = [1, 1]} : vector<16x8xf32> to vector<16x1xf32>
    %117 = vector.extract_strided_slice %95 {offsets = [0, 24], sizes = [1, 8], strides = [1, 1]} : vector<1x64xf32> to vector<1x8xf32>
    %118 = vector.broadcast %116 : vector<16x1xf32> to vector<16x8xf32>
    %119 = vector.broadcast %117 : vector<1x8xf32> to vector<16x8xf32>
    %120 = arith.mulf %118, %119 : vector<16x8xf32>
    %121 = arith.addf %115, %120 : vector<16x8xf32>
    %122 = vector.extract_strided_slice %96 {offsets = [0, 4], sizes = [16, 1], strides = [1, 1]} : vector<16x8xf32> to vector<16x1xf32>
    %123 = vector.extract_strided_slice %95 {offsets = [0, 32], sizes = [1, 8], strides = [1, 1]} : vector<1x64xf32> to vector<1x8xf32>
    %124 = vector.broadcast %122 : vector<16x1xf32> to vector<16x8xf32>
    %125 = vector.broadcast %123 : vector<1x8xf32> to vector<16x8xf32>
    %126 = arith.mulf %124, %125 : vector<16x8xf32>
    %127 = arith.addf %121, %126 : vector<16x8xf32>
    %128 = vector.extract_strided_slice %96 {offsets = [0, 5], sizes = [16, 1], strides = [1, 1]} : vector<16x8xf32> to vector<16x1xf32>
    %129 = vector.extract_strided_slice %95 {offsets = [0, 40], sizes = [1, 8], strides = [1, 1]} : vector<1x64xf32> to vector<1x8xf32>
    %130 = vector.broadcast %128 : vector<16x1xf32> to vector<16x8xf32>
    %131 = vector.broadcast %129 : vector<1x8xf32> to vector<16x8xf32>
    %132 = arith.mulf %130, %131 : vector<16x8xf32>
    %133 = arith.addf %127, %132 : vector<16x8xf32>
    %134 = vector.extract_strided_slice %96 {offsets = [0, 6], sizes = [16, 1], strides = [1, 1]} : vector<16x8xf32> to vector<16x1xf32>
    %135 = vector.extract_strided_slice %95 {offsets = [0, 48], sizes = [1, 8], strides = [1, 1]} : vector<1x64xf32> to vector<1x8xf32>
    %136 = vector.broadcast %134 : vector<16x1xf32> to vector<16x8xf32>
    %137 = vector.broadcast %135 : vector<1x8xf32> to vector<16x8xf32>
    %138 = arith.mulf %136, %137 : vector<16x8xf32>
    %139 = arith.addf %133, %138 : vector<16x8xf32>
    %140 = vector.extract_strided_slice %96 {offsets = [0, 7], sizes = [16, 1], strides = [1, 1]} : vector<16x8xf32> to vector<16x1xf32>
    %141 = vector.extract_strided_slice %95 {offsets = [0, 56], sizes = [1, 8], strides = [1, 1]} : vector<1x64xf32> to vector<1x8xf32>
    %142 = vector.broadcast %140 : vector<16x1xf32> to vector<16x8xf32>
    %143 = vector.broadcast %141 : vector<1x8xf32> to vector<16x8xf32>
    %144 = arith.mulf %142, %143 : vector<16x8xf32>
    %145 = arith.addf %139, %144 : vector<16x8xf32>
    %146 = tpu.iota {dimensions = array<i32: 0>} : vector<16x1xi32>
    %c15_i32 = arith.constant 15 : i32
    %147 = vector.broadcast %c15_i32 : i32 to vector<16x1xi32>
    %148 = arith.cmpi slt, %146, %147 : vector<16x1xi32>
    %cst_48 = arith.constant 1.000000e+00 : f32
    %cst_49 = arith.constant 0.000000e+00 : f32
    %149 = vector.broadcast %cst_48 : f32 to vector<16x1xf32>
    %150 = vector.broadcast %cst_49 : f32 to vector<16x1xf32>
    %151 = arith.select %148, %149, %150 : vector<16x1xi1>, vector<16x1xf32>
    %152 = vector.broadcast %151 : vector<16x1xf32> to vector<16x8xf32>
    %153 = arith.mulf %145, %152 : vector<16x8xf32>
    %c0_50 = arith.constant 0 : index
    %c0_51 = arith.constant 0 : index
    %154 = vector.load %arg12[%c0_50, %c0_51] : memref<64x16xf32, #tpu.memory_space<vmem>>, vector<64x16xf32>
    %c0_52 = arith.constant 0 : index
    %c0_53 = arith.constant 0 : index
    %155 = vector.load %arg13[%c0_52, %c0_53] : memref<32x8xf32, #tpu.memory_space<vmem>>, vector<32x8xf32>
    %c0_54 = arith.constant 0 : index
    %c0_55 = arith.constant 0 : index
    %156 = vector.load %arg14[%c0_54, %c0_55] : memref<1x8xf32, #tpu.memory_space<vmem>>, vector<1x8xf32>
    %c0_56 = arith.constant 0 : index
    %c0_57 = arith.constant 0 : index
    %157 = vector.load %arg15[%c0_56, %c0_57] : memref<8x8xf32, #tpu.memory_space<vmem>>, vector<8x8xf32>
    %c0_58 = arith.constant 0 : index
    %c0_59 = arith.constant 0 : index
    %158 = vector.load %arg16[%c0_58, %c0_59] : memref<1x8xf32, #tpu.memory_space<vmem>>, vector<1x8xf32>
    %cst_60 = arith.constant dense<0.000000e+00> : vector<64x8xf32>
    %159 = tpu.matmul %154, %153, %cst_60 {dimension_numbers = #tpu.dot_dimension_numbers<[1], [0], [0], [1], [0, 0, 1, 1], [], []>} : vector<64x16xf32>, vector<16x8xf32>, vector<64x8xf32> -> vector<64x8xf32>
    %cst_61 = arith.constant 0.000000e+00 : f32
    %160 = vector.broadcast %cst_61 : f32 to vector<64x8xf32>
    %161 = arith.cmpf ogt, %159, %160 : vector<64x8xf32>
    %cst_62 = arith.constant 0.000000e+00 : f32
    %162 = vector.broadcast %cst_62 : f32 to vector<64x8xf32>
    %163 = arith.minimumf %159, %162 : vector<64x8xf32>
    %164 = math.exp %163 : vector<64x8xf32>
    %cst_63 = arith.constant 1.000000e+00 : f32
    %165 = vector.broadcast %cst_63 : f32 to vector<64x8xf32>
    %166 = arith.subf %164, %165 : vector<64x8xf32>
    %167 = arith.select %161, %159, %166 : vector<64x8xi1>, vector<64x8xf32>
    %cst_64 = arith.constant 0.000000e+00 : f32
    %168 = vector.broadcast %cst_64 : f32 to vector<16x8xf32>
    %169 = vector.extract_strided_slice %167 {offsets = [0, 0], sizes = [16, 8], strides = [1, 1]} : vector<64x8xf32> to vector<16x8xf32>
    %170 = vector.extract_strided_slice %155 {offsets = [0, 0], sizes = [8, 8], strides = [1, 1]} : vector<32x8xf32> to vector<8x8xf32>
    %cst_65 = arith.constant dense<0.000000e+00> : vector<16x8xf32>
    %171 = tpu.matmul %169, %170, %cst_65 {dimension_numbers = #tpu.dot_dimension_numbers<[1], [0], [0], [1], [0, 0, 1, 1], [], []>} : vector<16x8xf32>, vector<8x8xf32>, vector<16x8xf32> -> vector<16x8xf32>
    %172 = arith.addf %168, %171 : vector<16x8xf32>
    %173 = vector.extract_strided_slice %167 {offsets = [16, 0], sizes = [16, 8], strides = [1, 1]} : vector<64x8xf32> to vector<16x8xf32>
    %174 = vector.extract_strided_slice %155 {offsets = [8, 0], sizes = [8, 8], strides = [1, 1]} : vector<32x8xf32> to vector<8x8xf32>
    %cst_66 = arith.constant dense<0.000000e+00> : vector<16x8xf32>
    %175 = tpu.matmul %173, %174, %cst_66 {dimension_numbers = #tpu.dot_dimension_numbers<[1], [0], [0], [1], [0, 0, 1, 1], [], []>} : vector<16x8xf32>, vector<8x8xf32>, vector<16x8xf32> -> vector<16x8xf32>
    %176 = arith.addf %172, %175 : vector<16x8xf32>
    %177 = vector.extract_strided_slice %167 {offsets = [32, 0], sizes = [16, 8], strides = [1, 1]} : vector<64x8xf32> to vector<16x8xf32>
    %178 = vector.extract_strided_slice %155 {offsets = [16, 0], sizes = [8, 8], strides = [1, 1]} : vector<32x8xf32> to vector<8x8xf32>
    %cst_67 = arith.constant dense<0.000000e+00> : vector<16x8xf32>
    %179 = tpu.matmul %177, %178, %cst_67 {dimension_numbers = #tpu.dot_dimension_numbers<[1], [0], [0], [1], [0, 0, 1, 1], [], []>} : vector<16x8xf32>, vector<8x8xf32>, vector<16x8xf32> -> vector<16x8xf32>
    %180 = arith.addf %176, %179 : vector<16x8xf32>
    %181 = vector.extract_strided_slice %167 {offsets = [48, 0], sizes = [16, 8], strides = [1, 1]} : vector<64x8xf32> to vector<16x8xf32>
    %182 = vector.extract_strided_slice %155 {offsets = [24, 0], sizes = [8, 8], strides = [1, 1]} : vector<32x8xf32> to vector<8x8xf32>
    %cst_68 = arith.constant dense<0.000000e+00> : vector<16x8xf32>
    %183 = tpu.matmul %181, %182, %cst_68 {dimension_numbers = #tpu.dot_dimension_numbers<[1], [0], [0], [1], [0, 0, 1, 1], [], []>} : vector<16x8xf32>, vector<8x8xf32>, vector<16x8xf32> -> vector<16x8xf32>
    %184 = arith.addf %180, %183 : vector<16x8xf32>
    %185 = vector.broadcast %156 : vector<1x8xf32> to vector<16x8xf32>
    %186 = arith.addf %184, %185 : vector<16x8xf32>
    %cst_69 = arith.constant 0.000000e+00 : f32
    %187 = vector.broadcast %cst_69 : f32 to vector<16x8xf32>
    %188 = arith.cmpf ogt, %186, %187 : vector<16x8xf32>
    %cst_70 = arith.constant 0.000000e+00 : f32
    %189 = vector.broadcast %cst_70 : f32 to vector<16x8xf32>
    %190 = arith.minimumf %186, %189 : vector<16x8xf32>
    %191 = math.exp %190 : vector<16x8xf32>
    %cst_71 = arith.constant 1.000000e+00 : f32
    %192 = vector.broadcast %cst_71 : f32 to vector<16x8xf32>
    %193 = arith.subf %191, %192 : vector<16x8xf32>
    %194 = arith.select %188, %186, %193 : vector<16x8xi1>, vector<16x8xf32>
    %195 = vector.broadcast %151 : vector<16x1xf32> to vector<16x8xf32>
    %196 = arith.mulf %194, %195 : vector<16x8xf32>
    %cst_72 = arith.constant dense<0.000000e+00> : vector<16x8xf32>
    %197 = tpu.matmul %153, %157, %cst_72 {dimension_numbers = #tpu.dot_dimension_numbers<[1], [0], [0], [1], [0, 0, 1, 1], [], []>} : vector<16x8xf32>, vector<8x8xf32>, vector<16x8xf32> -> vector<16x8xf32>
    %198 = vector.broadcast %158 : vector<1x8xf32> to vector<16x8xf32>
    %199 = arith.addf %197, %198 : vector<16x8xf32>
    %200 = arith.addf %196, %199 : vector<16x8xf32>
    %201 = vector.broadcast %151 : vector<16x1xf32> to vector<16x8xf32>
    %202 = arith.mulf %200, %201 : vector<16x8xf32>
    %c0_73 = arith.constant 0 : index
    %c0_74 = arith.constant 0 : index
    %203 = vector.load %arg17[%c0_73, %c0_74] : memref<64x16xf32, #tpu.memory_space<vmem>>, vector<64x16xf32>
    %c0_75 = arith.constant 0 : index
    %c0_76 = arith.constant 0 : index
    %204 = vector.load %arg18[%c0_75, %c0_76] : memref<32x6xf32, #tpu.memory_space<vmem>>, vector<32x6xf32>
    %c0_77 = arith.constant 0 : index
    %c0_78 = arith.constant 0 : index
    %205 = vector.load %arg19[%c0_77, %c0_78] : memref<1x6xf32, #tpu.memory_space<vmem>>, vector<1x6xf32>
    %c0_79 = arith.constant 0 : index
    %c0_80 = arith.constant 0 : index
    %206 = vector.load %arg20[%c0_79, %c0_80] : memref<8x6xf32, #tpu.memory_space<vmem>>, vector<8x6xf32>
    %c0_81 = arith.constant 0 : index
    %c0_82 = arith.constant 0 : index
    %207 = vector.load %arg21[%c0_81, %c0_82] : memref<1x6xf32, #tpu.memory_space<vmem>>, vector<1x6xf32>
    %cst_83 = arith.constant dense<0.000000e+00> : vector<64x8xf32>
    %208 = tpu.matmul %203, %202, %cst_83 {dimension_numbers = #tpu.dot_dimension_numbers<[1], [0], [0], [1], [0, 0, 1, 1], [], []>} : vector<64x16xf32>, vector<16x8xf32>, vector<64x8xf32> -> vector<64x8xf32>
    %cst_84 = arith.constant 0.000000e+00 : f32
    %209 = vector.broadcast %cst_84 : f32 to vector<16x6xf32>
    %210 = vector.extract_strided_slice %208 {offsets = [0, 0], sizes = [16, 8], strides = [1, 1]} : vector<64x8xf32> to vector<16x8xf32>
    %211 = vector.extract_strided_slice %204 {offsets = [0, 0], sizes = [8, 6], strides = [1, 1]} : vector<32x6xf32> to vector<8x6xf32>
    %cst_85 = arith.constant dense<0.000000e+00> : vector<16x6xf32>
    %212 = tpu.matmul %210, %211, %cst_85 {dimension_numbers = #tpu.dot_dimension_numbers<[1], [0], [0], [1], [0, 0, 1, 1], [], []>} : vector<16x8xf32>, vector<8x6xf32>, vector<16x6xf32> -> vector<16x6xf32>
    %213 = arith.addf %209, %212 : vector<16x6xf32>
    %214 = vector.extract_strided_slice %208 {offsets = [16, 0], sizes = [16, 8], strides = [1, 1]} : vector<64x8xf32> to vector<16x8xf32>
    %215 = vector.extract_strided_slice %204 {offsets = [8, 0], sizes = [8, 6], strides = [1, 1]} : vector<32x6xf32> to vector<8x6xf32>
    %cst_86 = arith.constant dense<0.000000e+00> : vector<16x6xf32>
    %216 = tpu.matmul %214, %215, %cst_86 {dimension_numbers = #tpu.dot_dimension_numbers<[1], [0], [0], [1], [0, 0, 1, 1], [], []>} : vector<16x8xf32>, vector<8x6xf32>, vector<16x6xf32> -> vector<16x6xf32>
    %217 = arith.addf %213, %216 : vector<16x6xf32>
    %218 = vector.extract_strided_slice %208 {offsets = [32, 0], sizes = [16, 8], strides = [1, 1]} : vector<64x8xf32> to vector<16x8xf32>
    %219 = vector.extract_strided_slice %204 {offsets = [16, 0], sizes = [8, 6], strides = [1, 1]} : vector<32x6xf32> to vector<8x6xf32>
    %cst_87 = arith.constant dense<0.000000e+00> : vector<16x6xf32>
    %220 = tpu.matmul %218, %219, %cst_87 {dimension_numbers = #tpu.dot_dimension_numbers<[1], [0], [0], [1], [0, 0, 1, 1], [], []>} : vector<16x8xf32>, vector<8x6xf32>, vector<16x6xf32> -> vector<16x6xf32>
    %221 = arith.addf %217, %220 : vector<16x6xf32>
    %222 = vector.extract_strided_slice %208 {offsets = [48, 0], sizes = [16, 8], strides = [1, 1]} : vector<64x8xf32> to vector<16x8xf32>
    %223 = vector.extract_strided_slice %204 {offsets = [24, 0], sizes = [8, 6], strides = [1, 1]} : vector<32x6xf32> to vector<8x6xf32>
    %cst_88 = arith.constant dense<0.000000e+00> : vector<16x6xf32>
    %224 = tpu.matmul %222, %223, %cst_88 {dimension_numbers = #tpu.dot_dimension_numbers<[1], [0], [0], [1], [0, 0, 1, 1], [], []>} : vector<16x8xf32>, vector<8x6xf32>, vector<16x6xf32> -> vector<16x6xf32>
    %225 = arith.addf %221, %224 : vector<16x6xf32>
    %226 = vector.broadcast %205 : vector<1x6xf32> to vector<16x6xf32>
    %227 = arith.addf %225, %226 : vector<16x6xf32>
    %228 = vector.broadcast %151 : vector<16x1xf32> to vector<16x6xf32>
    %229 = arith.mulf %227, %228 : vector<16x6xf32>
    %cst_89 = arith.constant dense<0.000000e+00> : vector<16x6xf32>
    %230 = tpu.matmul %202, %206, %cst_89 {dimension_numbers = #tpu.dot_dimension_numbers<[1], [0], [0], [1], [0, 0, 1, 1], [], []>} : vector<16x8xf32>, vector<8x6xf32>, vector<16x6xf32> -> vector<16x6xf32>
    %231 = vector.broadcast %207 : vector<1x6xf32> to vector<16x6xf32>
    %232 = arith.addf %230, %231 : vector<16x6xf32>
    %233 = arith.addf %229, %232 : vector<16x6xf32>
    %c0_90 = arith.constant 0 : index
    %c0_91 = arith.constant 0 : index
    %234 = vector.load %arg22[%c0_90, %c0_91] : memref<16x6xf32, #tpu.memory_space<vmem>>, vector<16x6xf32>
    tpu.vector_store %arg22[%c0_90, %c0_91], %233 {strides = array<i32>} : memref<16x6xf32, #tpu.memory_space<vmem>>, vector<16x6xf32>,
    return
  }
}

</mosaic_0001>

<llo_original>
// kernel: pai_autoencoder_forward.1
$region0: #{pai_autoencoder_forward.1}
  #allocation0 [shape = 'u32[]', space=smem, size = 0x4, offset = 0x4, fixed_abs, tag = 'smem constant byte address 0x4 - core index']
  #allocation1 [shape = 'u32[144,128]{1,0:T(1,128)}', space=vmem, size = 0x12000, scoped, tag = 'internal scratch']
  %s0 = inlined_call_operand.vmem [shape: f32[48,8], index: 0, kind: input, shape index: {}]
  %s1 = inlined_call_operand.vmem [shape: f32[192,48], index: 1, kind: input, shape index: {}]
  %s2 = inlined_call_operand.hbm [shape: f32[32,8], index: 2, kind: input, shape index: {}]
  %s3 = inlined_call_operand.hbm [shape: f32[1,8], index: 3, kind: input, shape index: {}]
  %s4 = inlined_call_operand.hbm [shape: f32[8,8], index: 4, kind: input, shape index: {}]
  %s5 = inlined_call_operand.hbm [shape: f32[1,8], index: 5, kind: input, shape index: {}]
  %s6 = inlined_call_operand.hbm [shape: f32[8,48], index: 6, kind: input, shape index: {}]
  %s7 = inlined_call_operand.hbm [shape: f32[64,16], index: 7, kind: input, shape index: {}]
  %s8 = inlined_call_operand.hbm [shape: f32[1,16], index: 8, kind: input, shape index: {}]
  %s9 = inlined_call_operand.hbm [shape: f32[16,64], index: 9, kind: input, shape index: {}]
  %s10 = inlined_call_operand.hbm [shape: f32[1,64], index: 10, kind: input, shape index: {}]
  %s11 = inlined_call_operand.vmem [shape: f32[16,8], index: 11, kind: input, shape index: {}]
  %s12 = inlined_call_operand.vmem [shape: f32[64,16], index: 12, kind: input, shape index: {}, may-alias: {12,17}]
  %s13 = inlined_call_operand.hbm [shape: f32[32,8], index: 13, kind: input, shape index: {}]
  %s14 = inlined_call_operand.hbm [shape: f32[1,8], index: 14, kind: input, shape index: {}]
  %s15 = inlined_call_operand.vmem [shape: f32[8,8], index: 15, kind: input, shape index: {}]
  %s16 = inlined_call_operand.vmem [shape: f32[1,8], index: 16, kind: input, shape index: {}]
  %s17 = inlined_call_operand.vmem [shape: f32[64,16], index: 17, kind: input, shape index: {}, may-alias: {12,17}]
  %s18 = inlined_call_operand.vmem [shape: f32[32,6], index: 18, kind: input, shape index: {}]
  %s19 = inlined_call_operand.vmem [shape: f32[1,6], index: 19, kind: input, shape index: {}]
  %s20 = inlined_call_operand.vmem [shape: f32[8,6], index: 20, kind: input, shape index: {}]
  %s21 = inlined_call_operand.vmem [shape: f32[1,6], index: 21, kind: input, shape index: {}]
  %s22 = inlined_call_operand.vmem [shape: f32[16,6], index: 22, kind: output, shape index: {}]
  %s23 = sld [smem:[#allocation0]]
  $region142: #{pai_autoencoder_forward.1} parent=0
    _
  %s25 = ssub.s32 1, %s23
  %s26 = scalar_select 0, %s25, %s23
  $region1: #{pai_autoencoder_forward.1} parent=0
    #allocation2 [shape = 'u8[16384]{0}', space=vmem, size = 0x4000, scoped, tag = 'input window, operand 2, single buffered']
    #allocation3 [shape = 's32[1]{0}', space=sflag, size = 0x4, scoped, tag = 'scoped memory for pai_autoencoder_forward.1']
    #allocation4 [shape = 'u8[512]{0}', space=vmem, size = 0x400, scoped, tag = 'input window, operand 3, single buffered']
    #allocation5 [shape = 's32[1]{0}', space=sflag, size = 0x4, scoped, tag = 'scoped memory for pai_autoencoder_forward.1']
    #allocation6 [shape = 'u8[4096]{0}', space=vmem, size = 0x1000, scoped, tag = 'input window, operand 4, single buffered']
    #allocation7 [shape = 'u8[512]{0}', space=vmem, size = 0x400, scoped, tag = 'input window, operand 5, single buffered']
    #allocation8 [shape = 's32[1]{0}', space=sflag, size = 0x4, scoped, tag = 'scoped memory for pai_autoencoder_forward.1']
    #allocation9 [shape = 'u8[4096]{0}', space=vmem, size = 0x1000, scoped, tag = 'input window, operand 6, single buffered']
    #allocation10 [shape = 'u8[32768]{0}', space=vmem, size = 0x8000, scoped, tag = 'input window, operand 7, single buffered']
    #allocation11 [shape = 's32[1]{0}', space=sflag, size = 0x4, scoped, tag = 'scoped memory for pai_autoencoder_forward.1']
    #allocation12 [shape = 'u8[512]{0}', space=vmem, size = 0x400, scoped, tag = 'input window, operand 8, single buffered']
    #allocation13 [shape = 'u8[8192]{0}', space=vmem, size = 0x2000, scoped, tag = 'input window, operand 9, single buffered']
    #allocation14 [shape = 's32[1]{0}', space=sflag, size = 0x4, scoped, tag = 'scoped memory for pai_autoencoder_forward.1']
    #allocation15 [shape = 'u8[512]{0}', space=vmem, size = 0x400, scoped, tag = 'input window, operand 10, single buffered']
    #allocation16 [shape = 'u8[16384]{0}', space=vmem, size = 0x4000, scoped, tag = 'input window, operand 13, single buffered']
    #allocation17 [shape = 's32[1]{0}', space=sflag, size = 0x4, scoped, tag = 'scoped memory for pai_autoencoder_forward.1']
    #allocation18 [shape = 'u8[512]{0}', space=vmem, size = 0x400, scoped, tag = 'input window, operand 14, single buffered']
    %27 = vsyncpa [#allocation3], 0
    %28 = vsyncpa [#allocation5], 0
    %29 = vsyncpa [#allocation8], 0
    %30 = vsyncpa [#allocation11], 0
    %31 = vsyncpa [#allocation14], 0
    %32 = vsyncpa [#allocation17], 0
    // Predicated region
    $region2: #{pai_autoencoder_forward.1} parent=1 // pred_check
      _
    $region3: #{pai_autoencoder_forward.1} parent=1 // pred_check_branch
      %34 = sbr.rel (0) target = $region5
    $region4: #{pai_autoencoder_forward.1} parent=1 // pred_region
      _
    $region5: #{pai_autoencoder_forward.1} parent=1 // pred_fallthru
      _
    // Predicated region
    $region6: #{pai_autoencoder_forward.1} parent=1 // pred_check
      _
    $region7: #{pai_autoencoder_forward.1} parent=1 // pred_check_branch
      %36 = sbr.rel (0) target = $region9
    $region8: #{pai_autoencoder_forward.1} parent=1 // pred_region
      _
    $region9: #{pai_autoencoder_forward.1} parent=1 // pred_fallthru
      _
    // Predicated region
    $region10: #{pai_autoencoder_forward.1} parent=1 // pred_check
      _
    $region11: #{pai_autoencoder_forward.1} parent=1 // pred_check_branch
      %38 = sbr.rel (0) target = $region13
    $region12: #{pai_autoencoder_forward.1} parent=1 // pred_region
      %s40 = ssub.s32 512, 512
      %41 = vsyncadd [#allocation3], %s40
      %s42 = sshll.u32 [#allocation2], 4
      %s43 = int_to_ptr.vmem [resolvable:$true] %s42
      %48 = dma.hbm_to_vmem [thread:$0]  %s2, 512, %s43, [#allocation3], 128, 128, 8
    $region13: #{pai_autoencoder_forward.1} parent=1 // pred_fallthru
      _
    // Predicated region
    $region14: #{pai_autoencoder_forward.1} parent=1 // pred_check
      _
    $region15: #{pai_autoencoder_forward.1} parent=1 // pred_check_branch
      %50 = sbr.rel (0) target = $region17
    $region16: #{pai_autoencoder_forward.1} parent=1 // pred_region
      %s52 = ssub.s32 16, 16
      %53 = vsyncadd [#allocation5], %s52
      %s55 = sshll.u32 [#allocation4], 4
      %s56 = int_to_ptr.vmem [resolvable:$true] %s55
      %58 = dma.hbm_to_vmem [thread:$0]  %s3, 16, %s56, [#allocation5]
    $region17: #{pai_autoencoder_forward.1} parent=1 // pred_fallthru
      _
    // Predicated region
    $region18: #{pai_autoencoder_forward.1} parent=1 // pred_check
      _
    $region19: #{pai_autoencoder_forward.1} parent=1 // pred_check_branch
      %60 = sbr.rel (0) target = $region21
    $region20: #{pai_autoencoder_forward.1} parent=1 // pred_region
      %s62 = ssub.s32 128, 128
      %63 = vsyncadd [#allocation5], %s62
      %s65 = sshll.u32 [#allocation6], 4
      %s66 = int_to_ptr.vmem [resolvable:$true] %s65
      %68 = dma.hbm_to_vmem [thread:$0]  %s4, 128, %s66, [#allocation5]
    $region21: #{pai_autoencoder_forward.1} parent=1 // pred_fallthru
      _
    // Predicated region
    $region22: #{pai_autoencoder_forward.1} parent=1 // pred_check
      _
    $region23: #{pai_autoencoder_forward.1} parent=1 // pred_check_branch
      %70 = sbr.rel (0) target = $region25
    $region24: #{pai_autoencoder_forward.1} parent=1 // pred_region
      %s72 = ssub.s32 16, 16
      %73 = vsyncadd [#allocation8], %s72
      %s75 = sshll.u32 [#allocation7], 4
      %s76 = int_to_ptr.vmem [resolvable:$true] %s75
      %78 = dma.hbm_to_vmem [thread:$0]  %s5, 16, %s76, [#allocation8]
    $region25: #{pai_autoencoder_forward.1} parent=1 // pred_fallthru
      _
    // Predicated region
    $region26: #{pai_autoencoder_forward.1} parent=1 // pred_check
      _
    $region27: #{pai_autoencoder_forward.1} parent=1 // pred_check_branch
      %80 = sbr.rel (0) target = $region29
    $region28: #{pai_autoencoder_forward.1} parent=1 // pred_region
      %s82 = ssub.s32 128, 128
      %83 = vsyncadd [#allocation8], %s82
      %s85 = sshll.u32 [#allocation9], 4
      %s86 = int_to_ptr.vmem [resolvable:$true] %s85
      %88 = dma.hbm_to_vmem [thread:$0]  %s6, 128, %s86, [#allocation8]
    $region29: #{pai_autoencoder_forward.1} parent=1 // pred_fallthru
      _
    // Predicated region
    $region30: #{pai_autoencoder_forward.1} parent=1 // pred_check
      _
    $region31: #{pai_autoencoder_forward.1} parent=1 // pred_check_branch
      %90 = sbr.rel (0) target = $region33
    $region32: #{pai_autoencoder_forward.1} parent=1 // pred_region
      %s92 = ssub.s32 1024, 1024
      %93 = vsyncadd [#allocation11], %s92
      %s94 = sshll.u32 [#allocation10], 4
      %s95 = int_to_ptr.vmem [resolvable:$true] %s94
      %100 = dma.hbm_to_vmem [thread:$0]  %s7, 1024, %s95, [#allocation11], 128, 128, 8
    $region33: #{pai_autoencoder_forward.1} parent=1 // pred_fallthru
      _
    // Predicated region
    $region34: #{pai_autoencoder_forward.1} parent=1 // pred_check
      _
    $region35: #{pai_autoencoder_forward.1} parent=1 // pred_check_branch
      %102 = sbr.rel (0) target = $region37
    $region36: #{pai_autoencoder_forward.1} parent=1 // pred_region
      %s104 = ssub.s32 16, 16
      %105 = vsyncadd [#allocation11], %s104
      %s107 = sshll.u32 [#allocation12], 4
      %s108 = int_to_ptr.vmem [resolvable:$true] %s107
      %110 = dma.hbm_to_vmem [thread:$0]  %s8, 16, %s108, [#allocation11]
    $region37: #{pai_autoencoder_forward.1} parent=1 // pred_fallthru
      _
    // Predicated region
    $region38: #{pai_autoencoder_forward.1} parent=1 // pred_check
      _
    $region39: #{pai_autoencoder_forward.1} parent=1 // pred_check_branch
      %112 = sbr.rel (0) target = $region41
    $region40: #{pai_autoencoder_forward.1} parent=1 // pred_region
      %s114 = ssub.s32 256, 256
      %115 = vsyncadd [#allocation14], %s114
      %s116 = sshll.u32 [#allocation13], 4
      %s117 = int_to_ptr.vmem [resolvable:$true] %s116
      %122 = dma.hbm_to_vmem [thread:$0]  %s9, 256, %s117, [#allocation14], 128, 128, 8
    $region41: #{pai_autoencoder_forward.1} parent=1 // pred_fallthru
      _
    // Predicated region
    $region42: #{pai_autoencoder_forward.1} parent=1 // pred_check
      _
    $region43: #{pai_autoencoder_forward.1} parent=1 // pred_check_branch
      %124 = sbr.rel (0) target = $region45
    $region44: #{pai_autoencoder_forward.1} parent=1 // pred_region
      %s126 = ssub.s32 16, 16
      %127 = vsyncadd [#allocation14], %s126
      %s129 = sshll.u32 [#allocation15], 4
      %s130 = int_to_ptr.vmem [resolvable:$true] %s129
      %132 = dma.hbm_to_vmem [thread:$0]  %s10, 16, %s130, [#allocation14]
    $region45: #{pai_autoencoder_forward.1} parent=1 // pred_fallthru
      _
    // Predicated region
    $region46: #{pai_autoencoder_forward.1} parent=1 // pred_check
      _
    $region47: #{pai_autoencoder_forward.1} parent=1 // pred_check_branch
      %134 = sbr.rel (0) target = $region49
    $region48: #{pai_autoencoder_forward.1} parent=1 // pred_region
      _
    $region49: #{pai_autoencoder_forward.1} parent=1 // pred_fallthru
      _
    // Predicated region
    $region50: #{pai_autoencoder_forward.1} parent=1 // pred_check
      _
    $region51: #{pai_autoencoder_forward.1} parent=1 // pred_check_branch
      %136 = sbr.rel (0) target = $region53
    $region52: #{pai_autoencoder_forward.1} parent=1 // pred_region
      _
    $region53: #{pai_autoencoder_forward.1} parent=1 // pred_fallthru
      _
    // Predicated region
    $region54: #{pai_autoencoder_forward.1} parent=1 // pred_check
      _
    $region55: #{pai_autoencoder_forward.1} parent=1 // pred_check_branch
      %138 = sbr.rel (0) target = $region57
    $region56: #{pai_autoencoder_forward.1} parent=1 // pred_region
      %s140 = ssub.s32 512, 512
      %141 = vsyncadd [#allocation17], %s140
      %s142 = sshll.u32 [#allocation16], 4
      %s143 = int_to_ptr.vmem [resolvable:$true] %s142
      %148 = dma.hbm_to_vmem [thread:$0]  %s13, 512, %s143, [#allocation17], 128, 128, 8
    $region57: #{pai_autoencoder_forward.1} parent=1 // pred_fallthru
      _
    // Predicated region
    $region58: #{pai_autoencoder_forward.1} parent=1 // pred_check
      _
    $region59: #{pai_autoencoder_forward.1} parent=1 // pred_check_branch
      %150 = sbr.rel (0) target = $region61
    $region60: #{pai_autoencoder_forward.1} parent=1 // pred_region
      %s152 = ssub.s32 16, 16
      %153 = vsyncadd [#allocation17], %s152
      %s155 = sshll.u32 [#allocation18], 4
      %s156 = int_to_ptr.vmem [resolvable:$true] %s155
      %158 = dma.hbm_to_vmem [thread:$0]  %s14, 16, %s156, [#allocation17]
    $region61: #{pai_autoencoder_forward.1} parent=1 // pred_fallthru
      _
    // Predicated region
    $region62: #{pai_autoencoder_forward.1} parent=1 // pred_check
      _
    $region63: #{pai_autoencoder_forward.1} parent=1 // pred_check_branch
      %160 = sbr.rel (0) target = $region65
    $region64: #{pai_autoencoder_forward.1} parent=1 // pred_region
      _
    $region65: #{pai_autoencoder_forward.1} parent=1 // pred_fallthru
      _
    // Predicated region
    $region66: #{pai_autoencoder_forward.1} parent=1 // pred_check
      _
    $region67: #{pai_autoencoder_forward.1} parent=1 // pred_check_branch
      %162 = sbr.rel (0) target = $region69
    $region68: #{pai_autoencoder_forward.1} parent=1 // pred_region
      _
    $region69: #{pai_autoencoder_forward.1} parent=1 // pred_fallthru
      _
    // Predicated region
    $region70: #{pai_autoencoder_forward.1} parent=1 // pred_check
      _
    $region71: #{pai_autoencoder_forward.1} parent=1 // pred_check_branch
      %164 = sbr.rel (0) target = $region73
    $region72: #{pai_autoencoder_forward.1} parent=1 // pred_region
      _
    $region73: #{pai_autoencoder_forward.1} parent=1 // pred_fallthru
      _
    // Predicated region
    $region74: #{pai_autoencoder_forward.1} parent=1 // pred_check
      _
    $region75: #{pai_autoencoder_forward.1} parent=1 // pred_check_branch
      %166 = sbr.rel (0) target = $region77
    $region76: #{pai_autoencoder_forward.1} parent=1 // pred_region
      _
    $region77: #{pai_autoencoder_forward.1} parent=1 // pred_fallthru
      _
    // Predicated region
    $region78: #{pai_autoencoder_forward.1} parent=1 // pred_check
      _
    $region79: #{pai_autoencoder_forward.1} parent=1 // pred_check_branch
      %168 = sbr.rel (0) target = $region81
    $region80: #{pai_autoencoder_forward.1} parent=1 // pred_region
      _
    $region81: #{pai_autoencoder_forward.1} parent=1 // pred_fallthru
      _
    // Predicated region
    $region82: #{pai_autoencoder_forward.1} parent=1 // pred_check
      _
    $region83: #{pai_autoencoder_forward.1} parent=1 // pred_check_branch
      %170 = sbr.rel (0) target = $region85
    $region84: #{pai_autoencoder_forward.1} parent=1 // pred_region
      _
    $region85: #{pai_autoencoder_forward.1} parent=1 // pred_fallthru
      _
    // Predicated region
    $region86: #{pai_autoencoder_forward.1} parent=1 // pred_check
      _
    $region87: #{pai_autoencoder_forward.1} parent=1 // pred_check_branch
      %172 = sbr.rel (0) target = $region89
    $region88: #{pai_autoencoder_forward.1} parent=1 // pred_region
      _
    $region89: #{pai_autoencoder_forward.1} parent=1 // pred_fallthru
      _
    // Predicated region
    $region90: #{pai_autoencoder_forward.1} parent=1 // pred_check
      _
    $region91: #{pai_autoencoder_forward.1} parent=1 // pred_check_branch
      %174 = sbr.rel (0) target = $region93
    $region92: #{pai_autoencoder_forward.1} parent=1 // pred_region
      %175 = dma.done [#allocation3], 512
    $region93: #{pai_autoencoder_forward.1} parent=1 // pred_fallthru
      _
    // Predicated region
    $region94: #{pai_autoencoder_forward.1} parent=1 // pred_check
      _
    $region95: #{pai_autoencoder_forward.1} parent=1 // pred_check_branch
      %177 = sbr.rel (0) target = $region97
    $region96: #{pai_autoencoder_forward.1} parent=1 // pred_region
      %178 = dma.done [#allocation5], 16
    $region97: #{pai_autoencoder_forward.1} parent=1 // pred_fallthru
      _
    // Predicated region
    $region98: #{pai_autoencoder_forward.1} parent=1 // pred_check
      _
    $region99: #{pai_autoencoder_forward.1} parent=1 // pred_check_branch
      %180 = sbr.rel (0) target = $region101
    $region100: #{pai_autoencoder_forward.1} parent=1 // pred_region
      %181 = dma.done [#allocation5], 128
    $region101: #{pai_autoencoder_forward.1} parent=1 // pred_fallthru
      _
    // Predicated region
    $region102: #{pai_autoencoder_forward.1} parent=1 // pred_check
      _
    $region103: #{pai_autoencoder_forward.1} parent=1 // pred_check_branch
      %183 = sbr.rel (0) target = $region105
    $region104: #{pai_autoencoder_forward.1} parent=1 // pred_region
      %184 = dma.done [#allocation8], 16
    $region105: #{pai_autoencoder_forward.1} parent=1 // pred_fallthru
      _
    // Predicated region
    $region106: #{pai_autoencoder_forward.1} parent=1 // pred_check
      _
    $region107: #{pai_autoencoder_forward.1} parent=1 // pred_check_branch
      %186 = sbr.rel (0) target = $region109
    $region108: #{pai_autoencoder_forward.1} parent=1 // pred_region
      %187 = dma.done [#allocation8], 128
    $region109: #{pai_autoencoder_forward.1} parent=1 // pred_fallthru
      _
    // Predicated region
    $region110: #{pai_autoencoder_forward.1} parent=1 // pred_check
      _
    $region111: #{pai_autoencoder_forward.1} parent=1 // pred_check_branch
      %189 = sbr.rel (0) target = $region113
    $region112: #{pai_autoencoder_forward.1} parent=1 // pred_region
      %190 = dma.done [#allocation11], 1024
    $region113: #{pai_autoencoder_forward.1} parent=1 // pred_fallthru
      _
    // Predicated region
    $region114: #{pai_autoencoder_forward.1} parent=1 // pred_check
      _
    $region115: #{pai_autoencoder_forward.1} parent=1 // pred_check_branch
      %192 = sbr.rel (0) target = $region117
    $region116: #{pai_autoencoder_forward.1} parent=1 // pred_region
      %193 = dma.done [#allocation11], 16
    $region117: #{pai_autoencoder_forward.1} parent=1 // pred_fallthru
      _
    // Predicated region
    $region118: #{pai_autoencoder_forward.1} parent=1 // pred_check
      _
    $region119: #{pai_autoencoder_forward.1} parent=1 // pred_check_branch
      %195 = sbr.rel (0) target = $region121
    $region120: #{pai_autoencoder_forward.1} parent=1 // pred_region
      %196 = dma.done [#allocation14], 256
    $region121: #{pai_autoencoder_forward.1} parent=1 // pred_fallthru
      _
    // Predicated region
    $region122: #{pai_autoencoder_forward.1} parent=1 // pred_check
      _
    $region123: #{pai_autoencoder_forward.1} parent=1 // pred_check_branch
      %198 = sbr.rel (0) target = $region125
    $region124: #{pai_autoencoder_forward.1} parent=1 // pred_region
      %199 = dma.done [#allocation14], 16
    $region125: #{pai_autoencoder_forward.1} parent=1 // pred_fallthru
      _
    // Predicated region
    $region126: #{pai_autoencoder_forward.1} parent=1 // pred_check
      _
    $region127: #{pai_autoencoder_forward.1} parent=1 // pred_check_branch
      %201 = sbr.rel (0) target = $region129
    $region128: #{pai_autoencoder_forward.1} parent=1 // pred_region
      %202 = dma.done [#allocation17], 512
    $region129: #{pai_autoencoder_forward.1} parent=1 // pred_fallthru
      _
    // Predicated region
    $region130: #{pai_autoencoder_forward.1} parent=1 // pred_check
      _
    $region131: #{pai_autoencoder_forward.1} parent=1 // pred_check_branch
      %204 = sbr.rel (0) target = $region133
    $region132: #{pai_autoencoder_forward.1} parent=1 // pred_region
      %205 = dma.done [#allocation17], 16
    $region133: #{pai_autoencoder_forward.1} parent=1 // pred_fallthru
      _
    %v206 = vlaneseq
    %v207 = vshrl.u32 %v206, 7
    %v208 = vadd.s32 %v207, 8
    %v209 = vadd.s32 %v207, 16
    %v210 = vadd.s32 %v207, 24
    %v211 = vadd.s32 %v207, 32
    %v212 = vadd.s32 %v207, 40
    %vm213 = vcmp.lt.s32.totalorder %v207, 45
    %vm214 = vcmp.lt.s32.totalorder %v208, 45
    %vm215 = vcmp.lt.s32.totalorder %v209, 45
    %vm216 = vcmp.lt.s32.totalorder %v210, 45
    %vm217 = vcmp.lt.s32.totalorder %v211, 45
    %vm218 = vcmp.lt.s32.totalorder %v212, 45
    %v219 = vsel %vm213, 1.0, 0.0
    %v220 = vsel %vm214, 1.0, 0.0
    %v221 = vsel %vm215, 1.0, 0.0
    %v222 = vsel %vm216, 1.0, 0.0
    %v223 = vsel %vm217, 1.0, 0.0
    %v224 = vsel %vm218, 1.0, 0.0
    %v225 = vld [vmem:[%s0] sm:$0xff]
    %v226 = vld [vmem:[%s0 + $0x8] sm:$0xff]
    %v227 = vld [vmem:[%s0 + $0x10] sm:$0xff]
    %v228 = vld [vmem:[%s0 + $0x18] sm:$0xff]
    %v229 = vld [vmem:[%s0 + $0x20] sm:$0xff]
    %v230 = vld [vmem:[%s0 + $0x28] sm:$0xff]
    %v231 = vmul.f32 %v225, %v219
    %v232 = vmul.f32 %v226, %v220
    %v233 = vmul.f32 %v227, %v221
    %v234 = vmul.f32 %v228, %v222
    %v235 = vmul.f32 %v229, %v223
    %v236 = vmul.f32 %v230, %v224
    %v237 = vld [vmem:[%s1] sm:$0xff]
    %v238 = vld [vmem:[%s1 + $0x8] sm:$0xff]
    %v239 = vld [vmem:[%s1 + $0x10] sm:$0xff]
    %v240 = vld [vmem:[%s1 + $0x18] sm:$0xff]
    %v241 = vld [vmem:[%s1 + $0x20] sm:$0xff]
    %v242 = vld [vmem:[%s1 + $0x28] sm:$0xff]
    %v243 = vld [vmem:[%s1 + $0x30] sm:$0xff]
    %v244 = vld [vmem:[%s1 + $0x38] sm:$0xff]
    %v245 = vld [vmem:[%s1 + $0x40] sm:$0xff]
    %v246 = vld [vmem:[%s1 + $0x48] sm:$0xff]
    %v247 = vld [vmem:[%s1 + $0x50] sm:$0xff]
    %v248 = vld [vmem:[%s1 + $0x58] sm:$0xff]
    %v249 = vld [vmem:[%s1 + $0x60] sm:$0xff]
    %v250 = vld [vmem:[%s1 + $0x68] sm:$0xff]
    %v251 = vld [vmem:[%s1 + $0x70] sm:$0xff]
    %v252 = vld [vmem:[%s1 + $0x78] sm:$0xff]
    %v253 = vld [vmem:[%s1 + $0x80] sm:$0xff]
    %v254 = vld [vmem:[%s1 + $0x88] sm:$0xff]
    %v255 = vld [vmem:[%s1 + $0x90] sm:$0xff]
    %v256 = vld [vmem:[%s1 + $0x98] sm:$0xff]
    %v257 = vld [vmem:[%s1 + $0xa0] sm:$0xff]
    %v258 = vld [vmem:[%s1 + $0xa8] sm:$0xff]
    %v259 = vld [vmem:[%s1 + $0xb0] sm:$0xff]
    %v260 = vld [vmem:[%s1 + $0xb8] sm:$0xff]
    %v261 = vld [vmem:[#allocation2] sm:$0xff]
    %v262 = vld [vmem:[#allocation2 + $0x8] sm:$0xff]
    %v263 = vld [vmem:[#allocation2 + $0x10] sm:$0xff]
    %v264 = vld [vmem:[#allocation2 + $0x18] sm:$0xff]
    %v265 = vld [vmem:[#allocation4] sm:$0x1]
    %v266 = vld [vmem:[#allocation6] sm:$0xff]
    %v267 = vld [vmem:[#allocation7] sm:$0x1]
    %vm268 = vcmask 392192
    %v270 = vsel %vm268, %v237, 0
    %v273 = vsel %vm268, %v238, 0
    %v276 = vsel %vm268, %v239, 0
    %v279 = vsel %vm268, %v240, 0
    %v282 = vsel %vm268, %v241, 0
    %v285 = vsel %vm268, %v242, 0
    %v288 = vsel %vm268, %v243, 0
    %v291 = vsel %vm268, %v244, 0
    %v294 = vsel %vm268, %v245, 0
    %v297 = vsel %vm268, %v246, 0
    %v300 = vsel %vm268, %v247, 0
    %v303 = vsel %vm268, %v248, 0
    %v306 = vsel %vm268, %v249, 0
    %v309 = vsel %vm268, %v250, 0
    %v312 = vsel %vm268, %v251, 0
    %v315 = vsel %vm268, %v252, 0
    %v318 = vsel %vm268, %v253, 0
    %v321 = vsel %vm268, %v254, 0
    %v324 = vsel %vm268, %v255, 0
    %v327 = vsel %vm268, %v256, 0
    %v330 = vsel %vm268, %v257, 0
    %v333 = vsel %vm268, %v258, 0
    %v336 = vsel %vm268, %v259, 0
    %v339 = vsel %vm268, %v260, 0
    %341 = vmatprep.subr.mxu0 0.0
    %342 = vmatpush1.msra.mxu0 %v231
    %343 = vmatprep.subr.mxu0 0.0
    %344 = vmatpush1.msra.mxu0 %v232
    %345 = vmatprep.subr.mxu0 0.0
    %346 = vmatpush1.msra.mxu0 %v233
    %347 = vmatprep.subr.mxu0 0.0
    %348 = vmatpush1.msra.mxu0 %v234
    %349 = vmatprep.subr.mxu0 0.0
    %350 = vmatpush1.msra.mxu0 %v235
    %351 = vmatprep.subr.mxu0 0.0
    %352 = vmatpush1.msra.mxu0 %v236
    %353 = vmatprep.subr.mxu0 0.0
    %354 = vmatpush1.msra.mxu0 0.0
    %355 = vmatprep.subr.mxu0 0.0
    %356 = vmatpush1.msra.mxu0 0.0
    %357 = vmatprep.subr.mxu0 0.0
    %358 = vmatpush1.msra.mxu0 0.0
    %359 = vmatprep.subr.mxu0 0.0
    %360 = vmatpush1.msra.mxu0 0.0
    %361 = vmatprep.subr.mxu0 0.0
    %362 = vmatpush1.msra.mxu0 0.0
    %363 = vmatprep.subr.mxu0 0.0
    %364 = vmatpush1.msra.mxu0 0.0
    %365 = vmatprep.subr.mxu0 0.0
    %366 = vmatpush1.msra.mxu0 0.0
    %367 = vmatprep.subr.mxu0 0.0
    %368 = vmatpush1.msra.mxu0 0.0
    %369 = vmatprep.subr.mxu0 0.0
    %370 = vmatpush1.msra.mxu0 0.0
    %371 = vmatprep.subr.mxu0 0.0
    %372 = vmatpush1.msra.mxu0 0.0
    %373 = vmatprep.subr.mxu0 0.0
    %374 = vmatpush1.msra.mxu0 0.0
    %375 = vmatprep.subr.mxu0 0.0
    %376 = vmatpush1.msra.mxu0 0.0
    %377 = vmatprep.subr.mxu0 0.0
    %378 = vmatpush1.msra.mxu0 0.0
    %379 = vmatprep.subr.mxu0 0.0
    %380 = vmatpush1.msra.mxu0 0.0
    %381 = vmatprep.subr.mxu0 0.0
    %382 = vmatpush1.msra.mxu0 0.0
    %383 = vmatprep.subr.mxu0 0.0
    %384 = vmatpush1.msra.mxu0 0.0
    %385 = vmatprep.subr.mxu0 0.0
    %386 = vmatpush1.msra.mxu0 0.0
    %387 = vmatprep.subr.mxu0 0.0
    %388 = vmatpush1.msra.mxu0 0.0
    %389 = vmatprep.subr.mxu0 0.0
    %390 = vmatpush1.msra.mxu0 0.0
    %391 = vmatprep.subr.mxu0 0.0
    %392 = vmatpush1.msra.mxu0 0.0
    %393 = vmatprep.subr.mxu0 0.0
    %394 = vmatpush1.msra.mxu0 0.0
    %395 = vmatprep.subr.mxu0 0.0
    %396 = vmatpush1.msra.mxu0 0.0
    %397 = vmatprep.subr.mxu0 0.0
    %398 = vmatpush1.msra.mxu0 0.0
    %399 = vmatprep.subr.mxu0 0.0
    %400 = vmatpush1.msra.mxu0 0.0
    %401 = vmatprep.subr.mxu0 0.0
    %402 = vmatpush1.msra.mxu0 0.0
    %403 = vmatprep.subr.mxu0 0.0
    %404 = vmatpush1.msra.mxu0 0.0
    %405 = vmatprep.mubr.f32.mxu0 0.0
    %406 = vmatmul.mubr.f32.gmra.mrb[0].mxu0 %v270
    %v407 = vpop.f32.mrb[0].mxu0
    %v408 = vadd.f32 0.0, %v407
    %v409 = vpop.f32.mrb[0].mxu0
    %410 = vmatprep.mubr.f32.mxu0 0.0
    %411 = vmatmul.mubr.f32.gmra.mrb[0].mxu0 %v273
    %v412 = vpop.f32.mrb[0].mxu0
    %v413 = vadd.f32 0.0, %v412
    %v414 = vpop.f32.mrb[0].mxu0
    %415 = vmatprep.mubr.f32.mxu0 0.0
    %416 = vmatmul.mubr.f32.gmra.mrb[0].mxu0 %v276
    %v417 = vpop.f32.mrb[0].mxu0
    %v418 = vadd.f32 0.0, %v417
    %v419 = vpop.f32.mrb[0].mxu0
    %420 = vmatprep.mubr.f32.mxu0 0.0
    %421 = vmatmul.mubr.f32.gmra.mrb[0].mxu0 %v279
    %v422 = vpop.f32.mrb[0].mxu0
    %v423 = vadd.f32 0.0, %v422
    %v424 = vpop.f32.mrb[0].mxu0
    %425 = vmatprep.mubr.f32.mxu0 0.0
    %426 = vmatmul.mubr.f32.gmra.mrb[0].mxu0 %v282
    %v427 = vpop.f32.mrb[0].mxu0
    %v428 = vadd.f32 0.0, %v427
    %v429 = vpop.f32.mrb[0].mxu0
    %430 = vmatprep.mubr.f32.mxu0 0.0
    %431 = vmatmul.mubr.f32.gmra.mrb[0].mxu0 %v285
    %v432 = vpop.f32.mrb[0].mxu0
    %v433 = vadd.f32 0.0, %v432
    %v434 = vpop.f32.mrb[0].mxu0
    %435 = vmatprep.mubr.f32.mxu0 0.0
    %436 = vmatmul.mubr.f32.gmra.mrb[0].mxu0 %v288
    %v437 = vpop.f32.mrb[0].mxu0
    %v438 = vadd.f32 0.0, %v437
    %v439 = vpop.f32.mrb[0].mxu0
    %440 = vmatprep.mubr.f32.mxu0 0.0
    %441 = vmatmul.mubr.f32.gmra.mrb[0].mxu0 %v291
    %v442 = vpop.f32.mrb[0].mxu0
    %v443 = vadd.f32 0.0, %v442
    %v444 = vpop.f32.mrb[0].mxu0
    %445 = vmatprep.mubr.f32.mxu0 0.0
    %446 = vmatmul.mubr.f32.gmra.mrb[0].mxu0 %v294
    %v447 = vpop.f32.mrb[0].mxu0
    %v448 = vadd.f32 0.0, %v447
    %v449 = vpop.f32.mrb[0].mxu0
    %450 = vmatprep.mubr.f32.mxu0 0.0
    %451 = vmatmul.mubr.f32.gmra.mrb[0].mxu0 %v297
    %v452 = vpop.f32.mrb[0].mxu0
    %v453 = vadd.f32 0.0, %v452
    %v454 = vpop.f32.mrb[0].mxu0
    %455 = vmatprep.mubr.f32.mxu0 0.0
    %456 = vmatmul.mubr.f32.gmra.mrb[0].mxu0 %v300
    %v457 = vpop.f32.mrb[0].mxu0
    %v458 = vadd.f32 0.0, %v457
    %v459 = vpop.f32.mrb[0].mxu0
    %460 = vmatprep.mubr.f32.mxu0 0.0
    %461 = vmatmul.mubr.f32.gmra.mrb[0].mxu0 %v303
    %v462 = vpop.f32.mrb[0].mxu0
    %v463 = vadd.f32 0.0, %v462
    %v464 = vpop.f32.mrb[0].mxu0
    %465 = vmatprep.mubr.f32.mxu0 0.0
    %466 = vmatmul.mubr.f32.gmra.mrb[0].mxu0 %v306
    %v467 = vpop.f32.mrb[0].mxu0
    %v468 = vadd.f32 0.0, %v467
    %v469 = vpop.f32.mrb[0].mxu0
    %470 = vmatprep.mubr.f32.mxu0 0.0
    %471 = vmatmul.mubr.f32.gmra.mrb[0].mxu0 %v309
    %v472 = vpop.f32.mrb[0].mxu0
    %v473 = vadd.f32 0.0, %v472
    %v474 = vpop.f32.mrb[0].mxu0
    %475 = vmatprep.mubr.f32.mxu0 0.0
    %476 = vmatmul.mubr.f32.gmra.mrb[0].mxu0 %v312
    %v477 = vpop.f32.mrb[0].mxu0
    %v478 = vadd.f32 0.0, %v477
    %v479 = vpop.f32.mrb[0].mxu0
    %480 = vmatprep.mubr.f32.mxu0 0.0
    %481 = vmatmul.mubr.f32.gmra.mrb[0].mxu0 %v315
    %v482 = vpop.f32.mrb[0].mxu0
    %v483 = vadd.f32 0.0, %v482
    %v484 = vpop.f32.mrb[0].mxu0
    %485 = vmatprep.mubr.f32.mxu0 0.0
    %486 = vmatmul.mubr.f32.gmra.mrb[0].mxu0 %v318
    %v487 = vpop.f32.mrb[0].mxu0
    %v488 = vadd.f32 0.0, %v487
    %v489 = vpop.f32.mrb[0].mxu0
    %490 = vmatprep.mubr.f32.mxu0 0.0
    %491 = vmatmul.mubr.f32.gmra.mrb[0].mxu0 %v321
    %v492 = vpop.f32.mrb[0].mxu0
    %v493 = vadd.f32 0.0, %v492
    %v494 = vpop.f32.mrb[0].mxu0
    %495 = vmatprep.mubr.f32.mxu0 0.0
    %496 = vmatmul.mubr.f32.gmra.mrb[0].mxu0 %v324
    %v497 = vpop.f32.mrb[0].mxu0
    %v498 = vadd.f32 0.0, %v497
    %v499 = vpop.f32.mrb[0].mxu0
    %500 = vmatprep.mubr.f32.mxu0 0.0
    %501 = vmatmul.mubr.f32.gmra.mrb[0].mxu0 %v327
    %v502 = vpop.f32.mrb[0].mxu0
    %v503 = vadd.f32 0.0, %v502
    %v504 = vpop.f32.mrb[0].mxu0
    %505 = vmatprep.mubr.f32.mxu0 0.0
    %506 = vmatmul.mubr.f32.gmra.mrb[0].mxu0 %v330
    %v507 = vpop.f32.mrb[0].mxu0
    %v508 = vadd.f32 0.0, %v507
    %v509 = vpop.f32.mrb[0].mxu0
    %510 = vmatprep.mubr.f32.mxu0 0.0
    %511 = vmatmul.mubr.f32.gmra.mrb[0].mxu0 %v333
    %v512 = vpop.f32.mrb[0].mxu0
    %v513 = vadd.f32 0.0, %v512
    %v514 = vpop.f32.mrb[0].mxu0
    %515 = vmatprep.mubr.f32.mxu0 0.0
    %516 = vmatmul.mubr.f32.gmra.mrb[0].mxu0 %v336
    %v517 = vpop.f32.mrb[0].mxu0
    %v518 = vadd.f32 0.0, %v517
    %v519 = vpop.f32.mrb[0].mxu0
    %520 = vmatprep.mubr.f32.mxu0 0.0
    %521 = vmatmul.mubr.f32.gmra.mrb[0].mxu0 %v339
    %v522 = vpop.f32.mrb[0].mxu0
    %v523 = vadd.f32 0.0, %v522
    %v524 = vpop.f32.mrb[0].mxu0
    %525 = vdwg.mxu0
    %vm526 = vcmp.gt.f32.partialorder %v408, 0.0
    %vm527 = vcmp.gt.f32.partialorder %v413, 0.0
    %vm528 = vcmp.gt.f32.partialorder %v418, 0.0
    %vm529 = vcmp.gt.f32.partialorder %v423, 0.0
    %vm530 = vcmp.gt.f32.partialorder %v428, 0.0
    %vm531 = vcmp.gt.f32.partialorder %v433, 0.0
    %vm532 = vcmp.gt.f32.partialorder %v438, 0.0
    %vm533 = vcmp.gt.f32.partialorder %v443, 0.0
    %vm534 = vcmp.gt.f32.partialorder %v448, 0.0
    %vm535 = vcmp.gt.f32.partialorder %v453, 0.0
    %vm536 = vcmp.gt.f32.partialorder %v458, 0.0
    %vm537 = vcmp.gt.f32.partialorder %v463, 0.0
    %vm538 = vcmp.gt.f32.partialorder %v468, 0.0
    %vm539 = vcmp.gt.f32.partialorder %v473, 0.0
    %vm540 = vcmp.gt.f32.partialorder %v478, 0.0
    %vm541 = vcmp.gt.f32.partialorder %v483, 0.0
    %vm542 = vcmp.gt.f32.partialorder %v488, 0.0
    %vm543 = vcmp.gt.f32.partialorder %v493, 0.0
    %vm544 = vcmp.gt.f32.partialorder %v498, 0.0
    %vm545 = vcmp.gt.f32.partialorder %v503, 0.0
    %vm546 = vcmp.gt.f32.partialorder %v508, 0.0
    %vm547 = vcmp.gt.f32.partialorder %v513, 0.0
    %vm548 = vcmp.gt.f32.partialorder %v518, 0.0
    %vm549 = vcmp.gt.f32.partialorder %v523, 0.0
    %v550 = vmin.f32 %v408, 0.0
    %v551 = vmin.f32 %v413, 0.0
    %v552 = vmin.f32 %v418, 0.0
    %v553 = vmin.f32 %v423, 0.0
    %v554 = vmin.f32 %v428, 0.0
    %v555 = vmin.f32 %v433, 0.0
    %v556 = vmin.f32 %v438, 0.0
    %v557 = vmin.f32 %v443, 0.0
    %v558 = vmin.f32 %v448, 0.0
    %v559 = vmin.f32 %v453, 0.0
    %v560 = vmin.f32 %v458, 0.0
    %v561 = vmin.f32 %v463, 0.0
    %v562 = vmin.f32 %v468, 0.0
    %v563 = vmin.f32 %v473, 0.0
    %v564 = vmin.f32 %v478, 0.0
    %v565 = vmin.f32 %v483, 0.0
    %v566 = vmin.f32 %v488, 0.0
    %v567 = vmin.f32 %v493, 0.0
    %v568 = vmin.f32 %v498, 0.0
    %v569 = vmin.f32 %v503, 0.0
    %v570 = vmin.f32 %v508, 0.0
    %v571 = vmin.f32 %v513, 0.0
    %v572 = vmin.f32 %v518, 0.0
    %v573 = vmin.f32 %v523, 0.0
    %v574 = vmul.f32 %v550, 1.442695
    %v575 = vpow.pop %v574
    %v576 = vmul.f32 %v551, 1.442695
    %v577 = vpow.pop %v576
    %v578 = vmul.f32 %v552, 1.442695
    %v579 = vpow.pop %v578
    %v580 = vmul.f32 %v553, 1.442695
    %v581 = vpow.pop %v580
    %v582 = vmul.f32 %v554, 1.442695
    %v583 = vpow.pop %v582
    %v584 = vmul.f32 %v555, 1.442695
    %v585 = vpow.pop %v584
    %v586 = vmul.f32 %v556, 1.442695
    %v587 = vpow.pop %v586
    %v588 = vmul.f32 %v557, 1.442695
    %v589 = vpow.pop %v588
    %v590 = vmul.f32 %v558, 1.442695
    %v591 = vpow.pop %v590
    %v592 = vmul.f32 %v559, 1.442695
    %v593 = vpow.pop %v592
    %v594 = vmul.f32 %v560, 1.442695
    %v595 = vpow.pop %v594
    %v596 = vmul.f32 %v561, 1.442695
    %v597 = vpow.pop %v596
    %v598 = vmul.f32 %v562, 1.442695
    %v599 = vpow.pop %v598
    %v600 = vmul.f32 %v563, 1.442695
    %v601 = vpow.pop %v600
    %v602 = vmul.f32 %v564, 1.442695
    %v603 = vpow.pop %v602
    %v604 = vmul.f32 %v565, 1.442695
    %v605 = vpow.pop %v604
    %v606 = vmul.f32 %v566, 1.442695
    %v607 = vpow.pop %v606
    %v608 = vmul.f32 %v567, 1.442695
    %v609 = vpow.pop %v608
    %v610 = vmul.f32 %v568, 1.442695
    %v611 = vpow.pop %v610
    %v612 = vmul.f32 %v569, 1.442695
    %v613 = vpow.pop %v612
    %v614 = vmul.f32 %v570, 1.442695
    %v615 = vpow.pop %v614
    %v616 = vmul.f32 %v571, 1.442695
    %v617 = vpow.pop %v616
    %v618 = vmul.f32 %v572, 1.442695
    %v619 = vpow.pop %v618
    %v620 = vmul.f32 %v573, 1.442695
    %v621 = vpow.pop %v620
    %v622 = vsub.f32 %v575, 1.0
    %v623 = vsub.f32 %v577, 1.0
    %v624 = vsub.f32 %v579, 1.0
    %v625 = vsub.f32 %v581, 1.0
    %v626 = vsub.f32 %v583, 1.0
    %v627 = vsub.f32 %v585, 1.0
    %v628 = vsub.f32 %v587, 1.0
    %v629 = vsub.f32 %v589, 1.0
    %v630 = vsub.f32 %v591, 1.0
    %v631 = vsub.f32 %v593, 1.0
    %v632 = vsub.f32 %v595, 1.0
    %v633 = vsub.f32 %v597, 1.0
    %v634 = vsub.f32 %v599, 1.0
    %v635 = vsub.f32 %v601, 1.0
    %v636 = vsub.f32 %v603, 1.0
    %v637 = vsub.f32 %v605, 1.0
    %v638 = vsub.f32 %v607, 1.0
    %v639 = vsub.f32 %v609, 1.0
    %v640 = vsub.f32 %v611, 1.0
    %v641 = vsub.f32 %v613, 1.0
    %v642 = vsub.f32 %v615, 1.0
    %v643 = vsub.f32 %v617, 1.0
    %v644 = vsub.f32 %v619, 1.0
    %v645 = vsub.f32 %v621, 1.0
    %v646 = vsel %vm526, %v408, %v622
    %v647 = vsel %vm527, %v413, %v623
    %v648 = vsel %vm528, %v418, %v624
    %v649 = vsel %vm529, %v423, %v625
    %v650 = vsel %vm530, %v428, %v626
    %v651 = vsel %vm531, %v433, %v627
    %v652 = vsel %vm532, %v438, %v628
    %v653 = vsel %vm533, %v443, %v629
    %v654 = vsel %vm534, %v448, %v630
    %v655 = vsel %vm535, %v453, %v631
    %v656 = vsel %vm536, %v458, %v632
    %v657 = vsel %vm537, %v463, %v633
    %v658 = vsel %vm538, %v468, %v634
    %v659 = vsel %vm539, %v473, %v635
    %v660 = vsel %vm540, %v478, %v636
    %v661 = vsel %vm541, %v483, %v637
    %v662 = vsel %vm542, %v488, %v638
    %v663 = vsel %vm543, %v493, %v639
    %v664 = vsel %vm544, %v498, %v640
    %v665 = vsel %vm545, %v503, %v641
    %v666 = vsel %vm546, %v508, %v642
    %v667 = vsel %vm547, %v513, %v643
    %v668 = vsel %vm548, %v518, %v644
    %v669 = vsel %vm549, %v523, %v645
    %vm670 = vcmask 64512
    %v672 = vsel %vm670, %v652, 0
    %v675 = vsel %vm670, %v653, 0
    %v678 = vsel %vm670, %v654, 0
    %v681 = vsel %vm670, %v655, 0
    %v684 = vsel %vm670, %v656, 0
    %v687 = vsel %vm670, %v657, 0
    %689 = vmatprep.subr.mxu0 0.0
    %690 = vmatpush1.msra.mxu0 %v262
    %691 = vmatprep.subr.mxu0 0.0
    %692 = vmatpush1.msra.mxu0 0.0
    %693 = vmatprep.subr.mxu0 0.0
    %694 = vmatpush1.msra.mxu0 0.0
    %695 = vmatprep.subr.mxu0 0.0
    %696 = vmatpush1.msra.mxu0 0.0
    %697 = vmatprep.subr.mxu0 0.0
    %698 = vmatpush1.msra.mxu0 0.0
    %699 = vmatprep.subr.mxu0 0.0
    %700 = vmatpush1.msra.mxu0 0.0
    %701 = vmatprep.subr.mxu0 0.0
    %702 = vmatpush1.msra.mxu0 0.0
    %703 = vmatprep.subr.mxu0 0.0
    %704 = vmatpush1.msra.mxu0 0.0
    %705 = vmatprep.subr.mxu0 0.0
    %706 = vmatpush1.msra.mxu0 0.0
    %707 = vmatprep.subr.mxu0 0.0
    %708 = vmatpush1.msra.mxu0 0.0
    %709 = vmatprep.subr.mxu0 0.0
    %710 = vmatpush1.msra.mxu0 0.0
    %711 = vmatprep.subr.mxu0 0.0
    %712 = vmatpush1.msra.mxu0 0.0
    %713 = vmatprep.subr.mxu0 0.0
    %714 = vmatpush1.msra.mxu0 0.0
    %715 = vmatprep.subr.mxu0 0.0
    %716 = vmatpush1.msra.mxu0 0.0
    %717 = vmatprep.subr.mxu0 0.0
    %718 = vmatpush1.msra.mxu0 0.0
    %719 = vmatprep.subr.mxu0 0.0
    %720 = vmatpush1.msra.mxu0 0.0
    %721 = vmatprep.subr.mxu0 0.0
    %722 = vmatpush1.msra.mxu0 0.0
    %723 = vmatprep.subr.mxu0 0.0
    %724 = vmatpush1.msra.mxu0 0.0
    %725 = vmatprep.subr.mxu0 0.0
    %726 = vmatpush1.msra.mxu0 0.0
    %727 = vmatprep.subr.mxu0 0.0
    %728 = vmatpush1.msra.mxu0 0.0
    %729 = vmatprep.subr.mxu0 0.0
    %730 = vmatpush1.msra.mxu0 0.0
    %731 = vmatprep.subr.mxu0 0.0
    %732 = vmatpush1.msra.mxu0 0.0
    %733 = vmatprep.subr.mxu0 0.0
    %734 = vmatpush1.msra.mxu0 0.0
    %735 = vmatprep.subr.mxu0 0.0
    %736 = vmatpush1.msra.mxu0 0.0
    %737 = vmatprep.subr.mxu0 0.0
    %738 = vmatpush1.msra.mxu0 0.0
    %739 = vmatprep.subr.mxu0 0.0
    %740 = vmatpush1.msra.mxu0 0.0
    %741 = vmatprep.subr.mxu0 0.0
    %742 = vmatpush1.msra.mxu0 0.0
    %743 = vmatprep.subr.mxu0 0.0
    %744 = vmatpush1.msra.mxu0 0.0
    %745 = vmatprep.subr.mxu0 0.0
    %746 = vmatpush1.msra.mxu0 0.0
    %747 = vmatprep.subr.mxu0 0.0
    %748 = vmatpush1.msra.mxu0 0.0
    %749 = vmatprep.subr.mxu0 0.0
    %750 = vmatpush1.msra.mxu0 0.0
    %751 = vmatprep.subr.mxu0 0.0
    %752 = vmatpush1.msra.mxu0 0.0
    %753 = vmatprep.mubr.f32.mxu0 0.0
    %754 = vmatmul.mubr.f32.gmra.mrb[0].mxu0 %v672
    %v755 = vpop.f32.mrb[0].mxu0
    %v756 = vadd.f32 0.0, %v755
    %v757 = vpop.f32.mrb[0].mxu0
    %758 = vmatprep.mubr.f32.mxu0 0.0
    %759 = vmatmul.mubr.f32.gmra.mrb[0].mxu0 %v675
    %v760 = vpop.f32.mrb[0].mxu0
    %v761 = vadd.f32 0.0, %v760
    %v762 = vpop.f32.mrb[0].mxu0
    %763 = vmatprep.mubr.f32.mxu0 0.0
    %764 = vmatmul.mubr.f32.gmra.mrb[0].mxu0 %v678
    %v765 = vpop.f32.mrb[0].mxu0
    %v766 = vadd.f32 0.0, %v765
    %v767 = vpop.f32.mrb[0].mxu0
    %768 = vmatprep.mubr.f32.mxu0 0.0
    %769 = vmatmul.mubr.f32.gmra.mrb[0].mxu0 %v681
    %v770 = vpop.f32.mrb[0].mxu0
    %v771 = vadd.f32 0.0, %v770
    %v772 = vpop.f32.mrb[0].mxu0
    %773 = vmatprep.mubr.f32.mxu0 0.0
    %774 = vmatmul.mubr.f32.gmra.mrb[0].mxu0 %v684
    %v775 = vpop.f32.mrb[0].mxu0
    %v776 = vadd.f32 0.0, %v775
    %v777 = vpop.f32.mrb[0].mxu0
    %778 = vmatprep.mubr.f32.mxu0 0.0
    %779 = vmatmul.mubr.f32.gmra.mrb[0].mxu0 %v687
    %v780 = vpop.f32.mrb[0].mxu0
    %v781 = vadd.f32 0.0, %v780
    %v782 = vpop.f32.mrb[0].mxu0
    %783 = vdwg.mxu0
    %v785 = vsel %vm670, %v646, 0
    %v788 = vsel %vm670, %v647, 0
    %v791 = vsel %vm670, %v648, 0
    %v794 = vsel %vm670, %v649, 0
    %v797 = vsel %vm670, %v650, 0
    %v800 = vsel %vm670, %v651, 0
    %802 = vmatprep.subr.mxu0 0.0
    %803 = vmatpush1.msra.mxu0 %v261
    %804 = vmatprep.subr.mxu0 0.0
    %805 = vmatpush1.msra.mxu0 0.0
    %806 = vmatprep.subr.mxu0 0.0
    %807 = vmatpush1.msra.mxu0 0.0
    %808 = vmatprep.subr.mxu0 0.0
    %809 = vmatpush1.msra.mxu0 0.0
    %810 = vmatprep.subr.mxu0 0.0
    %811 = vmatpush1.msra.mxu0 0.0
    %812 = vmatprep.subr.mxu0 0.0
    %813 = vmatpush1.msra.mxu0 0.0
    %814 = vmatprep.subr.mxu0 0.0
    %815 = vmatpush1.msra.mxu0 0.0
    %816 = vmatprep.subr.mxu0 0.0
    %817 = vmatpush1.msra.mxu0 0.0
    %818 = vmatprep.subr.mxu0 0.0
    %819 = vmatpush1.msra.mxu0 0.0
    %820 = vmatprep.subr.mxu0 0.0
    %821 = vmatpush1.msra.mxu0 0.0
    %822 = vmatprep.subr.mxu0 0.0
    %823 = vmatpush1.msra.mxu0 0.0
    %824 = vmatprep.subr.mxu0 0.0
    %825 = vmatpush1.msra.mxu0 0.0
    %826 = vmatprep.subr.mxu0 0.0
    %827 = vmatpush1.msra.mxu0 0.0
    %828 = vmatprep.subr.mxu0 0.0
    %829 = vmatpush1.msra.mxu0 0.0
    %830 = vmatprep.subr.mxu0 0.0
    %831 = vmatpush1.msra.mxu0 0.0
    %832 = vmatprep.subr.mxu0 0.0
    %833 = vmatpush1.msra.mxu0 0.0
    %834 = vmatprep.subr.mxu0 0.0
    %835 = vmatpush1.msra.mxu0 0.0
    %836 = vmatprep.subr.mxu0 0.0
    %837 = vmatpush1.msra.mxu0 0.0
    %838 = vmatprep.subr.mxu0 0.0
    %839 = vmatpush1.msra.mxu0 0.0
    %840 = vmatprep.subr.mxu0 0.0
    %841 = vmatpush1.msra.mxu0 0.0
    %842 = vmatprep.subr.mxu0 0.0
    %843 = vmatpush1.msra.mxu0 0.0
    %844 = vmatprep.subr.mxu0 0.0
    %845 = vmatpush1.msra.mxu0 0.0
    %846 = vmatprep.subr.mxu0 0.0
    %847 = vmatpush1.msra.mxu0 0.0
    %848 = vmatprep.subr.mxu0 0.0
    %849 = vmatpush1.msra.mxu0 0.0
    %850 = vmatprep.subr.mxu0 0.0
    %851 = vmatpush1.msra.mxu0 0.0
    %852 = vmatprep.subr.mxu0 0.0
    %853 = vmatpush1.msra.mxu0 0.0
    %854 = vmatprep.subr.mxu0 0.0
    %855 = vmatpush1.msra.mxu0 0.0
    %856 = vmatprep.subr.mxu0 0.0
    %857 = vmatpush1.msra.mxu0 0.0
    %858 = vmatprep.subr.mxu0 0.0
    %859 = vmatpush1.msra.mxu0 0.0
    %860 = vmatprep.subr.mxu0 0.0
    %861 = vmatpush1.msra.mxu0 0.0
    %862 = vmatprep.subr.mxu0 0.0
    %863 = vmatpush1.msra.mxu0 0.0
    %864 = vmatprep.subr.mxu0 0.0
    %865 = vmatpush1.msra.mxu0 0.0
    %866 = vmatprep.mubr.f32.mxu0 0.0
    %867 = vmatmul.mubr.f32.gmra.mrb[0].mxu0 %v785
    %v868 = vpop.f32.mrb[0].mxu0
    %v869 = vadd.f32 %v756, %v868
    %v870 = vpop.f32.mrb[0].mxu0
    %871 = vmatprep.mubr.f32.mxu0 0.0
    %872 = vmatmul.mubr.f32.gmra.mrb[0].mxu0 %v788
    %v873 = vpop.f32.mrb[0].mxu0
    %v874 = vadd.f32 %v761, %v873
    %v875 = vpop.f32.mrb[0].mxu0
    %876 = vmatprep.mubr.f32.mxu0 0.0
    %877 = vmatmul.mubr.f32.gmra.mrb[0].mxu0 %v791
    %v878 = vpop.f32.mrb[0].mxu0
    %v879 = vadd.f32 %v766, %v878
    %v880 = vpop.f32.mrb[0].mxu0
    %881 = vmatprep.mubr.f32.mxu0 0.0
    %882 = vmatmul.mubr.f32.gmra.mrb[0].mxu0 %v794
    %v883 = vpop.f32.mrb[0].mxu0
    %v884 = vadd.f32 %v771, %v883
    %v885 = vpop.f32.mrb[0].mxu0
    %886 = vmatprep.mubr.f32.mxu0 0.0
    %887 = vmatmul.mubr.f32.gmra.mrb[0].mxu0 %v797
    %v888 = vpop.f32.mrb[0].mxu0
    %v889 = vadd.f32 %v776, %v888
    %v890 = vpop.f32.mrb[0].mxu0
    %891 = vmatprep.mubr.f32.mxu0 0.0
    %892 = vmatmul.mubr.f32.gmra.mrb[0].mxu0 %v800
    %v893 = vpop.f32.mrb[0].mxu0
    %v894 = vadd.f32 %v781, %v893
    %v895 = vpop.f32.mrb[0].mxu0
    %896 = vdwg.mxu0
    %v898 = vsel %vm670, %v658, 0
    %v901 = vsel %vm670, %v659, 0
    %v904 = vsel %vm670, %v660, 0
    %v907 = vsel %vm670, %v661, 0
    %v910 = vsel %vm670, %v662, 0
    %v913 = vsel %vm670, %v663, 0
    %915 = vmatprep.subr.mxu0 0.0
    %916 = vmatpush1.msra.mxu0 %v263
    %917 = vmatprep.subr.mxu0 0.0
    %918 = vmatpush1.msra.mxu0 0.0
    %919 = vmatprep.subr.mxu0 0.0
    %920 = vmatpush1.msra.mxu0 0.0
    %921 = vmatprep.subr.mxu0 0.0
    %922 = vmatpush1.msra.mxu0 0.0
    %923 = vmatprep.subr.mxu0 0.0
    %924 = vmatpush1.msra.mxu0 0.0
    %925 = vmatprep.subr.mxu0 0.0
    %926 = vmatpush1.msra.mxu0 0.0
    %927 = vmatprep.subr.mxu0 0.0
    %928 = vmatpush1.msra.mxu0 0.0
    %929 = vmatprep.subr.mxu0 0.0
    %930 = vmatpush1.msra.mxu0 0.0
    %931 = vmatprep.subr.mxu0 0.0
    %932 = vmatpush1.msra.mxu0 0.0
    %933 = vmatprep.subr.mxu0 0.0
    %934 = vmatpush1.msra.mxu0 0.0
    %935 = vmatprep.subr.mxu0 0.0
    %936 = vmatpush1.msra.mxu0 0.0
    %937 = vmatprep.subr.mxu0 0.0
    %938 = vmatpush1.msra.mxu0 0.0
    %939 = vmatprep.subr.mxu0 0.0
    %940 = vmatpush1.msra.mxu0 0.0
    %941 = vmatprep.subr.mxu0 0.0
    %942 = vmatpush1.msra.mxu0 0.0
    %943 = vmatprep.subr.mxu0 0.0
    %944 = vmatpush1.msra.mxu0 0.0
    %945 = vmatprep.subr.mxu0 0.0
    %946 = vmatpush1.msra.mxu0 0.0
    %947 = vmatprep.subr.mxu0 0.0
    %948 = vmatpush1.msra.mxu0 0.0
    %949 = vmatprep.subr.mxu0 0.0
    %950 = vmatpush1.msra.mxu0 0.0
    %951 = vmatprep.subr.mxu0 0.0
    %952 = vmatpush1.msra.mxu0 0.0
    %953 = vmatprep.subr.mxu0 0.0
    %954 = vmatpush1.msra.mxu0 0.0
    %955 = vmatprep.subr.mxu0 0.0
    %956 = vmatpush1.msra.mxu0 0.0
    %957 = vmatprep.subr.mxu0 0.0
    %958 = vmatpush1.msra.mxu0 0.0
    %959 = vmatprep.subr.mxu0 0.0
    %960 = vmatpush1.msra.mxu0 0.0
    %961 = vmatprep.subr.mxu0 0.0
    %962 = vmatpush1.msra.mxu0 0.0
    %963 = vmatprep.subr.mxu0 0.0
    %964 = vmatpush1.msra.mxu0 0.0
    %965 = vmatprep.subr.mxu0 0.0
    %966 = vmatpush1.msra.mxu0 0.0
    %967 = vmatprep.subr.mxu0 0.0
    %968 = vmatpush1.msra.mxu0 0.0
    %969 = vmatprep.subr.mxu0 0.0
    %970 = vmatpush1.msra.mxu0 0.0
    %971 = vmatprep.subr.mxu0 0.0
    %972 = vmatpush1.msra.mxu0 0.0
    %973 = vmatprep.subr.mxu0 0.0
    %974 = vmatpush1.msra.mxu0 0.0
    %975 = vmatprep.subr.mxu0 0.0
    %976 = vmatpush1.msra.mxu0 0.0
    %977 = vmatprep.subr.mxu0 0.0
    %978 = vmatpush1.msra.mxu0 0.0
    %979 = vmatprep.mubr.f32.mxu0 0.0
    %980 = vmatmul.mubr.f32.gmra.mrb[0].mxu0 %v898
    %v981 = vpop.f32.mrb[0].mxu0
    %v982 = vadd.f32 0.0, %v981
    %v983 = vpop.f32.mrb[0].mxu0
    %984 = vmatprep.mubr.f32.mxu0 0.0
    %985 = vmatmul.mubr.f32.gmra.mrb[0].mxu0 %v901
    %v986 = vpop.f32.mrb[0].mxu0
    %v987 = vadd.f32 0.0, %v986
    %v988 = vpop.f32.mrb[0].mxu0
    %989 = vmatprep.mubr.f32.mxu0 0.0
    %990 = vmatmul.mubr.f32.gmra.mrb[0].mxu0 %v904
    %v991 = vpop.f32.mrb[0].mxu0
    %v992 = vadd.f32 0.0, %v991
    %v993 = vpop.f32.mrb[0].mxu0
    %994 = vmatprep.mubr.f32.mxu0 0.0
    %995 = vmatmul.mubr.f32.gmra.mrb[0].mxu0 %v907
    %v996 = vpop.f32.mrb[0].mxu0
    %v997 = vadd.f32 0.0, %v996
    %v998 = vpop.f32.mrb[0].mxu0
    %999 = vmatprep.mubr.f32.mxu0 0.0
    %1000 = vmatmul.mubr.f32.gmra.mrb[0].mxu0 %v910
    %v1001 = vpop.f32.mrb[0].mxu0
    %v1002 = vadd.f32 0.0, %v1001
    %v1003 = vpop.f32.mrb[0].mxu0
    %1004 = vmatprep.mubr.f32.mxu0 0.0
    %1005 = vmatmul.mubr.f32.gmra.mrb[0].mxu0 %v913
    %v1006 = vpop.f32.mrb[0].mxu0
    %v1007 = vadd.f32 0.0, %v1006
    %v1008 = vpop.f32.mrb[0].mxu0
    %1009 = vdwg.mxu0
    %v1010 = vadd.f32 %v869, %v982
    %v1011 = vadd.f32 %v874, %v987
    %v1012 = vadd.f32 %v879, %v992
    %v1013 = vadd.f32 %v884, %v997
    %v1014 = vadd.f32 %v889, %v1002
    %v1015 = vadd.f32 %v894, %v1007
    %v1017 = vsel %vm670, %v664, 0
    %v1020 = vsel %vm670, %v665, 0
    %v1023 = vsel %vm670, %v666, 0
    %v1026 = vsel %vm670, %v667, 0
    %v1029 = vsel %vm670, %v668, 0
    %v1032 = vsel %vm670, %v669, 0
    %1034 = vmatprep.subr.mxu0 0.0
    %1035 = vmatpush1.msra.mxu0 %v264
    %1036 = vmatprep.subr.mxu0 0.0
    %1037 = vmatpush1.msra.mxu0 0.0
    %1038 = vmatprep.subr.mxu0 0.0
    %1039 = vmatpush1.msra.mxu0 0.0
    %1040 = vmatprep.subr.mxu0 0.0
    %1041 = vmatpush1.msra.mxu0 0.0
    %1042 = vmatprep.subr.mxu0 0.0
    %1043 = vmatpush1.msra.mxu0 0.0
    %1044 = vmatprep.subr.mxu0 0.0
    %1045 = vmatpush1.msra.mxu0 0.0
    %1046 = vmatprep.subr.mxu0 0.0
    %1047 = vmatpush1.msra.mxu0 0.0
    %1048 = vmatprep.subr.mxu0 0.0
    %1049 = vmatpush1.msra.mxu0 0.0
    %1050 = vmatprep.subr.mxu0 0.0
    %1051 = vmatpush1.msra.mxu0 0.0
    %1052 = vmatprep.subr.mxu0 0.0
    %1053 = vmatpush1.msra.mxu0 0.0
    %1054 = vmatprep.subr.mxu0 0.0
    %1055 = vmatpush1.msra.mxu0 0.0
    %1056 = vmatprep.subr.mxu0 0.0
    %1057 = vmatpush1.msra.mxu0 0.0
    %1058 = vmatprep.subr.mxu0 0.0
    %1059 = vmatpush1.msra.mxu0 0.0
    %1060 = vmatprep.subr.mxu0 0.0
    %1061 = vmatpush1.msra.mxu0 0.0
    %1062 = vmatprep.subr.mxu0 0.0
    %1063 = vmatpush1.msra.mxu0 0.0
    %1064 = vmatprep.subr.mxu0 0.0
    %1065 = vmatpush1.msra.mxu0 0.0
    %1066 = vmatprep.subr.mxu0 0.0
    %1067 = vmatpush1.msra.mxu0 0.0
    %1068 = vmatprep.subr.mxu0 0.0
    %1069 = vmatpush1.msra.mxu0 0.0
    %1070 = vmatprep.subr.mxu0 0.0
    %1071 = vmatpush1.msra.mxu0 0.0
    %1072 = vmatprep.subr.mxu0 0.0
    %1073 = vmatpush1.msra.mxu0 0.0
    %1074 = vmatprep.subr.mxu0 0.0
    %1075 = vmatpush1.msra.mxu0 0.0
    %1076 = vmatprep.subr.mxu0 0.0
    %1077 = vmatpush1.msra.mxu0 0.0
    %1078 = vmatprep.subr.mxu0 0.0
    %1079 = vmatpush1.msra.mxu0 0.0
    %1080 = vmatprep.subr.mxu0 0.0
    %1081 = vmatpush1.msra.mxu0 0.0
    %1082 = vmatprep.subr.mxu0 0.0
    %1083 = vmatpush1.msra.mxu0 0.0
    %1084 = vmatprep.subr.mxu0 0.0
    %1085 = vmatpush1.msra.mxu0 0.0
    %1086 = vmatprep.subr.mxu0 0.0
    %1087 = vmatpush1.msra.mxu0 0.0
    %1088 = vmatprep.subr.mxu0 0.0
    %1089 = vmatpush1.msra.mxu0 0.0
    %1090 = vmatprep.subr.mxu0 0.0
    %1091 = vmatpush1.msra.mxu0 0.0
    %1092 = vmatprep.subr.mxu0 0.0
    %1093 = vmatpush1.msra.mxu0 0.0
    %1094 = vmatprep.subr.mxu0 0.0
    %1095 = vmatpush1.msra.mxu0 0.0
    %1096 = vmatprep.subr.mxu0 0.0
    %1097 = vmatpush1.msra.mxu0 0.0
    %1098 = vmatprep.mubr.f32.mxu0 0.0
    %1099 = vmatmul.mubr.f32.gmra.mrb[0].mxu0 %v1017
    %v1100 = vpop.f32.mrb[0].mxu0
    %v1101 = vadd.f32 0.0, %v1100
    %v1102 = vpop.f32.mrb[0].mxu0
    %1103 = vmatprep.mubr.f32.mxu0 0.0
    %1104 = vmatmul.mubr.f32.gmra.mrb[0].mxu0 %v1020
    %v1105 = vpop.f32.mrb[0].mxu0
    %v1106 = vadd.f32 0.0, %v1105
    %v1107 = vpop.f32.mrb[0].mxu0
    %1108 = vmatprep.mubr.f32.mxu0 0.0
    %1109 = vmatmul.mubr.f32.gmra.mrb[0].mxu0 %v1023
    %v1110 = vpop.f32.mrb[0].mxu0
    %v1111 = vadd.f32 0.0, %v1110
    %v1112 = vpop.f32.mrb[0].mxu0
    %1113 = vmatprep.mubr.f32.mxu0 0.0
    %1114 = vmatmul.mubr.f32.gmra.mrb[0].mxu0 %v1026
    %v1115 = vpop.f32.mrb[0].mxu0
    %v1116 = vadd.f32 0.0, %v1115
    %v1117 = vpop.f32.mrb[0].mxu0
    %1118 = vmatprep.mubr.f32.mxu0 0.0
    %1119 = vmatmul.mubr.f32.gmra.mrb[0].mxu0 %v1029
    %v1120 = vpop.f32.mrb[0].mxu0
    %v1121 = vadd.f32 0.0, %v1120
    %v1122 = vpop.f32.mrb[0].mxu0
    %1123 = vmatprep.mubr.f32.mxu0 0.0
    %1124 = vmatmul.mubr.f32.gmra.mrb[0].mxu0 %v1032
    %v1125 = vpop.f32.mrb[0].mxu0
    %v1126 = vadd.f32 0.0, %v1125
    %v1127 = vpop.f32.mrb[0].mxu0
    %1128 = vdwg.mxu0
    %v1129 = vadd.f32 %v1010, %v1101
    %v1130 = vadd.f32 %v1011, %v1106
    %v1131 = vadd.f32 %v1012, %v1111
    %v1132 = vadd.f32 %v1013, %v1116
    %v1133 = vadd.f32 %v1014, %v1121
    %v1134 = vadd.f32 %v1015, %v1126
    %v1136 = vlaneseq
    %v1137 = vshrl.u32 %v1136, 7
    %v1138 = vsub.s32 0, %v1137
    %v1139 = vrot.slane %v265, %v1138
    %v1141 = vadd.f32 %v1129, %v1139
    %v1142 = vadd.f32 %v1130, %v1139
    %v1143 = vadd.f32 %v1131, %v1139
    %v1144 = vadd.f32 %v1132, %v1139
    %v1145 = vadd.f32 %v1133, %v1139
    %v1146 = vadd.f32 %v1134, %v1139
    %vm1147 = vcmp.gt.f32.partialorder %v1141, 0.0
    %vm1148 = vcmp.gt.f32.partialorder %v1142, 0.0
    %vm1149 = vcmp.gt.f32.partialorder %v1143, 0.0
    %vm1150 = vcmp.gt.f32.partialorder %v1144, 0.0
    %vm1151 = vcmp.gt.f32.partialorder %v1145, 0.0
    %vm1152 = vcmp.gt.f32.partialorder %v1146, 0.0
    %v1153 = vmin.f32 %v1141, 0.0
    %v1154 = vmin.f32 %v1142, 0.0
    %v1155 = vmin.f32 %v1143, 0.0
    %v1156 = vmin.f32 %v1144, 0.0
    %v1157 = vmin.f32 %v1145, 0.0
    %v1158 = vmin.f32 %v1146, 0.0
    %v1159 = vmul.f32 %v1153, 1.442695
    %v1160 = vpow.pop %v1159
    %v1161 = vmul.f32 %v1154, 1.442695
    %v1162 = vpow.pop %v1161
    %v1163 = vmul.f32 %v1155, 1.442695
    %v1164 = vpow.pop %v1163
    %v1165 = vmul.f32 %v1156, 1.442695
    %v1166 = vpow.pop %v1165
    %v1167 = vmul.f32 %v1157, 1.442695
    %v1168 = vpow.pop %v1167
    %v1169 = vmul.f32 %v1158, 1.442695
    %v1170 = vpow.pop %v1169
    %v1171 = vsub.f32 %v1160, 1.0
    %v1172 = vsub.f32 %v1162, 1.0
    %v1173 = vsub.f32 %v1164, 1.0
    %v1174 = vsub.f32 %v1166, 1.0
    %v1175 = vsub.f32 %v1168, 1.0
    %v1176 = vsub.f32 %v1170, 1.0
    %v1177 = vsel %vm1147, %v1141, %v1171
    %v1178 = vsel %vm1148, %v1142, %v1172
    %v1179 = vsel %vm1149, %v1143, %v1173
    %v1180 = vsel %vm1150, %v1144, %v1174
    %v1181 = vsel %vm1151, %v1145, %v1175
    %v1182 = vsel %vm1152, %v1146, %v1176
    %v1183 = vmul.f32 %v1177, %v219
    %v1184 = vmul.f32 %v1178, %v220
    %v1185 = vmul.f32 %v1179, %v221
    %v1186 = vmul.f32 %v1180, %v222
    %v1187 = vmul.f32 %v1181, %v223
    %v1188 = vmul.f32 %v1182, %v224
    %v1190 = vlaneseq
    %v1191 = vshrl.u32 %v1190, 7
    %v1192 = vsub.s32 0, %v1191
    %v1193 = vrot.slane %v267, %v1192
    %v1196 = vsel %vm670, %v231, 0
    %v1199 = vsel %vm670, %v232, 0
    %v1202 = vsel %vm670, %v233, 0
    %v1205 = vsel %vm670, %v234, 0
    %v1208 = vsel %vm670, %v235, 0
    %v1211 = vsel %vm670, %v236, 0
    %1213 = vmatprep.subr.mxu0 0.0
    %1214 = vmatpush1.msra.mxu0 %v266
    %1215 = vmatprep.subr.mxu0 0.0
    %1216 = vmatpush1.msra.mxu0 0.0
    %1217 = vmatprep.subr.mxu0 0.0
    %1218 = vmatpush1.msra.mxu0 0.0
    %1219 = vmatprep.subr.mxu0 0.0
    %1220 = vmatpush1.msra.mxu0 0.0
    %1221 = vmatprep.subr.mxu0 0.0
    %1222 = vmatpush1.msra.mxu0 0.0
    %1223 = vmatprep.subr.mxu0 0.0
    %1224 = vmatpush1.msra.mxu0 0.0
    %1225 = vmatprep.subr.mxu0 0.0
    %1226 = vmatpush1.msra.mxu0 0.0
    %1227 = vmatprep.subr.mxu0 0.0
    %1228 = vmatpush1.msra.mxu0 0.0
    %1229 = vmatprep.subr.mxu0 0.0
    %1230 = vmatpush1.msra.mxu0 0.0
    %1231 = vmatprep.subr.mxu0 0.0
    %1232 = vmatpush1.msra.mxu0 0.0
    %1233 = vmatprep.subr.mxu0 0.0
    %1234 = vmatpush1.msra.mxu0 0.0
    %1235 = vmatprep.subr.mxu0 0.0
    %1236 = vmatpush1.msra.mxu0 0.0
    %1237 = vmatprep.subr.mxu0 0.0
    %1238 = vmatpush1.msra.mxu0 0.0
    %1239 = vmatprep.subr.mxu0 0.0
    %1240 = vmatpush1.msra.mxu0 0.0
    %1241 = vmatprep.subr.mxu0 0.0
    %1242 = vmatpush1.msra.mxu0 0.0
    %1243 = vmatprep.subr.mxu0 0.0
    %1244 = vmatpush1.msra.mxu0 0.0
    %1245 = vmatprep.subr.mxu0 0.0
    %1246 = vmatpush1.msra.mxu0 0.0
    %1247 = vmatprep.subr.mxu0 0.0
    %1248 = vmatpush1.msra.mxu0 0.0
    %1249 = vmatprep.subr.mxu0 0.0
    %1250 = vmatpush1.msra.mxu0 0.0
    %1251 = vmatprep.subr.mxu0 0.0
    %1252 = vmatpush1.msra.mxu0 0.0
    %1253 = vmatprep.subr.mxu0 0.0
    %1254 = vmatpush1.msra.mxu0 0.0
    %1255 = vmatprep.subr.mxu0 0.0
    %1256 = vmatpush1.msra.mxu0 0.0
    %1257 = vmatprep.subr.mxu0 0.0
    %1258 = vmatpush1.msra.mxu0 0.0
    %1259 = vmatprep.subr.mxu0 0.0
    %1260 = vmatpush1.msra.mxu0 0.0
    %1261 = vmatprep.subr.mxu0 0.0
    %1262 = vmatpush1.msra.mxu0 0.0
    %1263 = vmatprep.subr.mxu0 0.0
    %1264 = vmatpush1.msra.mxu0 0.0
    %1265 = vmatprep.subr.mxu0 0.0
    %1266 = vmatpush1.msra.mxu0 0.0
    %1267 = vmatprep.subr.mxu0 0.0
    %1268 = vmatpush1.msra.mxu0 0.0
    %1269 = vmatprep.subr.mxu0 0.0
    %1270 = vmatpush1.msra.mxu0 0.0
    %1271 = vmatprep.subr.mxu0 0.0
    %1272 = vmatpush1.msra.mxu0 0.0
    %1273 = vmatprep.subr.mxu0 0.0
    %1274 = vmatpush1.msra.mxu0 0.0
    %1275 = vmatprep.subr.mxu0 0.0
    %1276 = vmatpush1.msra.mxu0 0.0
    %1277 = vmatprep.mubr.f32.mxu0 0.0
    %1278 = vmatmul.mubr.f32.gmra.mrb[0].mxu0 %v1196
    %v1279 = vpop.f32.mrb[0].mxu0
    %v1280 = vadd.f32 %v1193, %v1279
    %v1281 = vpop.f32.mrb[0].mxu0
    %1282 = vmatprep.mubr.f32.mxu0 0.0
    %1283 = vmatmul.mubr.f32.gmra.mrb[0].mxu0 %v1199
    %v1284 = vpop.f32.mrb[0].mxu0
    %v1285 = vadd.f32 %v1193, %v1284
    %v1286 = vpop.f32.mrb[0].mxu0
    %1287 = vmatprep.mubr.f32.mxu0 0.0
    %1288 = vmatmul.mubr.f32.gmra.mrb[0].mxu0 %v1202
    %v1289 = vpop.f32.mrb[0].mxu0
    %v1290 = vadd.f32 %v1193, %v1289
    %v1291 = vpop.f32.mrb[0].mxu0
    %1292 = vmatprep.mubr.f32.mxu0 0.0
    %1293 = vmatmul.mubr.f32.gmra.mrb[0].mxu0 %v1205
    %v1294 = vpop.f32.mrb[0].mxu0
    %v1295 = vadd.f32 %v1193, %v1294
    %v1296 = vpop.f32.mrb[0].mxu0
    %1297 = vmatprep.mubr.f32.mxu0 0.0
    %1298 = vmatmul.mubr.f32.gmra.mrb[0].mxu0 %v1208
    %v1299 = vpop.f32.mrb[0].mxu0
    %v1300 = vadd.f32 %v1193, %v1299
    %v1301 = vpop.f32.mrb[0].mxu0
    %1302 = vmatprep.mubr.f32.mxu0 0.0
    %1303 = vmatmul.mubr.f32.gmra.mrb[0].mxu0 %v1211
    %v1304 = vpop.f32.mrb[0].mxu0
    %v1305 = vadd.f32 %v1193, %v1304
    %v1306 = vpop.f32.mrb[0].mxu0
    %1307 = vdwg.mxu0
    %v1308 = vadd.f32 %v1183, %v1280
    %v1309 = vadd.f32 %v1184, %v1285
    %v1310 = vadd.f32 %v1185, %v1290
    %v1311 = vadd.f32 %v1186, %v1295
    %v1312 = vadd.f32 %v1187, %v1300
    %v1313 = vadd.f32 %v1188, %v1305
    %v1314 = vld [vmem:[#allocation9] sm:$0xff]
    %v1316 = vsel %vm268, %v1314, 0
    %1318 = vmatprep.subr.mxu0 0.0
    %1319 = vmatpush1.msra.mxu0 %v1308
    %1320 = vmatprep.subr.mxu0 0.0
    %1321 = vmatpush1.msra.mxu0 %v1309
    %1322 = vmatprep.subr.mxu0 0.0
    %1323 = vmatpush1.msra.mxu0 %v1310
    %1324 = vmatprep.subr.mxu0 0.0
    %1325 = vmatpush1.msra.mxu0 %v1311
    %1326 = vmatprep.subr.mxu0 0.0
    %1327 = vmatpush1.msra.mxu0 %v1312
    %1328 = vmatprep.subr.mxu0 0.0
    %1329 = vmatpush1.msra.mxu0 %v1313
    %1330 = vmatprep.subr.mxu0 0.0
    %1331 = vmatpush1.msra.mxu0 0.0
    %1332 = vmatprep.subr.mxu0 0.0
    %1333 = vmatpush1.msra.mxu0 0.0
    %1334 = vmatprep.subr.mxu0 0.0
    %1335 = vmatpush1.msra.mxu0 0.0
    %1336 = vmatprep.subr.mxu0 0.0
    %1337 = vmatpush1.msra.mxu0 0.0
    %1338 = vmatprep.subr.mxu0 0.0
    %1339 = vmatpush1.msra.mxu0 0.0
    %1340 = vmatprep.subr.mxu0 0.0
    %1341 = vmatpush1.msra.mxu0 0.0
    %1342 = vmatprep.subr.mxu0 0.0
    %1343 = vmatpush1.msra.mxu0 0.0
    %1344 = vmatprep.subr.mxu0 0.0
    %1345 = vmatpush1.msra.mxu0 0.0
    %1346 = vmatprep.subr.mxu0 0.0
    %1347 = vmatpush1.msra.mxu0 0.0
    %1348 = vmatprep.subr.mxu0 0.0
    %1349 = vmatpush1.msra.mxu0 0.0
    %1350 = vmatprep.subr.mxu0 0.0
    %1351 = vmatpush1.msra.mxu0 0.0
    %1352 = vmatprep.subr.mxu0 0.0
    %1353 = vmatpush1.msra.mxu0 0.0
    %1354 = vmatprep.subr.mxu0 0.0
    %1355 = vmatpush1.msra.mxu0 0.0
    %1356 = vmatprep.subr.mxu0 0.0
    %1357 = vmatpush1.msra.mxu0 0.0
    %1358 = vmatprep.subr.mxu0 0.0
    %1359 = vmatpush1.msra.mxu0 0.0
    %1360 = vmatprep.subr.mxu0 0.0
    %1361 = vmatpush1.msra.mxu0 0.0
    %1362 = vmatprep.subr.mxu0 0.0
    %1363 = vmatpush1.msra.mxu0 0.0
    %1364 = vmatprep.subr.mxu0 0.0
    %1365 = vmatpush1.msra.mxu0 0.0
    %1366 = vmatprep.subr.mxu0 0.0
    %1367 = vmatpush1.msra.mxu0 0.0
    %1368 = vmatprep.subr.mxu0 0.0
    %1369 = vmatpush1.msra.mxu0 0.0
    %1370 = vmatprep.subr.mxu0 0.0
    %1371 = vmatpush1.msra.mxu0 0.0
    %1372 = vmatprep.subr.mxu0 0.0
    %1373 = vmatpush1.msra.mxu0 0.0
    %1374 = vmatprep.subr.mxu0 0.0
    %1375 = vmatpush1.msra.mxu0 0.0
    %1376 = vmatprep.subr.mxu0 0.0
    %1377 = vmatpush1.msra.mxu0 0.0
    %1378 = vmatprep.subr.mxu0 0.0
    %1379 = vmatpush1.msra.mxu0 0.0
    %1380 = vmatprep.subr.mxu0 0.0
    %1381 = vmatpush1.msra.mxu0 0.0
    %1382 = vmatprep.mubr.f32.mxu0 0.0
    %1383 = vmatmul.mubr.f32.gmra.mrb[0].mxu0 %v1316
    %v1384 = vpop.f32.mrb[0].mxu0
    %v1385 = vadd.f32 0.0, %v1384
    %v1386 = vpop.f32.mrb[0].mxu0
    %1387 = vdwg.mxu0
    %v1388 = vld [vmem:[#allocation10] sm:$0xff]
    %v1389 = vld [vmem:[#allocation10 + $0x8] sm:$0xff]
    %v1390 = vld [vmem:[#allocation10 + $0x10] sm:$0xff]
    %v1391 = vld [vmem:[#allocation10 + $0x18] sm:$0xff]
    %v1392 = vld [vmem:[#allocation10 + $0x20] sm:$0xff]
    %v1393 = vld [vmem:[#allocation10 + $0x28] sm:$0xff]
    %v1394 = vld [vmem:[#allocation10 + $0x30] sm:$0xff]
    %v1395 = vld [vmem:[#allocation10 + $0x38] sm:$0xff]
    %v1396 = vld [vmem:[#allocation12] sm:$0x1]
    %v1398 = vsel %vm670, %v1385, 0
    %1400 = vmatprep.subr.mxu0 0.0
    %1401 = vmatpush1.msra.mxu0 %v1388
    %1402 = vmatprep.subr.mxu0 0.0
    %1403 = vmatpush1.msra.mxu0 0.0
    %1404 = vmatprep.subr.mxu0 0.0
    %1405 = vmatpush1.msra.mxu0 0.0
    %1406 = vmatprep.subr.mxu0 0.0
    %1407 = vmatpush1.msra.mxu0 0.0
    %1408 = vmatprep.subr.mxu0 0.0
    %1409 = vmatpush1.msra.mxu0 0.0
    %1410 = vmatprep.subr.mxu0 0.0
    %1411 = vmatpush1.msra.mxu0 0.0
    %1412 = vmatprep.subr.mxu0 0.0
    %1413 = vmatpush1.msra.mxu0 0.0
    %1414 = vmatprep.subr.mxu0 0.0
    %1415 = vmatpush1.msra.mxu0 0.0
    %1416 = vmatprep.subr.mxu0 0.0
    %1417 = vmatpush1.msra.mxu0 0.0
    %1418 = vmatprep.subr.mxu0 0.0
    %1419 = vmatpush1.msra.mxu0 0.0
    %1420 = vmatprep.subr.mxu0 0.0
    %1421 = vmatpush1.msra.mxu0 0.0
    %1422 = vmatprep.subr.mxu0 0.0
    %1423 = vmatpush1.msra.mxu0 0.0
    %1424 = vmatprep.subr.mxu0 0.0
    %1425 = vmatpush1.msra.mxu0 0.0
    %1426 = vmatprep.subr.mxu0 0.0
    %1427 = vmatpush1.msra.mxu0 0.0
    %1428 = vmatprep.subr.mxu0 0.0
    %1429 = vmatpush1.msra.mxu0 0.0
    %1430 = vmatprep.subr.mxu0 0.0
    %1431 = vmatpush1.msra.mxu0 0.0
    %1432 = vmatprep.subr.mxu0 0.0
    %1433 = vmatpush1.msra.mxu0 0.0
    %1434 = vmatprep.subr.mxu0 0.0
    %1435 = vmatpush1.msra.mxu0 0.0
    %1436 = vmatprep.subr.mxu0 0.0
    %1437 = vmatpush1.msra.mxu0 0.0
    %1438 = vmatprep.subr.mxu0 0.0
    %1439 = vmatpush1.msra.mxu0 0.0
    %1440 = vmatprep.subr.mxu0 0.0
    %1441 = vmatpush1.msra.mxu0 0.0
    %1442 = vmatprep.subr.mxu0 0.0
    %1443 = vmatpush1.msra.mxu0 0.0
    %1444 = vmatprep.subr.mxu0 0.0
    %1445 = vmatpush1.msra.mxu0 0.0
    %1446 = vmatprep.subr.mxu0 0.0
    %1447 = vmatpush1.msra.mxu0 0.0
    %1448 = vmatprep.subr.mxu0 0.0
    %1449 = vmatpush1.msra.mxu0 0.0
    %1450 = vmatprep.subr.mxu0 0.0
    %1451 = vmatpush1.msra.mxu0 0.0
    %1452 = vmatprep.subr.mxu0 0.0
    %1453 = vmatpush1.msra.mxu0 0.0
    %1454 = vmatprep.subr.mxu0 0.0
    %1455 = vmatpush1.msra.mxu0 0.0
    %1456 = vmatprep.subr.mxu0 0.0
    %1457 = vmatpush1.msra.mxu0 0.0
    %1458 = vmatprep.subr.mxu0 0.0
    %1459 = vmatpush1.msra.mxu0 0.0
    %1460 = vmatprep.subr.mxu0 0.0
    %1461 = vmatpush1.msra.mxu0 0.0
    %1462 = vmatprep.subr.mxu0 0.0
    %1463 = vmatpush1.msra.mxu0 0.0
    %1464 = vmatprep.mubr.f32.mxu0 0.0
    %1465 = vmatmul.mubr.f32.gmra.mrb[0].mxu0 %v1398
    %v1466 = vpop.f32.mrb[0].mxu0
    %v1467 = vadd.f32 0.0, %v1466
    %v1468 = vpop.f32.mrb[0].mxu0
    %1469 = vdwg.mxu0
    %v1470 = vadd.f32 %v1396, %v1467
    %v1471 = vrot.slane %v1385, 1
    %v1472 = vsel %vm670, %v1471, 0
    %1474 = vmatprep.subr.mxu0 0.0
    %1475 = vmatpush1.msra.mxu0 %v1389
    %1476 = vmatprep.subr.mxu0 0.0
    %1477 = vmatpush1.msra.mxu0 0.0
    %1478 = vmatprep.subr.mxu0 0.0
    %1479 = vmatpush1.msra.mxu0 0.0
    %1480 = vmatprep.subr.mxu0 0.0
    %1481 = vmatpush1.msra.mxu0 0.0
    %1482 = vmatprep.subr.mxu0 0.0
    %1483 = vmatpush1.msra.mxu0 0.0
    %1484 = vmatprep.subr.mxu0 0.0
    %1485 = vmatpush1.msra.mxu0 0.0
    %1486 = vmatprep.subr.mxu0 0.0
    %1487 = vmatpush1.msra.mxu0 0.0
    %1488 = vmatprep.subr.mxu0 0.0
    %1489 = vmatpush1.msra.mxu0 0.0
    %1490 = vmatprep.subr.mxu0 0.0
    %1491 = vmatpush1.msra.mxu0 0.0
    %1492 = vmatprep.subr.mxu0 0.0
    %1493 = vmatpush1.msra.mxu0 0.0
    %1494 = vmatprep.subr.mxu0 0.0
    %1495 = vmatpush1.msra.mxu0 0.0
    %1496 = vmatprep.subr.mxu0 0.0
    %1497 = vmatpush1.msra.mxu0 0.0
    %1498 = vmatprep.subr.mxu0 0.0
    %1499 = vmatpush1.msra.mxu0 0.0
    %1500 = vmatprep.subr.mxu0 0.0
    %1501 = vmatpush1.msra.mxu0 0.0
    %1502 = vmatprep.subr.mxu0 0.0
    %1503 = vmatpush1.msra.mxu0 0.0
    %1504 = vmatprep.subr.mxu0 0.0
    %1505 = vmatpush1.msra.mxu0 0.0
    %1506 = vmatprep.subr.mxu0 0.0
    %1507 = vmatpush1.msra.mxu0 0.0
    %1508 = vmatprep.subr.mxu0 0.0
    %1509 = vmatpush1.msra.mxu0 0.0
    %1510 = vmatprep.subr.mxu0 0.0
    %1511 = vmatpush1.msra.mxu0 0.0
    %1512 = vmatprep.subr.mxu0 0.0
    %1513 = vmatpush1.msra.mxu0 0.0
    %1514 = vmatprep.subr.mxu0 0.0
    %1515 = vmatpush1.msra.mxu0 0.0
    %1516 = vmatprep.subr.mxu0 0.0
    %1517 = vmatpush1.msra.mxu0 0.0
    %1518 = vmatprep.subr.mxu0 0.0
    %1519 = vmatpush1.msra.mxu0 0.0
    %1520 = vmatprep.subr.mxu0 0.0
    %1521 = vmatpush1.msra.mxu0 0.0
    %1522 = vmatprep.subr.mxu0 0.0
    %1523 = vmatpush1.msra.mxu0 0.0
    %1524 = vmatprep.subr.mxu0 0.0
    %1525 = vmatpush1.msra.mxu0 0.0
    %1526 = vmatprep.subr.mxu0 0.0
    %1527 = vmatpush1.msra.mxu0 0.0
    %1528 = vmatprep.subr.mxu0 0.0
    %1529 = vmatpush1.msra.mxu0 0.0
    %1530 = vmatprep.subr.mxu0 0.0
    %1531 = vmatpush1.msra.mxu0 0.0
    %1532 = vmatprep.subr.mxu0 0.0
    %1533 = vmatpush1.msra.mxu0 0.0
    %1534 = vmatprep.subr.mxu0 0.0
    %1535 = vmatpush1.msra.mxu0 0.0
    %1536 = vmatprep.subr.mxu0 0.0
    %1537 = vmatpush1.msra.mxu0 0.0
    %1538 = vmatprep.mubr.f32.mxu0 0.0
    %1539 = vmatmul.mubr.f32.gmra.mrb[0].mxu0 %v1472
    %v1540 = vpop.f32.mrb[0].mxu0
    %v1541 = vadd.f32 0.0, %v1540
    %v1542 = vpop.f32.mrb[0].mxu0
    %1543 = vdwg.mxu0
    %v1544 = vadd.f32 %v1470, %v1541
    %v1545 = vrot.slane %v1385, 2
    %v1546 = vsel %vm670, %v1545, 0
    %1548 = vmatprep.subr.mxu0 0.0
    %1549 = vmatpush1.msra.mxu0 %v1390
    %1550 = vmatprep.subr.mxu0 0.0
    %1551 = vmatpush1.msra.mxu0 0.0
    %1552 = vmatprep.subr.mxu0 0.0
    %1553 = vmatpush1.msra.mxu0 0.0
    %1554 = vmatprep.subr.mxu0 0.0
    %1555 = vmatpush1.msra.mxu0 0.0
    %1556 = vmatprep.subr.mxu0 0.0
    %1557 = vmatpush1.msra.mxu0 0.0
    %1558 = vmatprep.subr.mxu0 0.0
    %1559 = vmatpush1.msra.mxu0 0.0
    %1560 = vmatprep.subr.mxu0 0.0
    %1561 = vmatpush1.msra.mxu0 0.0
    %1562 = vmatprep.subr.mxu0 0.0
    %1563 = vmatpush1.msra.mxu0 0.0
    %1564 = vmatprep.subr.mxu0 0.0
    %1565 = vmatpush1.msra.mxu0 0.0
    %1566 = vmatprep.subr.mxu0 0.0
    %1567 = vmatpush1.msra.mxu0 0.0
    %1568 = vmatprep.subr.mxu0 0.0
    %1569 = vmatpush1.msra.mxu0 0.0
    %1570 = vmatprep.subr.mxu0 0.0
    %1571 = vmatpush1.msra.mxu0 0.0
    %1572 = vmatprep.subr.mxu0 0.0
    %1573 = vmatpush1.msra.mxu0 0.0
    %1574 = vmatprep.subr.mxu0 0.0
    %1575 = vmatpush1.msra.mxu0 0.0
    %1576 = vmatprep.subr.mxu0 0.0
    %1577 = vmatpush1.msra.mxu0 0.0
    %1578 = vmatprep.subr.mxu0 0.0
    %1579 = vmatpush1.msra.mxu0 0.0
    %1580 = vmatprep.subr.mxu0 0.0
    %1581 = vmatpush1.msra.mxu0 0.0
    %1582 = vmatprep.subr.mxu0 0.0
    %1583 = vmatpush1.msra.mxu0 0.0
    %1584 = vmatprep.subr.mxu0 0.0
    %1585 = vmatpush1.msra.mxu0 0.0
    %1586 = vmatprep.subr.mxu0 0.0
    %1587 = vmatpush1.msra.mxu0 0.0
    %1588 = vmatprep.subr.mxu0 0.0
    %1589 = vmatpush1.msra.mxu0 0.0
    %1590 = vmatprep.subr.mxu0 0.0
    %1591 = vmatpush1.msra.mxu0 0.0
    %1592 = vmatprep.subr.mxu0 0.0
    %1593 = vmatpush1.msra.mxu0 0.0
    %1594 = vmatprep.subr.mxu0 0.0
    %1595 = vmatpush1.msra.mxu0 0.0
    %1596 = vmatprep.subr.mxu0 0.0
    %1597 = vmatpush1.msra.mxu0 0.0
    %1598 = vmatprep.subr.mxu0 0.0
    %1599 = vmatpush1.msra.mxu0 0.0
    %1600 = vmatprep.subr.mxu0 0.0
    %1601 = vmatpush1.msra.mxu0 0.0
    %1602 = vmatprep.subr.mxu0 0.0
    %1603 = vmatpush1.msra.mxu0 0.0
    %1604 = vmatprep.subr.mxu0 0.0
    %1605 = vmatpush1.msra.mxu0 0.0
    %1606 = vmatprep.subr.mxu0 0.0
    %1607 = vmatpush1.msra.mxu0 0.0
    %1608 = vmatprep.subr.mxu0 0.0
    %1609 = vmatpush1.msra.mxu0 0.0
    %1610 = vmatprep.subr.mxu0 0.0
    %1611 = vmatpush1.msra.mxu0 0.0
    %1612 = vmatprep.mubr.f32.mxu0 0.0
    %1613 = vmatmul.mubr.f32.gmra.mrb[0].mxu0 %v1546
    %v1614 = vpop.f32.mrb[0].mxu0
    %v1615 = vadd.f32 0.0, %v1614
    %v1616 = vpop.f32.mrb[0].mxu0
    %1617 = vdwg.mxu0
    %v1618 = vadd.f32 %v1544, %v1615
    %v1619 = vrot.slane %v1385, 3
    %v1620 = vsel %vm670, %v1619, 0
    %1622 = vmatprep.subr.mxu0 0.0
    %1623 = vmatpush1.msra.mxu0 %v1391
    %1624 = vmatprep.subr.mxu0 0.0
    %1625 = vmatpush1.msra.mxu0 0.0
    %1626 = vmatprep.subr.mxu0 0.0
    %1627 = vmatpush1.msra.mxu0 0.0
    %1628 = vmatprep.subr.mxu0 0.0
    %1629 = vmatpush1.msra.mxu0 0.0
    %1630 = vmatprep.subr.mxu0 0.0
    %1631 = vmatpush1.msra.mxu0 0.0
    %1632 = vmatprep.subr.mxu0 0.0
    %1633 = vmatpush1.msra.mxu0 0.0
    %1634 = vmatprep.subr.mxu0 0.0
    %1635 = vmatpush1.msra.mxu0 0.0
    %1636 = vmatprep.subr.mxu0 0.0
    %1637 = vmatpush1.msra.mxu0 0.0
    %1638 = vmatprep.subr.mxu0 0.0
    %1639 = vmatpush1.msra.mxu0 0.0
    %1640 = vmatprep.subr.mxu0 0.0
    %1641 = vmatpush1.msra.mxu0 0.0
    %1642 = vmatprep.subr.mxu0 0.0
    %1643 = vmatpush1.msra.mxu0 0.0
    %1644 = vmatprep.subr.mxu0 0.0
    %1645 = vmatpush1.msra.mxu0 0.0
    %1646 = vmatprep.subr.mxu0 0.0
    %1647 = vmatpush1.msra.mxu0 0.0
    %1648 = vmatprep.subr.mxu0 0.0
    %1649 = vmatpush1.msra.mxu0 0.0
    %1650 = vmatprep.subr.mxu0 0.0
    %1651 = vmatpush1.msra.mxu0 0.0
    %1652 = vmatprep.subr.mxu0 0.0
    %1653 = vmatpush1.msra.mxu0 0.0
    %1654 = vmatprep.subr.mxu0 0.0
    %1655 = vmatpush1.msra.mxu0 0.0
    %1656 = vmatprep.subr.mxu0 0.0
    %1657 = vmatpush1.msra.mxu0 0.0
    %1658 = vmatprep.subr.mxu0 0.0
    %1659 = vmatpush1.msra.mxu0 0.0
    %1660 = vmatprep.subr.mxu0 0.0
    %1661 = vmatpush1.msra.mxu0 0.0
    %1662 = vmatprep.subr.mxu0 0.0
    %1663 = vmatpush1.msra.mxu0 0.0
    %1664 = vmatprep.subr.mxu0 0.0
    %1665 = vmatpush1.msra.mxu0 0.0
    %1666 = vmatprep.subr.mxu0 0.0
    %1667 = vmatpush1.msra.mxu0 0.0
    %1668 = vmatprep.subr.mxu0 0.0
    %1669 = vmatpush1.msra.mxu0 0.0
    %1670 = vmatprep.subr.mxu0 0.0
    %1671 = vmatpush1.msra.mxu0 0.0
    %1672 = vmatprep.subr.mxu0 0.0
    %1673 = vmatpush1.msra.mxu0 0.0
    %1674 = vmatprep.subr.mxu0 0.0
    %1675 = vmatpush1.msra.mxu0 0.0
    %1676 = vmatprep.subr.mxu0 0.0
    %1677 = vmatpush1.msra.mxu0 0.0
    %1678 = vmatprep.subr.mxu0 0.0
    %1679 = vmatpush1.msra.mxu0 0.0
    %1680 = vmatprep.subr.mxu0 0.0
    %1681 = vmatpush1.msra.mxu0 0.0
    %1682 = vmatprep.subr.mxu0 0.0
    %1683 = vmatpush1.msra.mxu0 0.0
    %1684 = vmatprep.subr.mxu0 0.0
    %1685 = vmatpush1.msra.mxu0 0.0
    %1686 = vmatprep.mubr.f32.mxu0 0.0
    %1687 = vmatmul.mubr.f32.gmra.mrb[0].mxu0 %v1620
    %v1688 = vpop.f32.mrb[0].mxu0
    %v1689 = vadd.f32 0.0, %v1688
    %v1690 = vpop.f32.mrb[0].mxu0
    %1691 = vdwg.mxu0
    %v1692 = vadd.f32 %v1618, %v1689
    %v1693 = vrot.slane %v1385, 4
    %v1694 = vsel %vm670, %v1693, 0
    %1696 = vmatprep.subr.mxu0 0.0
    %1697 = vmatpush1.msra.mxu0 %v1392
    %1698 = vmatprep.subr.mxu0 0.0
    %1699 = vmatpush1.msra.mxu0 0.0
    %1700 = vmatprep.subr.mxu0 0.0
    %1701 = vmatpush1.msra.mxu0 0.0
    %1702 = vmatprep.subr.mxu0 0.0
    %1703 = vmatpush1.msra.mxu0 0.0
    %1704 = vmatprep.subr.mxu0 0.0
    %1705 = vmatpush1.msra.mxu0 0.0
    %1706 = vmatprep.subr.mxu0 0.0
    %1707 = vmatpush1.msra.mxu0 0.0
    %1708 = vmatprep.subr.mxu0 0.0
    %1709 = vmatpush1.msra.mxu0 0.0
    %1710 = vmatprep.subr.mxu0 0.0
    %1711 = vmatpush1.msra.mxu0 0.0
    %1712 = vmatprep.subr.mxu0 0.0
    %1713 = vmatpush1.msra.mxu0 0.0
    %1714 = vmatprep.subr.mxu0 0.0
    %1715 = vmatpush1.msra.mxu0 0.0
    %1716 = vmatprep.subr.mxu0 0.0
    %1717 = vmatpush1.msra.mxu0 0.0
    %1718 = vmatprep.subr.mxu0 0.0
    %1719 = vmatpush1.msra.mxu0 0.0
    %1720 = vmatprep.subr.mxu0 0.0
    %1721 = vmatpush1.msra.mxu0 0.0
    %1722 = vmatprep.subr.mxu0 0.0
    %1723 = vmatpush1.msra.mxu0 0.0
    %1724 = vmatprep.subr.mxu0 0.0
    %1725 = vmatpush1.msra.mxu0 0.0
    %1726 = vmatprep.subr.mxu0 0.0
    %1727 = vmatpush1.msra.mxu0 0.0
    %1728 = vmatprep.subr.mxu0 0.0
    %1729 = vmatpush1.msra.mxu0 0.0
    %1730 = vmatprep.subr.mxu0 0.0
    %1731 = vmatpush1.msra.mxu0 0.0
    %1732 = vmatprep.subr.mxu0 0.0
    %1733 = vmatpush1.msra.mxu0 0.0
    %1734 = vmatprep.subr.mxu0 0.0
    %1735 = vmatpush1.msra.mxu0 0.0
    %1736 = vmatprep.subr.mxu0 0.0
    %1737 = vmatpush1.msra.mxu0 0.0
    %1738 = vmatprep.subr.mxu0 0.0
    %1739 = vmatpush1.msra.mxu0 0.0
    %1740 = vmatprep.subr.mxu0 0.0
    %1741 = vmatpush1.msra.mxu0 0.0
    %1742 = vmatprep.subr.mxu0 0.0
    %1743 = vmatpush1.msra.mxu0 0.0
    %1744 = vmatprep.subr.mxu0 0.0
    %1745 = vmatpush1.msra.mxu0 0.0
    %1746 = vmatprep.subr.mxu0 0.0
    %1747 = vmatpush1.msra.mxu0 0.0
    %1748 = vmatprep.subr.mxu0 0.0
    %1749 = vmatpush1.msra.mxu0 0.0
    %1750 = vmatprep.subr.mxu0 0.0
    %1751 = vmatpush1.msra.mxu0 0.0
    %1752 = vmatprep.subr.mxu0 0.0
    %1753 = vmatpush1.msra.mxu0 0.0
    %1754 = vmatprep.subr.mxu0 0.0
    %1755 = vmatpush1.msra.mxu0 0.0
    %1756 = vmatprep.subr.mxu0 0.0
    %1757 = vmatpush1.msra.mxu0 0.0
    %1758 = vmatprep.subr.mxu0 0.0
    %1759 = vmatpush1.msra.mxu0 0.0
    %1760 = vmatprep.mubr.f32.mxu0 0.0
    %1761 = vmatmul.mubr.f32.gmra.mrb[0].mxu0 %v1694
    %v1762 = vpop.f32.mrb[0].mxu0
    %v1763 = vadd.f32 0.0, %v1762
    %v1764 = vpop.f32.mrb[0].mxu0
    %1765 = vdwg.mxu0
    %v1766 = vadd.f32 %v1692, %v1763
    %v1767 = vrot.slane %v1385, 5
    %v1768 = vsel %vm670, %v1767, 0
    %1770 = vmatprep.subr.mxu0 0.0
    %1771 = vmatpush1.msra.mxu0 %v1393
    %1772 = vmatprep.subr.mxu0 0.0
    %1773 = vmatpush1.msra.mxu0 0.0
    %1774 = vmatprep.subr.mxu0 0.0
    %1775 = vmatpush1.msra.mxu0 0.0
    %1776 = vmatprep.subr.mxu0 0.0
    %1777 = vmatpush1.msra.mxu0 0.0
    %1778 = vmatprep.subr.mxu0 0.0
    %1779 = vmatpush1.msra.mxu0 0.0
    %1780 = vmatprep.subr.mxu0 0.0
    %1781 = vmatpush1.msra.mxu0 0.0
    %1782 = vmatprep.subr.mxu0 0.0
    %1783 = vmatpush1.msra.mxu0 0.0
    %1784 = vmatprep.subr.mxu0 0.0
    %1785 = vmatpush1.msra.mxu0 0.0
    %1786 = vmatprep.subr.mxu0 0.0
    %1787 = vmatpush1.msra.mxu0 0.0
    %1788 = vmatprep.subr.mxu0 0.0
    %1789 = vmatpush1.msra.mxu0 0.0
    %1790 = vmatprep.subr.mxu0 0.0
    %1791 = vmatpush1.msra.mxu0 0.0
    %1792 = vmatprep.subr.mxu0 0.0
    %1793 = vmatpush1.msra.mxu0 0.0
    %1794 = vmatprep.subr.mxu0 0.0
    %1795 = vmatpush1.msra.mxu0 0.0
    %1796 = vmatprep.subr.mxu0 0.0
    %1797 = vmatpush1.msra.mxu0 0.0
    %1798 = vmatprep.subr.mxu0 0.0
    %1799 = vmatpush1.msra.mxu0 0.0
    %1800 = vmatprep.subr.mxu0 0.0
    %1801 = vmatpush1.msra.mxu0 0.0
    %1802 = vmatprep.subr.mxu0 0.0
    %1803 = vmatpush1.msra.mxu0 0.0
    %1804 = vmatprep.subr.mxu0 0.0
    %1805 = vmatpush1.msra.mxu0 0.0
    %1806 = vmatprep.subr.mxu0 0.0
    %1807 = vmatpush1.msra.mxu0 0.0
    %1808 = vmatprep.subr.mxu0 0.0
    %1809 = vmatpush1.msra.mxu0 0.0
    %1810 = vmatprep.subr.mxu0 0.0
    %1811 = vmatpush1.msra.mxu0 0.0
    %1812 = vmatprep.subr.mxu0 0.0
    %1813 = vmatpush1.msra.mxu0 0.0
    %1814 = vmatprep.subr.mxu0 0.0
    %1815 = vmatpush1.msra.mxu0 0.0
    %1816 = vmatprep.subr.mxu0 0.0
    %1817 = vmatpush1.msra.mxu0 0.0
    %1818 = vmatprep.subr.mxu0 0.0
    %1819 = vmatpush1.msra.mxu0 0.0
    %1820 = vmatprep.subr.mxu0 0.0
    %1821 = vmatpush1.msra.mxu0 0.0
    %1822 = vmatprep.subr.mxu0 0.0
    %1823 = vmatpush1.msra.mxu0 0.0
    %1824 = vmatprep.subr.mxu0 0.0
    %1825 = vmatpush1.msra.mxu0 0.0
    %1826 = vmatprep.subr.mxu0 0.0
    %1827 = vmatpush1.msra.mxu0 0.0
    %1828 = vmatprep.subr.mxu0 0.0
    %1829 = vmatpush1.msra.mxu0 0.0
    %1830 = vmatprep.subr.mxu0 0.0
    %1831 = vmatpush1.msra.mxu0 0.0
    %1832 = vmatprep.subr.mxu0 0.0
    %1833 = vmatpush1.msra.mxu0 0.0
    %1834 = vmatprep.mubr.f32.mxu0 0.0
    %1835 = vmatmul.mubr.f32.gmra.mrb[0].mxu0 %v1768
    %v1836 = vpop.f32.mrb[0].mxu0
    %v1837 = vadd.f32 0.0, %v1836
    %v1838 = vpop.f32.mrb[0].mxu0
    %1839 = vdwg.mxu0
    %v1840 = vadd.f32 %v1766, %v1837
    %v1841 = vrot.slane %v1385, 6
    %v1842 = vsel %vm670, %v1841, 0
    %1844 = vmatprep.subr.mxu0 0.0
    %1845 = vmatpush1.msra.mxu0 %v1394
    %1846 = vmatprep.subr.mxu0 0.0
    %1847 = vmatpush1.msra.mxu0 0.0
    %1848 = vmatprep.subr.mxu0 0.0
    %1849 = vmatpush1.msra.mxu0 0.0
    %1850 = vmatprep.subr.mxu0 0.0
    %1851 = vmatpush1.msra.mxu0 0.0
    %1852 = vmatprep.subr.mxu0 0.0
    %1853 = vmatpush1.msra.mxu0 0.0
    %1854 = vmatprep.subr.mxu0 0.0
    %1855 = vmatpush1.msra.mxu0 0.0
    %1856 = vmatprep.subr.mxu0 0.0
    %1857 = vmatpush1.msra.mxu0 0.0
    %1858 = vmatprep.subr.mxu0 0.0
    %1859 = vmatpush1.msra.mxu0 0.0
    %1860 = vmatprep.subr.mxu0 0.0
    %1861 = vmatpush1.msra.mxu0 0.0
    %1862 = vmatprep.subr.mxu0 0.0
    %1863 = vmatpush1.msra.mxu0 0.0
    %1864 = vmatprep.subr.mxu0 0.0
    %1865 = vmatpush1.msra.mxu0 0.0
    %1866 = vmatprep.subr.mxu0 0.0
    %1867 = vmatpush1.msra.mxu0 0.0
    %1868 = vmatprep.subr.mxu0 0.0
    %1869 = vmatpush1.msra.mxu0 0.0
    %1870 = vmatprep.subr.mxu0 0.0
    %1871 = vmatpush1.msra.mxu0 0.0
    %1872 = vmatprep.subr.mxu0 0.0
    %1873 = vmatpush1.msra.mxu0 0.0
    %1874 = vmatprep.subr.mxu0 0.0
    %1875 = vmatpush1.msra.mxu0 0.0
    %1876 = vmatprep.subr.mxu0 0.0
    %1877 = vmatpush1.msra.mxu0 0.0
    %1878 = vmatprep.subr.mxu0 0.0
    %1879 = vmatpush1.msra.mxu0 0.0
    %1880 = vmatprep.subr.mxu0 0.0
    %1881 = vmatpush1.msra.mxu0 0.0
    %1882 = vmatprep.subr.mxu0 0.0
    %1883 = vmatpush1.msra.mxu0 0.0
    %1884 = vmatprep.subr.mxu0 0.0
    %1885 = vmatpush1.msra.mxu0 0.0
    %1886 = vmatprep.subr.mxu0 0.0
    %1887 = vmatpush1.msra.mxu0 0.0
    %1888 = vmatprep.subr.mxu0 0.0
    %1889 = vmatpush1.msra.mxu0 0.0
    %1890 = vmatprep.subr.mxu0 0.0
    %1891 = vmatpush1.msra.mxu0 0.0
    %1892 = vmatprep.subr.mxu0 0.0
    %1893 = vmatpush1.msra.mxu0 0.0
    %1894 = vmatprep.subr.mxu0 0.0
    %1895 = vmatpush1.msra.mxu0 0.0
    %1896 = vmatprep.subr.mxu0 0.0
    %1897 = vmatpush1.msra.mxu0 0.0
    %1898 = vmatprep.subr.mxu0 0.0
    %1899 = vmatpush1.msra.mxu0 0.0
    %1900 = vmatprep.subr.mxu0 0.0
    %1901 = vmatpush1.msra.mxu0 0.0
    %1902 = vmatprep.subr.mxu0 0.0
    %1903 = vmatpush1.msra.mxu0 0.0
    %1904 = vmatprep.subr.mxu0 0.0
    %1905 = vmatpush1.msra.mxu0 0.0
    %1906 = vmatprep.subr.mxu0 0.0
    %1907 = vmatpush1.msra.mxu0 0.0
    %1908 = vmatprep.mubr.f32.mxu0 0.0
    %1909 = vmatmul.mubr.f32.gmra.mrb[0].mxu0 %v1842
    %v1910 = vpop.f32.mrb[0].mxu0
    %v1911 = vadd.f32 0.0, %v1910
    %v1912 = vpop.f32.mrb[0].mxu0
    %1913 = vdwg.mxu0
    %v1914 = vadd.f32 %v1840, %v1911
    %v1915 = vrot.slane %v1385, 7
    %v1916 = vsel %vm670, %v1915, 0
    %1918 = vmatprep.subr.mxu0 0.0
    %1919 = vmatpush1.msra.mxu0 %v1395
    %1920 = vmatprep.subr.mxu0 0.0
    %1921 = vmatpush1.msra.mxu0 0.0
    %1922 = vmatprep.subr.mxu0 0.0
    %1923 = vmatpush1.msra.mxu0 0.0
    %1924 = vmatprep.subr.mxu0 0.0
    %1925 = vmatpush1.msra.mxu0 0.0
    %1926 = vmatprep.subr.mxu0 0.0
    %1927 = vmatpush1.msra.mxu0 0.0
    %1928 = vmatprep.subr.mxu0 0.0
    %1929 = vmatpush1.msra.mxu0 0.0
    %1930 = vmatprep.subr.mxu0 0.0
    %1931 = vmatpush1.msra.mxu0 0.0
    %1932 = vmatprep.subr.mxu0 0.0
    %1933 = vmatpush1.msra.mxu0 0.0
    %1934 = vmatprep.subr.mxu0 0.0
    %1935 = vmatpush1.msra.mxu0 0.0
    %1936 = vmatprep.subr.mxu0 0.0
    %1937 = vmatpush1.msra.mxu0 0.0
    %1938 = vmatprep.subr.mxu0 0.0
    %1939 = vmatpush1.msra.mxu0 0.0
    %1940 = vmatprep.subr.mxu0 0.0
    %1941 = vmatpush1.msra.mxu0 0.0
    %1942 = vmatprep.subr.mxu0 0.0
    %1943 = vmatpush1.msra.mxu0 0.0
    %1944 = vmatprep.subr.mxu0 0.0
    %1945 = vmatpush1.msra.mxu0 0.0
    %1946 = vmatprep.subr.mxu0 0.0
    %1947 = vmatpush1.msra.mxu0 0.0
    %1948 = vmatprep.subr.mxu0 0.0
    %1949 = vmatpush1.msra.mxu0 0.0
    %1950 = vmatprep.subr.mxu0 0.0
    %1951 = vmatpush1.msra.mxu0 0.0
    %1952 = vmatprep.subr.mxu0 0.0
    %1953 = vmatpush1.msra.mxu0 0.0
    %1954 = vmatprep.subr.mxu0 0.0
    %1955 = vmatpush1.msra.mxu0 0.0
    %1956 = vmatprep.subr.mxu0 0.0
    %1957 = vmatpush1.msra.mxu0 0.0
    %1958 = vmatprep.subr.mxu0 0.0
    %1959 = vmatpush1.msra.mxu0 0.0
    %1960 = vmatprep.subr.mxu0 0.0
    %1961 = vmatpush1.msra.mxu0 0.0
    %1962 = vmatprep.subr.mxu0 0.0
    %1963 = vmatpush1.msra.mxu0 0.0
    %1964 = vmatprep.subr.mxu0 0.0
    %1965 = vmatpush1.msra.mxu0 0.0
    %1966 = vmatprep.subr.mxu0 0.0
    %1967 = vmatpush1.msra.mxu0 0.0
    %1968 = vmatprep.subr.mxu0 0.0
    %1969 = vmatpush1.msra.mxu0 0.0
    %1970 = vmatprep.subr.mxu0 0.0
    %1971 = vmatpush1.msra.mxu0 0.0
    %1972 = vmatprep.subr.mxu0 0.0
    %1973 = vmatpush1.msra.mxu0 0.0
    %1974 = vmatprep.subr.mxu0 0.0
    %1975 = vmatpush1.msra.mxu0 0.0
    %1976 = vmatprep.subr.mxu0 0.0
    %1977 = vmatpush1.msra.mxu0 0.0
    %1978 = vmatprep.subr.mxu0 0.0
    %1979 = vmatpush1.msra.mxu0 0.0
    %1980 = vmatprep.subr.mxu0 0.0
    %1981 = vmatpush1.msra.mxu0 0.0
    %1982 = vmatprep.mubr.f32.mxu0 0.0
    %1983 = vmatmul.mubr.f32.gmra.mrb[0].mxu0 %v1916
    %v1984 = vpop.f32.mrb[0].mxu0
    %v1985 = vadd.f32 0.0, %v1984
    %v1986 = vpop.f32.mrb[0].mxu0
    %1987 = vdwg.mxu0
    %v1988 = vadd.f32 %v1914, %v1985
    %v1989 = vld [vmem:[#allocation13] sm:$0xff]
    %v1990 = vld [vmem:[#allocation13 + $0x8] sm:$0xff]
    %v1991 = vld [vmem:[#allocation15] sm:$0x1]
    %vm1992 = vcmask 130048
    %v1994 = vsel %vm1992, %v1988, 0
    %1996 = vmatprep.subr.mxu0 0.0
    %1997 = vmatpush1.msra.mxu0 %v1989
    %1998 = vmatprep.subr.mxu0 0.0
    %1999 = vmatpush1.msra.mxu0 %v1990
    %2000 = vmatprep.subr.mxu0 0.0
    %2001 = vmatpush1.msra.mxu0 0.0
    %2002 = vmatprep.subr.mxu0 0.0
    %2003 = vmatpush1.msra.mxu0 0.0
    %2004 = vmatprep.subr.mxu0 0.0
    %2005 = vmatpush1.msra.mxu0 0.0
    %2006 = vmatprep.subr.mxu0 0.0
    %2007 = vmatpush1.msra.mxu0 0.0
    %2008 = vmatprep.subr.mxu0 0.0
    %2009 = vmatpush1.msra.mxu0 0.0
    %2010 = vmatprep.subr.mxu0 0.0
    %2011 = vmatpush1.msra.mxu0 0.0
    %2012 = vmatprep.subr.mxu0 0.0
    %2013 = vmatpush1.msra.mxu0 0.0
    %2014 = vmatprep.subr.mxu0 0.0
    %2015 = vmatpush1.msra.mxu0 0.0
    %2016 = vmatprep.subr.mxu0 0.0
    %2017 = vmatpush1.msra.mxu0 0.0
    %2018 = vmatprep.subr.mxu0 0.0
    %2019 = vmatpush1.msra.mxu0 0.0
    %2020 = vmatprep.subr.mxu0 0.0
    %2021 = vmatpush1.msra.mxu0 0.0
    %2022 = vmatprep.subr.mxu0 0.0
    %2023 = vmatpush1.msra.mxu0 0.0
    %2024 = vmatprep.subr.mxu0 0.0
    %2025 = vmatpush1.msra.mxu0 0.0
    %2026 = vmatprep.subr.mxu0 0.0
    %2027 = vmatpush1.msra.mxu0 0.0
    %2028 = vmatprep.subr.mxu0 0.0
    %2029 = vmatpush1.msra.mxu0 0.0
    %2030 = vmatprep.subr.mxu0 0.0
    %2031 = vmatpush1.msra.mxu0 0.0
    %2032 = vmatprep.subr.mxu0 0.0
    %2033 = vmatpush1.msra.mxu0 0.0
    %2034 = vmatprep.subr.mxu0 0.0
    %2035 = vmatpush1.msra.mxu0 0.0
    %2036 = vmatprep.subr.mxu0 0.0
    %2037 = vmatpush1.msra.mxu0 0.0
    %2038 = vmatprep.subr.mxu0 0.0
    %2039 = vmatpush1.msra.mxu0 0.0
    %2040 = vmatprep.subr.mxu0 0.0
    %2041 = vmatpush1.msra.mxu0 0.0
    %2042 = vmatprep.subr.mxu0 0.0
    %2043 = vmatpush1.msra.mxu0 0.0
    %2044 = vmatprep.subr.mxu0 0.0
    %2045 = vmatpush1.msra.mxu0 0.0
    %2046 = vmatprep.subr.mxu0 0.0
    %2047 = vmatpush1.msra.mxu0 0.0
    %2048 = vmatprep.subr.mxu0 0.0
    %2049 = vmatpush1.msra.mxu0 0.0
    %2050 = vmatprep.subr.mxu0 0.0
    %2051 = vmatpush1.msra.mxu0 0.0
    %2052 = vmatprep.subr.mxu0 0.0
    %2053 = vmatpush1.msra.mxu0 0.0
    %2054 = vmatprep.subr.mxu0 0.0
    %2055 = vmatpush1.msra.mxu0 0.0
    %2056 = vmatprep.subr.mxu0 0.0
    %2057 = vmatpush1.msra.mxu0 0.0
    %2058 = vmatprep.subr.mxu0 0.0
    %2059 = vmatpush1.msra.mxu0 0.0
    %2060 = vmatprep.mubr.f32.mxu0 0.0
    %2061 = vmatmul.mubr.f32.gmra.mrb[0].mxu0 %v1994
    %v2062 = vpop.f32.mrb[0].mxu0
    %v2063 = vadd.f32 %v1991, %v2062
    %v2064 = vpop.f32.mrb[0].mxu0
    %2065 = vdwg.mxu0
    %v2066 = vld [vmem:[%s11] sm:$0xff]
    %v2067 = vld [vmem:[%s11 + $0x8] sm:$0xff]
    %2069 = vset.pattern.permute.xlu0 0
    %2070 = vperm.xlu0 %2069, %v2066
    %v2071 = vpop.permute.xlu0 %2070
    %2074 = vset.pattern.permute.xlu0 0
    %2075 = vperm.xlu0 %2074, %v2067
    %v2076 = vpop.permute.xlu0 %2075
    %v2078 = vlaneseq
    %v2079 = vshrl.u32 %v2078, 7
    %v2080 = vsub.s32 0, %v2079
    %v2081 = vrot.slane %v2063, %v2080
    %v2082 = vmul.f32 %v2071, %v2081
    %v2083 = vmul.f32 %v2076, %v2081
    %v2084 = vadd.f32 %v2082, 0.0
    %v2085 = vadd.f32 %v2083, 0.0
    %2086 = vset.pattern.permute.xlu0 1
    %2087 = vperm.xlu0 %2086, %v2066
    %v2088 = vpop.permute.xlu0 %2087
    %2090 = vset.pattern.permute.xlu0 1
    %2091 = vperm.xlu0 %2090, %v2067
    %v2092 = vpop.permute.xlu0 %2091
    %v2094 = vmul.f32 %v2088, %v2081
    %v2095 = vmul.f32 %v2092, %v2081
    %2098 = vrot.lane.b32.xlu0 %v2094, 120
    %v2099 = vpop.permute.xlu0 %2098
    %2100 = vrot.lane.b32.xlu0 %v2095, 120
    %v2101 = vpop.permute.xlu0 %2100
    %v2104 = vadd.f32 %v2084, %v2099
    %v2105 = vadd.f32 %v2085, %v2101
    %2106 = vset.pattern.permute.xlu0 2
    %2107 = vperm.xlu0 %2106, %v2066
    %v2108 = vpop.permute.xlu0 %2107
    %2110 = vset.pattern.permute.xlu0 2
    %2111 = vperm.xlu0 %2110, %v2067
    %v2112 = vpop.permute.xlu0 %2111
    %v2114 = vmul.f32 %v2108, %v2081
    %v2115 = vmul.f32 %v2112, %v2081
    %2118 = vrot.lane.b32.xlu0 %v2114, 112
    %v2119 = vpop.permute.xlu0 %2118
    %2120 = vrot.lane.b32.xlu0 %v2115, 112
    %v2121 = vpop.permute.xlu0 %2120
    %v2124 = vadd.f32 %v2104, %v2119
    %v2125 = vadd.f32 %v2105, %v2121
    %2126 = vset.pattern.permute.xlu0 3
    %2127 = vperm.xlu0 %2126, %v2066
    %v2128 = vpop.permute.xlu0 %2127
    %2130 = vset.pattern.permute.xlu0 3
    %2131 = vperm.xlu0 %2130, %v2067
    %v2132 = vpop.permute.xlu0 %2131
    %v2134 = vmul.f32 %v2128, %v2081
    %v2135 = vmul.f32 %v2132, %v2081
    %2138 = vrot.lane.b32.xlu0 %v2134, 104
    %v2139 = vpop.permute.xlu0 %2138
    %2140 = vrot.lane.b32.xlu0 %v2135, 104
    %v2141 = vpop.permute.xlu0 %2140
    %v2144 = vadd.f32 %v2124, %v2139
    %v2145 = vadd.f32 %v2125, %v2141
    %2146 = vset.pattern.permute.xlu0 4
    %2147 = vperm.xlu0 %2146, %v2066
    %v2148 = vpop.permute.xlu0 %2147
    %2150 = vset.pattern.permute.xlu0 4
    %2151 = vperm.xlu0 %2150, %v2067
    %v2152 = vpop.permute.xlu0 %2151
    %v2154 = vmul.f32 %v2148, %v2081
    %v2155 = vmul.f32 %v2152, %v2081
    %2158 = vrot.lane.b32.xlu0 %v2154, 96
    %v2159 = vpop.permute.xlu0 %2158
    %2160 = vrot.lane.b32.xlu0 %v2155, 96
    %v2161 = vpop.permute.xlu0 %2160
    %v2164 = vadd.f32 %v2144, %v2159
    %v2165 = vadd.f32 %v2145, %v2161
    %2166 = vset.pattern.permute.xlu0 5
    %2167 = vperm.xlu0 %2166, %v2066
    %v2168 = vpop.permute.xlu0 %2167
    %2170 = vset.pattern.permute.xlu0 5
    %2171 = vperm.xlu0 %2170, %v2067
    %v2172 = vpop.permute.xlu0 %2171
    %v2174 = vmul.f32 %v2168, %v2081
    %v2175 = vmul.f32 %v2172, %v2081
    %2178 = vrot.lane.b32.xlu0 %v2174, 88
    %v2179 = vpop.permute.xlu0 %2178
    %2180 = vrot.lane.b32.xlu0 %v2175, 88
    %v2181 = vpop.permute.xlu0 %2180
    %v2184 = vadd.f32 %v2164, %v2179
    %v2185 = vadd.f32 %v2165, %v2181
    %2186 = vset.pattern.permute.xlu0 6
    %2187 = vperm.xlu0 %2186, %v2066
    %v2188 = vpop.permute.xlu0 %2187
    %2190 = vset.pattern.permute.xlu0 6
    %2191 = vperm.xlu0 %2190, %v2067
    %v2192 = vpop.permute.xlu0 %2191
    %v2194 = vmul.f32 %v2188, %v2081
    %v2195 = vmul.f32 %v2192, %v2081
    %2198 = vrot.lane.b32.xlu0 %v2194, 80
    %v2199 = vpop.permute.xlu0 %2198
    %2200 = vrot.lane.b32.xlu0 %v2195, 80
    %v2201 = vpop.permute.xlu0 %2200
    %v2204 = vadd.f32 %v2184, %v2199
    %v2205 = vadd.f32 %v2185, %v2201
    %2206 = vset.pattern.permute.xlu0 7
    %2207 = vperm.xlu0 %2206, %v2066
    %v2208 = vpop.permute.xlu0 %2207
    %2210 = vset.pattern.permute.xlu0 7
    %2211 = vperm.xlu0 %2210, %v2067
    %v2212 = vpop.permute.xlu0 %2211
    %v2214 = vmul.f32 %v2208, %v2081
    %v2215 = vmul.f32 %v2212, %v2081
    %2218 = vrot.lane.b32.xlu0 %v2214, 72
    %v2219 = vpop.permute.xlu0 %2218
    %2220 = vrot.lane.b32.xlu0 %v2215, 72
    %v2221 = vpop.permute.xlu0 %2220
    %v2224 = vadd.f32 %v2204, %v2219
    %v2225 = vadd.f32 %v2205, %v2221
    %vm2226 = vcmp.lt.s32.totalorder %v207, 15
    %vm2227 = vcmp.lt.s32.totalorder %v208, 15
    %v2228 = vsel %vm2226, 1.0, 0.0
    %v2229 = vsel %vm2227, 1.0, 0.0
    %v2230 = vmul.f32 %v2224, %v2228
    %v2231 = vmul.f32 %v2225, %v2229
    %v2232 = vld [vmem:[%s12] sm:$0xff]
    %v2233 = vld [vmem:[%s12 + $0x8] sm:$0xff]
    %v2234 = vld [vmem:[%s12 + $0x10] sm:$0xff]
    %v2235 = vld [vmem:[%s12 + $0x18] sm:$0xff]
    %v2236 = vld [vmem:[%s12 + $0x20] sm:$0xff]
    %v2237 = vld [vmem:[%s12 + $0x28] sm:$0xff]
    %v2238 = vld [vmem:[%s12 + $0x30] sm:$0xff]
    %v2239 = vld [vmem:[%s12 + $0x38] sm:$0xff]
    %v2240 = vld [vmem:[#allocation16] sm:$0xff]
    %v2241 = vld [vmem:[#allocation16 + $0x8] sm:$0xff]
    %v2242 = vld [vmem:[#allocation16 + $0x10] sm:$0xff]
    %v2243 = vld [vmem:[#allocation16 + $0x18] sm:$0xff]
    %v2244 = vld [vmem:[#allocation18] sm:$0x1]
    %v2245 = vld [vmem:[%s15] sm:$0xff]
    %v2246 = vld [vmem:[%s16] sm:$0x1]
    %v2248 = vsel %vm1992, %v2232, 0
    %v2251 = vsel %vm1992, %v2233, 0
    %v2254 = vsel %vm1992, %v2234, 0
    %v2257 = vsel %vm1992, %v2235, 0
    %v2260 = vsel %vm1992, %v2236, 0
    %v2263 = vsel %vm1992, %v2237, 0
    %v2266 = vsel %vm1992, %v2238, 0
    %v2269 = vsel %vm1992, %v2239, 0
    %2271 = vmatprep.subr.mxu0 0.0
    %2272 = vmatpush1.msra.mxu0 %v2230
    %2273 = vmatprep.subr.mxu0 0.0
    %2274 = vmatpush1.msra.mxu0 %v2231
    %2275 = vmatprep.subr.mxu0 0.0
    %2276 = vmatpush1.msra.mxu0 0.0
    %2277 = vmatprep.subr.mxu0 0.0
    %2278 = vmatpush1.msra.mxu0 0.0
    %2279 = vmatprep.subr.mxu0 0.0
    %2280 = vmatpush1.msra.mxu0 0.0
    %2281 = vmatprep.subr.mxu0 0.0
    %2282 = vmatpush1.msra.mxu0 0.0
    %2283 = vmatprep.subr.mxu0 0.0
    %2284 = vmatpush1.msra.mxu0 0.0
    %2285 = vmatprep.subr.mxu0 0.0
    %2286 = vmatpush1.msra.mxu0 0.0
    %2287 = vmatprep.subr.mxu0 0.0
    %2288 = vmatpush1.msra.mxu0 0.0
    %2289 = vmatprep.subr.mxu0 0.0
    %2290 = vmatpush1.msra.mxu0 0.0
    %2291 = vmatprep.subr.mxu0 0.0
    %2292 = vmatpush1.msra.mxu0 0.0
    %2293 = vmatprep.subr.mxu0 0.0
    %2294 = vmatpush1.msra.mxu0 0.0
    %2295 = vmatprep.subr.mxu0 0.0
    %2296 = vmatpush1.msra.mxu0 0.0
    %2297 = vmatprep.subr.mxu0 0.0
    %2298 = vmatpush1.msra.mxu0 0.0
    %2299 = vmatprep.subr.mxu0 0.0
    %2300 = vmatpush1.msra.mxu0 0.0
    %2301 = vmatprep.subr.mxu0 0.0
    %2302 = vmatpush1.msra.mxu0 0.0
    %2303 = vmatprep.subr.mxu0 0.0
    %2304 = vmatpush1.msra.mxu0 0.0
    %2305 = vmatprep.subr.mxu0 0.0
    %2306 = vmatpush1.msra.mxu0 0.0
    %2307 = vmatprep.subr.mxu0 0.0
    %2308 = vmatpush1.msra.mxu0 0.0
    %2309 = vmatprep.subr.mxu0 0.0
    %2310 = vmatpush1.msra.mxu0 0.0
    %2311 = vmatprep.subr.mxu0 0.0
    %2312 = vmatpush1.msra.mxu0 0.0
    %2313 = vmatprep.subr.mxu0 0.0
    %2314 = vmatpush1.msra.mxu0 0.0
    %2315 = vmatprep.subr.mxu0 0.0
    %2316 = vmatpush1.msra.mxu0 0.0
    %2317 = vmatprep.subr.mxu0 0.0
    %2318 = vmatpush1.msra.mxu0 0.0
    %2319 = vmatprep.subr.mxu0 0.0
    %2320 = vmatpush1.msra.mxu0 0.0
    %2321 = vmatprep.subr.mxu0 0.0
    %2322 = vmatpush1.msra.mxu0 0.0
    %2323 = vmatprep.subr.mxu0 0.0
    %2324 = vmatpush1.msra.mxu0 0.0
    %2325 = vmatprep.subr.mxu0 0.0
    %2326 = vmatpush1.msra.mxu0 0.0
    %2327 = vmatprep.subr.mxu0 0.0
    %2328 = vmatpush1.msra.mxu0 0.0
    %2329 = vmatprep.subr.mxu0 0.0
    %2330 = vmatpush1.msra.mxu0 0.0
    %2331 = vmatprep.subr.mxu0 0.0
    %2332 = vmatpush1.msra.mxu0 0.0
    %2333 = vmatprep.subr.mxu0 0.0
    %2334 = vmatpush1.msra.mxu0 0.0
    %2335 = vmatprep.mubr.f32.mxu0 0.0
    %2336 = vmatmul.mubr.f32.gmra.mrb[0].mxu0 %v2248
    %v2337 = vpop.f32.mrb[0].mxu0
    %v2338 = vadd.f32 0.0, %v2337
    %v2339 = vpop.f32.mrb[0].mxu0
    %2340 = vmatprep.mubr.f32.mxu0 0.0
    %2341 = vmatmul.mubr.f32.gmra.mrb[0].mxu0 %v2251
    %v2342 = vpop.f32.mrb[0].mxu0
    %v2343 = vadd.f32 0.0, %v2342
    %v2344 = vpop.f32.mrb[0].mxu0
    %2345 = vmatprep.mubr.f32.mxu0 0.0
    %2346 = vmatmul.mubr.f32.gmra.mrb[0].mxu0 %v2254
    %v2347 = vpop.f32.mrb[0].mxu0
    %v2348 = vadd.f32 0.0, %v2347
    %v2349 = vpop.f32.mrb[0].mxu0
    %2350 = vmatprep.mubr.f32.mxu0 0.0
    %2351 = vmatmul.mubr.f32.gmra.mrb[0].mxu0 %v2257
    %v2352 = vpop.f32.mrb[0].mxu0
    %v2353 = vadd.f32 0.0, %v2352
    %v2354 = vpop.f32.mrb[0].mxu0
    %2355 = vmatprep.mubr.f32.mxu0 0.0
    %2356 = vmatmul.mubr.f32.gmra.mrb[0].mxu0 %v2260
    %v2357 = vpop.f32.mrb[0].mxu0
    %v2358 = vadd.f32 0.0, %v2357
    %v2359 = vpop.f32.mrb[0].mxu0
    %2360 = vmatprep.mubr.f32.mxu0 0.0
    %2361 = vmatmul.mubr.f32.gmra.mrb[0].mxu0 %v2263
    %v2362 = vpop.f32.mrb[0].mxu0
    %v2363 = vadd.f32 0.0, %v2362
    %v2364 = vpop.f32.mrb[0].mxu0
    %2365 = vmatprep.mubr.f32.mxu0 0.0
    %2366 = vmatmul.mubr.f32.gmra.mrb[0].mxu0 %v2266
    %v2367 = vpop.f32.mrb[0].mxu0
    %v2368 = vadd.f32 0.0, %v2367
    %v2369 = vpop.f32.mrb[0].mxu0
    %2370 = vmatprep.mubr.f32.mxu0 0.0
    %2371 = vmatmul.mubr.f32.gmra.mrb[0].mxu0 %v2269
    %v2372 = vpop.f32.mrb[0].mxu0
    %v2373 = vadd.f32 0.0, %v2372
    %v2374 = vpop.f32.mrb[0].mxu0
    %2375 = vdwg.mxu0
    %vm2376 = vcmp.gt.f32.partialorder %v2338, 0.0
    %vm2377 = vcmp.gt.f32.partialorder %v2343, 0.0
    %vm2378 = vcmp.gt.f32.partialorder %v2348, 0.0
    %vm2379 = vcmp.gt.f32.partialorder %v2353, 0.0
    %vm2380 = vcmp.gt.f32.partialorder %v2358, 0.0
    %vm2381 = vcmp.gt.f32.partialorder %v2363, 0.0
    %vm2382 = vcmp.gt.f32.partialorder %v2368, 0.0
    %vm2383 = vcmp.gt.f32.partialorder %v2373, 0.0
    %v2384 = vmin.f32 %v2338, 0.0
    %v2385 = vmin.f32 %v2343, 0.0
    %v2386 = vmin.f32 %v2348, 0.0
    %v2387 = vmin.f32 %v2353, 0.0
    %v2388 = vmin.f32 %v2358, 0.0
    %v2389 = vmin.f32 %v2363, 0.0
    %v2390 = vmin.f32 %v2368, 0.0
    %v2391 = vmin.f32 %v2373, 0.0
    %v2392 = vmul.f32 %v2384, 1.442695
    %v2393 = vpow.pop %v2392
    %v2394 = vmul.f32 %v2385, 1.442695
    %v2395 = vpow.pop %v2394
    %v2396 = vmul.f32 %v2386, 1.442695
    %v2397 = vpow.pop %v2396
    %v2398 = vmul.f32 %v2387, 1.442695
    %v2399 = vpow.pop %v2398
    %v2400 = vmul.f32 %v2388, 1.442695
    %v2401 = vpow.pop %v2400
    %v2402 = vmul.f32 %v2389, 1.442695
    %v2403 = vpow.pop %v2402
    %v2404 = vmul.f32 %v2390, 1.442695
    %v2405 = vpow.pop %v2404
    %v2406 = vmul.f32 %v2391, 1.442695
    %v2407 = vpow.pop %v2406
    %v2408 = vsub.f32 %v2393, 1.0
    %v2409 = vsub.f32 %v2395, 1.0
    %v2410 = vsub.f32 %v2397, 1.0
    %v2411 = vsub.f32 %v2399, 1.0
    %v2412 = vsub.f32 %v2401, 1.0
    %v2413 = vsub.f32 %v2403, 1.0
    %v2414 = vsub.f32 %v2405, 1.0
    %v2415 = vsub.f32 %v2407, 1.0
    %v2416 = vsel %vm2376, %v2338, %v2408
    %v2417 = vsel %vm2377, %v2343, %v2409
    %v2418 = vsel %vm2378, %v2348, %v2410
    %v2419 = vsel %vm2379, %v2353, %v2411
    %v2420 = vsel %vm2380, %v2358, %v2412
    %v2421 = vsel %vm2381, %v2363, %v2413
    %v2422 = vsel %vm2382, %v2368, %v2414
    %v2423 = vsel %vm2383, %v2373, %v2415
    %v2425 = vsel %vm670, %v2418, 0
    %v2428 = vsel %vm670, %v2419, 0
    %2430 = vmatprep.subr.mxu0 0.0
    %2431 = vmatpush1.msra.mxu0 %v2241
    %2432 = vmatprep.subr.mxu0 0.0
    %2433 = vmatpush1.msra.mxu0 0.0
    %2434 = vmatprep.subr.mxu0 0.0
    %2435 = vmatpush1.msra.mxu0 0.0
    %2436 = vmatprep.subr.mxu0 0.0
    %2437 = vmatpush1.msra.mxu0 0.0
    %2438 = vmatprep.subr.mxu0 0.0
    %2439 = vmatpush1.msra.mxu0 0.0
    %2440 = vmatprep.subr.mxu0 0.0
    %2441 = vmatpush1.msra.mxu0 0.0
    %2442 = vmatprep.subr.mxu0 0.0
    %2443 = vmatpush1.msra.mxu0 0.0
    %2444 = vmatprep.subr.mxu0 0.0
    %2445 = vmatpush1.msra.mxu0 0.0
    %2446 = vmatprep.subr.mxu0 0.0
    %2447 = vmatpush1.msra.mxu0 0.0
    %2448 = vmatprep.subr.mxu0 0.0
    %2449 = vmatpush1.msra.mxu0 0.0
    %2450 = vmatprep.subr.mxu0 0.0
    %2451 = vmatpush1.msra.mxu0 0.0
    %2452 = vmatprep.subr.mxu0 0.0
    %2453 = vmatpush1.msra.mxu0 0.0
    %2454 = vmatprep.subr.mxu0 0.0
    %2455 = vmatpush1.msra.mxu0 0.0
    %2456 = vmatprep.subr.mxu0 0.0
    %2457 = vmatpush1.msra.mxu0 0.0
    %2458 = vmatprep.subr.mxu0 0.0
    %2459 = vmatpush1.msra.mxu0 0.0
    %2460 = vmatprep.subr.mxu0 0.0
    %2461 = vmatpush1.msra.mxu0 0.0
    %2462 = vmatprep.subr.mxu0 0.0
    %2463 = vmatpush1.msra.mxu0 0.0
    %2464 = vmatprep.subr.mxu0 0.0
    %2465 = vmatpush1.msra.mxu0 0.0
    %2466 = vmatprep.subr.mxu0 0.0
    %2467 = vmatpush1.msra.mxu0 0.0
    %2468 = vmatprep.subr.mxu0 0.0
    %2469 = vmatpush1.msra.mxu0 0.0
    %2470 = vmatprep.subr.mxu0 0.0
    %2471 = vmatpush1.msra.mxu0 0.0
    %2472 = vmatprep.subr.mxu0 0.0
    %2473 = vmatpush1.msra.mxu0 0.0
    %2474 = vmatprep.subr.mxu0 0.0
    %2475 = vmatpush1.msra.mxu0 0.0
    %2476 = vmatprep.subr.mxu0 0.0
    %2477 = vmatpush1.msra.mxu0 0.0
    %2478 = vmatprep.subr.mxu0 0.0
    %2479 = vmatpush1.msra.mxu0 0.0
    %2480 = vmatprep.subr.mxu0 0.0
    %2481 = vmatpush1.msra.mxu0 0.0
    %2482 = vmatprep.subr.mxu0 0.0
    %2483 = vmatpush1.msra.mxu0 0.0
    %2484 = vmatprep.subr.mxu0 0.0
    %2485 = vmatpush1.msra.mxu0 0.0
    %2486 = vmatprep.subr.mxu0 0.0
    %2487 = vmatpush1.msra.mxu0 0.0
    %2488 = vmatprep.subr.mxu0 0.0
    %2489 = vmatpush1.msra.mxu0 0.0
    %2490 = vmatprep.subr.mxu0 0.0
    %2491 = vmatpush1.msra.mxu0 0.0
    %2492 = vmatprep.subr.mxu0 0.0
    %2493 = vmatpush1.msra.mxu0 0.0
    %2494 = vmatprep.mubr.f32.mxu0 0.0
    %2495 = vmatmul.mubr.f32.gmra.mrb[0].mxu0 %v2425
    %v2496 = vpop.f32.mrb[0].mxu0
    %v2497 = vadd.f32 0.0, %v2496
    %v2498 = vpop.f32.mrb[0].mxu0
    %2499 = vmatprep.mubr.f32.mxu0 0.0
    %2500 = vmatmul.mubr.f32.gmra.mrb[0].mxu0 %v2428
    %v2501 = vpop.f32.mrb[0].mxu0
    %v2502 = vadd.f32 0.0, %v2501
    %v2503 = vpop.f32.mrb[0].mxu0
    %2504 = vdwg.mxu0
    %v2506 = vsel %vm670, %v2416, 0
    %v2509 = vsel %vm670, %v2417, 0
    %2511 = vmatprep.subr.mxu0 0.0
    %2512 = vmatpush1.msra.mxu0 %v2240
    %2513 = vmatprep.subr.mxu0 0.0
    %2514 = vmatpush1.msra.mxu0 0.0
    %2515 = vmatprep.subr.mxu0 0.0
    %2516 = vmatpush1.msra.mxu0 0.0
    %2517 = vmatprep.subr.mxu0 0.0
    %2518 = vmatpush1.msra.mxu0 0.0
    %2519 = vmatprep.subr.mxu0 0.0
    %2520 = vmatpush1.msra.mxu0 0.0
    %2521 = vmatprep.subr.mxu0 0.0
    %2522 = vmatpush1.msra.mxu0 0.0
    %2523 = vmatprep.subr.mxu0 0.0
    %2524 = vmatpush1.msra.mxu0 0.0
    %2525 = vmatprep.subr.mxu0 0.0
    %2526 = vmatpush1.msra.mxu0 0.0
    %2527 = vmatprep.subr.mxu0 0.0
    %2528 = vmatpush1.msra.mxu0 0.0
    %2529 = vmatprep.subr.mxu0 0.0
    %2530 = vmatpush1.msra.mxu0 0.0
    %2531 = vmatprep.subr.mxu0 0.0
    %2532 = vmatpush1.msra.mxu0 0.0
    %2533 = vmatprep.subr.mxu0 0.0
    %2534 = vmatpush1.msra.mxu0 0.0
    %2535 = vmatprep.subr.mxu0 0.0
    %2536 = vmatpush1.msra.mxu0 0.0
    %2537 = vmatprep.subr.mxu0 0.0
    %2538 = vmatpush1.msra.mxu0 0.0
    %2539 = vmatprep.subr.mxu0 0.0
    %2540 = vmatpush1.msra.mxu0 0.0
    %2541 = vmatprep.subr.mxu0 0.0
    %2542 = vmatpush1.msra.mxu0 0.0
    %2543 = vmatprep.subr.mxu0 0.0
    %2544 = vmatpush1.msra.mxu0 0.0
    %2545 = vmatprep.subr.mxu0 0.0
    %2546 = vmatpush1.msra.mxu0 0.0
    %2547 = vmatprep.subr.mxu0 0.0
    %2548 = vmatpush1.msra.mxu0 0.0
    %2549 = vmatprep.subr.mxu0 0.0
    %2550 = vmatpush1.msra.mxu0 0.0
    %2551 = vmatprep.subr.mxu0 0.0
    %2552 = vmatpush1.msra.mxu0 0.0
    %2553 = vmatprep.subr.mxu0 0.0
    %2554 = vmatpush1.msra.mxu0 0.0
    %2555 = vmatprep.subr.mxu0 0.0
    %2556 = vmatpush1.msra.mxu0 0.0
    %2557 = vmatprep.subr.mxu0 0.0
    %2558 = vmatpush1.msra.mxu0 0.0
    %2559 = vmatprep.subr.mxu0 0.0
    %2560 = vmatpush1.msra.mxu0 0.0
    %2561 = vmatprep.subr.mxu0 0.0
    %2562 = vmatpush1.msra.mxu0 0.0
    %2563 = vmatprep.subr.mxu0 0.0
    %2564 = vmatpush1.msra.mxu0 0.0
    %2565 = vmatprep.subr.mxu0 0.0
    %2566 = vmatpush1.msra.mxu0 0.0
    %2567 = vmatprep.subr.mxu0 0.0
    %2568 = vmatpush1.msra.mxu0 0.0
    %2569 = vmatprep.subr.mxu0 0.0
    %2570 = vmatpush1.msra.mxu0 0.0
    %2571 = vmatprep.subr.mxu0 0.0
    %2572 = vmatpush1.msra.mxu0 0.0
    %2573 = vmatprep.subr.mxu0 0.0
    %2574 = vmatpush1.msra.mxu0 0.0
    %2575 = vmatprep.mubr.f32.mxu0 0.0
    %2576 = vmatmul.mubr.f32.gmra.mrb[0].mxu0 %v2506
    %v2577 = vpop.f32.mrb[0].mxu0
    %v2578 = vadd.f32 %v2497, %v2577
    %v2579 = vpop.f32.mrb[0].mxu0
    %2580 = vmatprep.mubr.f32.mxu0 0.0
    %2581 = vmatmul.mubr.f32.gmra.mrb[0].mxu0 %v2509
    %v2582 = vpop.f32.mrb[0].mxu0
    %v2583 = vadd.f32 %v2502, %v2582
    %v2584 = vpop.f32.mrb[0].mxu0
    %2585 = vdwg.mxu0
    %v2587 = vsel %vm670, %v2420, 0
    %v2590 = vsel %vm670, %v2421, 0
    %2592 = vmatprep.subr.mxu0 0.0
    %2593 = vmatpush1.msra.mxu0 %v2242
    %2594 = vmatprep.subr.mxu0 0.0
    %2595 = vmatpush1.msra.mxu0 0.0
    %2596 = vmatprep.subr.mxu0 0.0
    %2597 = vmatpush1.msra.mxu0 0.0
    %2598 = vmatprep.subr.mxu0 0.0
    %2599 = vmatpush1.msra.mxu0 0.0
    %2600 = vmatprep.subr.mxu0 0.0
    %2601 = vmatpush1.msra.mxu0 0.0
    %2602 = vmatprep.subr.mxu0 0.0
    %2603 = vmatpush1.msra.mxu0 0.0
    %2604 = vmatprep.subr.mxu0 0.0
    %2605 = vmatpush1.msra.mxu0 0.0
    %2606 = vmatprep.subr.mxu0 0.0
    %2607 = vmatpush1.msra.mxu0 0.0
    %2608 = vmatprep.subr.mxu0 0.0
    %2609 = vmatpush1.msra.mxu0 0.0
    %2610 = vmatprep.subr.mxu0 0.0
    %2611 = vmatpush1.msra.mxu0 0.0
    %2612 = vmatprep.subr.mxu0 0.0
    %2613 = vmatpush1.msra.mxu0 0.0
    %2614 = vmatprep.subr.mxu0 0.0
    %2615 = vmatpush1.msra.mxu0 0.0
    %2616 = vmatprep.subr.mxu0 0.0
    %2617 = vmatpush1.msra.mxu0 0.0
    %2618 = vmatprep.subr.mxu0 0.0
    %2619 = vmatpush1.msra.mxu0 0.0
    %2620 = vmatprep.subr.mxu0 0.0
    %2621 = vmatpush1.msra.mxu0 0.0
    %2622 = vmatprep.subr.mxu0 0.0
    %2623 = vmatpush1.msra.mxu0 0.0
    %2624 = vmatprep.subr.mxu0 0.0
    %2625 = vmatpush1.msra.mxu0 0.0
    %2626 = vmatprep.subr.mxu0 0.0
    %2627 = vmatpush1.msra.mxu0 0.0
    %2628 = vmatprep.subr.mxu0 0.0
    %2629 = vmatpush1.msra.mxu0 0.0
    %2630 = vmatprep.subr.mxu0 0.0
    %2631 = vmatpush1.msra.mxu0 0.0
    %2632 = vmatprep.subr.mxu0 0.0
    %2633 = vmatpush1.msra.mxu0 0.0
    %2634 = vmatprep.subr.mxu0 0.0
    %2635 = vmatpush1.msra.mxu0 0.0
    %2636 = vmatprep.subr.mxu0 0.0
    %2637 = vmatpush1.msra.mxu0 0.0
    %2638 = vmatprep.subr.mxu0 0.0
    %2639 = vmatpush1.msra.mxu0 0.0
    %2640 = vmatprep.subr.mxu0 0.0
    %2641 = vmatpush1.msra.mxu0 0.0
    %2642 = vmatprep.subr.mxu0 0.0
    %2643 = vmatpush1.msra.mxu0 0.0
    %2644 = vmatprep.subr.mxu0 0.0
    %2645 = vmatpush1.msra.mxu0 0.0
    %2646 = vmatprep.subr.mxu0 0.0
    %2647 = vmatpush1.msra.mxu0 0.0
    %2648 = vmatprep.subr.mxu0 0.0
    %2649 = vmatpush1.msra.mxu0 0.0
    %2650 = vmatprep.subr.mxu0 0.0
    %2651 = vmatpush1.msra.mxu0 0.0
    %2652 = vmatprep.subr.mxu0 0.0
    %2653 = vmatpush1.msra.mxu0 0.0
    %2654 = vmatprep.subr.mxu0 0.0
    %2655 = vmatpush1.msra.mxu0 0.0
    %2656 = vmatprep.mubr.f32.mxu0 0.0
    %2657 = vmatmul.mubr.f32.gmra.mrb[0].mxu0 %v2587
    %v2658 = vpop.f32.mrb[0].mxu0
    %v2659 = vadd.f32 0.0, %v2658
    %v2660 = vpop.f32.mrb[0].mxu0
    %2661 = vmatprep.mubr.f32.mxu0 0.0
    %2662 = vmatmul.mubr.f32.gmra.mrb[0].mxu0 %v2590
    %v2663 = vpop.f32.mrb[0].mxu0
    %v2664 = vadd.f32 0.0, %v2663
    %v2665 = vpop.f32.mrb[0].mxu0
    %2666 = vdwg.mxu0
    %v2667 = vadd.f32 %v2578, %v2659
    %v2668 = vadd.f32 %v2583, %v2664
    %v2670 = vsel %vm670, %v2422, 0
    %v2673 = vsel %vm670, %v2423, 0
    %2675 = vmatprep.subr.mxu0 0.0
    %2676 = vmatpush1.msra.mxu0 %v2243
    %2677 = vmatprep.subr.mxu0 0.0
    %2678 = vmatpush1.msra.mxu0 0.0
    %2679 = vmatprep.subr.mxu0 0.0
    %2680 = vmatpush1.msra.mxu0 0.0
    %2681 = vmatprep.subr.mxu0 0.0
    %2682 = vmatpush1.msra.mxu0 0.0
    %2683 = vmatprep.subr.mxu0 0.0
    %2684 = vmatpush1.msra.mxu0 0.0
    %2685 = vmatprep.subr.mxu0 0.0
    %2686 = vmatpush1.msra.mxu0 0.0
    %2687 = vmatprep.subr.mxu0 0.0
    %2688 = vmatpush1.msra.mxu0 0.0
    %2689 = vmatprep.subr.mxu0 0.0
    %2690 = vmatpush1.msra.mxu0 0.0
    %2691 = vmatprep.subr.mxu0 0.0
    %2692 = vmatpush1.msra.mxu0 0.0
    %2693 = vmatprep.subr.mxu0 0.0
    %2694 = vmatpush1.msra.mxu0 0.0
    %2695 = vmatprep.subr.mxu0 0.0
    %2696 = vmatpush1.msra.mxu0 0.0
    %2697 = vmatprep.subr.mxu0 0.0
    %2698 = vmatpush1.msra.mxu0 0.0
    %2699 = vmatprep.subr.mxu0 0.0
    %2700 = vmatpush1.msra.mxu0 0.0
    %2701 = vmatprep.subr.mxu0 0.0
    %2702 = vmatpush1.msra.mxu0 0.0
    %2703 = vmatprep.subr.mxu0 0.0
    %2704 = vmatpush1.msra.mxu0 0.0
    %2705 = vmatprep.subr.mxu0 0.0
    %2706 = vmatpush1.msra.mxu0 0.0
    %2707 = vmatprep.subr.mxu0 0.0
    %2708 = vmatpush1.msra.mxu0 0.0
    %2709 = vmatprep.subr.mxu0 0.0
    %2710 = vmatpush1.msra.mxu0 0.0
    %2711 = vmatprep.subr.mxu0 0.0
    %2712 = vmatpush1.msra.mxu0 0.0
    %2713 = vmatprep.subr.mxu0 0.0
    %2714 = vmatpush1.msra.mxu0 0.0
    %2715 = vmatprep.subr.mxu0 0.0
    %2716 = vmatpush1.msra.mxu0 0.0
    %2717 = vmatprep.subr.mxu0 0.0
    %2718 = vmatpush1.msra.mxu0 0.0
    %2719 = vmatprep.subr.mxu0 0.0
    %2720 = vmatpush1.msra.mxu0 0.0
    %2721 = vmatprep.subr.mxu0 0.0
    %2722 = vmatpush1.msra.mxu0 0.0
    %2723 = vmatprep.subr.mxu0 0.0
    %2724 = vmatpush1.msra.mxu0 0.0
    %2725 = vmatprep.subr.mxu0 0.0
    %2726 = vmatpush1.msra.mxu0 0.0
    %2727 = vmatprep.subr.mxu0 0.0
    %2728 = vmatpush1.msra.mxu0 0.0
    %2729 = vmatprep.subr.mxu0 0.0
    %2730 = vmatpush1.msra.mxu0 0.0
    %2731 = vmatprep.subr.mxu0 0.0
    %2732 = vmatpush1.msra.mxu0 0.0
    %2733 = vmatprep.subr.mxu0 0.0
    %2734 = vmatpush1.msra.mxu0 0.0
    %2735 = vmatprep.subr.mxu0 0.0
    %2736 = vmatpush1.msra.mxu0 0.0
    %2737 = vmatprep.subr.mxu0 0.0
    %2738 = vmatpush1.msra.mxu0 0.0
    %2739 = vmatprep.mubr.f32.mxu0 0.0
    %2740 = vmatmul.mubr.f32.gmra.mrb[0].mxu0 %v2670
    %v2741 = vpop.f32.mrb[0].mxu0
    %v2742 = vadd.f32 0.0, %v2741
    %v2743 = vpop.f32.mrb[0].mxu0
    %2744 = vmatprep.mubr.f32.mxu0 0.0
    %2745 = vmatmul.mubr.f32.gmra.mrb[0].mxu0 %v2673
    %v2746 = vpop.f32.mrb[0].mxu0
    %v2747 = vadd.f32 0.0, %v2746
    %v2748 = vpop.f32.mrb[0].mxu0
    %2749 = vdwg.mxu0
    %v2750 = vadd.f32 %v2667, %v2742
    %v2751 = vadd.f32 %v2668, %v2747
    %v2753 = vlaneseq
    %v2754 = vshrl.u32 %v2753, 7
    %v2755 = vsub.s32 0, %v2754
    %v2756 = vrot.slane %v2244, %v2755
    %v2758 = vadd.f32 %v2750, %v2756
    %v2759 = vadd.f32 %v2751, %v2756
    %vm2760 = vcmp.gt.f32.partialorder %v2758, 0.0
    %vm2761 = vcmp.gt.f32.partialorder %v2759, 0.0
    %v2762 = vmin.f32 %v2758, 0.0
    %v2763 = vmin.f32 %v2759, 0.0
    %v2764 = vmul.f32 %v2762, 1.442695
    %v2765 = vpow.pop %v2764
    %v2766 = vmul.f32 %v2763, 1.442695
    %v2767 = vpow.pop %v2766
    %v2768 = vsub.f32 %v2765, 1.0
    %v2769 = vsub.f32 %v2767, 1.0
    %v2770 = vsel %vm2760, %v2758, %v2768
    %v2771 = vsel %vm2761, %v2759, %v2769
    %v2772 = vmul.f32 %v2770, %v2228
    %v2773 = vmul.f32 %v2771, %v2229
    %v2775 = vlaneseq
    %v2776 = vshrl.u32 %v2775, 7
    %v2777 = vsub.s32 0, %v2776
    %v2778 = vrot.slane %v2246, %v2777
    %v2781 = vsel %vm670, %v2230, 0
    %v2784 = vsel %vm670, %v2231, 0
    %2786 = vmatprep.subr.mxu0 0.0
    %2787 = vmatpush1.msra.mxu0 %v2245
    %2788 = vmatprep.subr.mxu0 0.0
    %2789 = vmatpush1.msra.mxu0 0.0
    %2790 = vmatprep.subr.mxu0 0.0
    %2791 = vmatpush1.msra.mxu0 0.0
    %2792 = vmatprep.subr.mxu0 0.0
    %2793 = vmatpush1.msra.mxu0 0.0
    %2794 = vmatprep.subr.mxu0 0.0
    %2795 = vmatpush1.msra.mxu0 0.0
    %2796 = vmatprep.subr.mxu0 0.0
    %2797 = vmatpush1.msra.mxu0 0.0
    %2798 = vmatprep.subr.mxu0 0.0
    %2799 = vmatpush1.msra.mxu0 0.0
    %2800 = vmatprep.subr.mxu0 0.0
    %2801 = vmatpush1.msra.mxu0 0.0
    %2802 = vmatprep.subr.mxu0 0.0
    %2803 = vmatpush1.msra.mxu0 0.0
    %2804 = vmatprep.subr.mxu0 0.0
    %2805 = vmatpush1.msra.mxu0 0.0
    %2806 = vmatprep.subr.mxu0 0.0
    %2807 = vmatpush1.msra.mxu0 0.0
    %2808 = vmatprep.subr.mxu0 0.0
    %2809 = vmatpush1.msra.mxu0 0.0
    %2810 = vmatprep.subr.mxu0 0.0
    %2811 = vmatpush1.msra.mxu0 0.0
    %2812 = vmatprep.subr.mxu0 0.0
    %2813 = vmatpush1.msra.mxu0 0.0
    %2814 = vmatprep.subr.mxu0 0.0
    %2815 = vmatpush1.msra.mxu0 0.0
    %2816 = vmatprep.subr.mxu0 0.0
    %2817 = vmatpush1.msra.mxu0 0.0
    %2818 = vmatprep.subr.mxu0 0.0
    %2819 = vmatpush1.msra.mxu0 0.0
    %2820 = vmatprep.subr.mxu0 0.0
    %2821 = vmatpush1.msra.mxu0 0.0
    %2822 = vmatprep.subr.mxu0 0.0
    %2823 = vmatpush1.msra.mxu0 0.0
    %2824 = vmatprep.subr.mxu0 0.0
    %2825 = vmatpush1.msra.mxu0 0.0
    %2826 = vmatprep.subr.mxu0 0.0
    %2827 = vmatpush1.msra.mxu0 0.0
    %2828 = vmatprep.subr.mxu0 0.0
    %2829 = vmatpush1.msra.mxu0 0.0
    %2830 = vmatprep.subr.mxu0 0.0
    %2831 = vmatpush1.msra.mxu0 0.0
    %2832 = vmatprep.subr.mxu0 0.0
    %2833 = vmatpush1.msra.mxu0 0.0
    %2834 = vmatprep.subr.mxu0 0.0
    %2835 = vmatpush1.msra.mxu0 0.0
    %2836 = vmatprep.subr.mxu0 0.0
    %2837 = vmatpush1.msra.mxu0 0.0
    %2838 = vmatprep.subr.mxu0 0.0
    %2839 = vmatpush1.msra.mxu0 0.0
    %2840 = vmatprep.subr.mxu0 0.0
    %2841 = vmatpush1.msra.mxu0 0.0
    %2842 = vmatprep.subr.mxu0 0.0
    %2843 = vmatpush1.msra.mxu0 0.0
    %2844 = vmatprep.subr.mxu0 0.0
    %2845 = vmatpush1.msra.mxu0 0.0
    %2846 = vmatprep.subr.mxu0 0.0
    %2847 = vmatpush1.msra.mxu0 0.0
    %2848 = vmatprep.subr.mxu0 0.0
    %2849 = vmatpush1.msra.mxu0 0.0
    %2850 = vmatprep.mubr.f32.mxu0 0.0
    %2851 = vmatmul.mubr.f32.gmra.mrb[0].mxu0 %v2781
    %v2852 = vpop.f32.mrb[0].mxu0
    %v2853 = vadd.f32 %v2778, %v2852
    %v2854 = vpop.f32.mrb[0].mxu0
    %2855 = vmatprep.mubr.f32.mxu0 0.0
    %2856 = vmatmul.mubr.f32.gmra.mrb[0].mxu0 %v2784
    %v2857 = vpop.f32.mrb[0].mxu0
    %v2858 = vadd.f32 %v2778, %v2857
    %v2859 = vpop.f32.mrb[0].mxu0
    %2860 = vdwg.mxu0
    %v2861 = vadd.f32 %v2772, %v2853
    %v2862 = vadd.f32 %v2773, %v2858
    %v2863 = vmul.f32 %v2861, %v2228
    %v2864 = vmul.f32 %v2862, %v2229
    %v2865 = vld [vmem:[%s17] sm:$0xff]
    %v2866 = vld [vmem:[%s17 + $0x8] sm:$0xff]
    %v2867 = vld [vmem:[%s17 + $0x10] sm:$0xff]
    %v2868 = vld [vmem:[%s17 + $0x18] sm:$0xff]
    %v2869 = vld [vmem:[%s17 + $0x20] sm:$0xff]
    %v2870 = vld [vmem:[%s17 + $0x28] sm:$0xff]
    %v2871 = vld [vmem:[%s17 + $0x30] sm:$0xff]
    %v2872 = vld [vmem:[%s17 + $0x38] sm:$0xff]
    %v2873 = vld [vmem:[%s18] sm:$0xff]
    %v2874 = vld [vmem:[%s18 + $0x8] sm:$0xff]
    %v2875 = vld [vmem:[%s18 + $0x10] sm:$0xff]
    %v2876 = vld [vmem:[%s18 + $0x18] sm:$0xff]
    %v2877 = vld [vmem:[%s19] sm:$0x1]
    %v2878 = vld [vmem:[%s20] sm:$0xff]
    %v2879 = vld [vmem:[%s21] sm:$0x1]
    %v2881 = vsel %vm1992, %v2865, 0
    %v2884 = vsel %vm1992, %v2866, 0
    %v2887 = vsel %vm1992, %v2867, 0
    %v2890 = vsel %vm1992, %v2868, 0
    %v2893 = vsel %vm1992, %v2869, 0
    %v2896 = vsel %vm1992, %v2870, 0
    %v2899 = vsel %vm1992, %v2871, 0
    %v2902 = vsel %vm1992, %v2872, 0
    %2904 = vmatprep.subr.mxu0 0.0
    %2905 = vmatpush1.msra.mxu0 %v2863
    %2906 = vmatprep.subr.mxu0 0.0
    %2907 = vmatpush1.msra.mxu0 %v2864
    %2908 = vmatprep.subr.mxu0 0.0
    %2909 = vmatpush1.msra.mxu0 0.0
    %2910 = vmatprep.subr.mxu0 0.0
    %2911 = vmatpush1.msra.mxu0 0.0
    %2912 = vmatprep.subr.mxu0 0.0
    %2913 = vmatpush1.msra.mxu0 0.0
    %2914 = vmatprep.subr.mxu0 0.0
    %2915 = vmatpush1.msra.mxu0 0.0
    %2916 = vmatprep.subr.mxu0 0.0
    %2917 = vmatpush1.msra.mxu0 0.0
    %2918 = vmatprep.subr.mxu0 0.0
    %2919 = vmatpush1.msra.mxu0 0.0
    %2920 = vmatprep.subr.mxu0 0.0
    %2921 = vmatpush1.msra.mxu0 0.0
    %2922 = vmatprep.subr.mxu0 0.0
    %2923 = vmatpush1.msra.mxu0 0.0
    %2924 = vmatprep.subr.mxu0 0.0
    %2925 = vmatpush1.msra.mxu0 0.0
    %2926 = vmatprep.subr.mxu0 0.0
    %2927 = vmatpush1.msra.mxu0 0.0
    %2928 = vmatprep.subr.mxu0 0.0
    %2929 = vmatpush1.msra.mxu0 0.0
    %2930 = vmatprep.subr.mxu0 0.0
    %2931 = vmatpush1.msra.mxu0 0.0
    %2932 = vmatprep.subr.mxu0 0.0
    %2933 = vmatpush1.msra.mxu0 0.0
    %2934 = vmatprep.subr.mxu0 0.0
    %2935 = vmatpush1.msra.mxu0 0.0
    %2936 = vmatprep.subr.mxu0 0.0
    %2937 = vmatpush1.msra.mxu0 0.0
    %2938 = vmatprep.subr.mxu0 0.0
    %2939 = vmatpush1.msra.mxu0 0.0
    %2940 = vmatprep.subr.mxu0 0.0
    %2941 = vmatpush1.msra.mxu0 0.0
    %2942 = vmatprep.subr.mxu0 0.0
    %2943 = vmatpush1.msra.mxu0 0.0
    %2944 = vmatprep.subr.mxu0 0.0
    %2945 = vmatpush1.msra.mxu0 0.0
    %2946 = vmatprep.subr.mxu0 0.0
    %2947 = vmatpush1.msra.mxu0 0.0
    %2948 = vmatprep.subr.mxu0 0.0
    %2949 = vmatpush1.msra.mxu0 0.0
    %2950 = vmatprep.subr.mxu0 0.0
    %2951 = vmatpush1.msra.mxu0 0.0
    %2952 = vmatprep.subr.mxu0 0.0
    %2953 = vmatpush1.msra.mxu0 0.0
    %2954 = vmatprep.subr.mxu0 0.0
    %2955 = vmatpush1.msra.mxu0 0.0
    %2956 = vmatprep.subr.mxu0 0.0
    %2957 = vmatpush1.msra.mxu0 0.0
    %2958 = vmatprep.subr.mxu0 0.0
    %2959 = vmatpush1.msra.mxu0 0.0
    %2960 = vmatprep.subr.mxu0 0.0
    %2961 = vmatpush1.msra.mxu0 0.0
    %2962 = vmatprep.subr.mxu0 0.0
    %2963 = vmatpush1.msra.mxu0 0.0
    %2964 = vmatprep.subr.mxu0 0.0
    %2965 = vmatpush1.msra.mxu0 0.0
    %2966 = vmatprep.subr.mxu0 0.0
    %2967 = vmatpush1.msra.mxu0 0.0
    %2968 = vmatprep.mubr.f32.mxu0 0.0
    %2969 = vmatmul.mubr.f32.gmra.mrb[0].mxu0 %v2881
    %v2970 = vpop.f32.mrb[0].mxu0
    %v2971 = vadd.f32 0.0, %v2970
    %v2972 = vpop.f32.mrb[0].mxu0
    %2973 = vmatprep.mubr.f32.mxu0 0.0
    %2974 = vmatmul.mubr.f32.gmra.mrb[0].mxu0 %v2884
    %v2975 = vpop.f32.mrb[0].mxu0
    %v2976 = vadd.f32 0.0, %v2975
    %v2977 = vpop.f32.mrb[0].mxu0
    %2978 = vmatprep.mubr.f32.mxu0 0.0
    %2979 = vmatmul.mubr.f32.gmra.mrb[0].mxu0 %v2887
    %v2980 = vpop.f32.mrb[0].mxu0
    %v2981 = vadd.f32 0.0, %v2980
    %v2982 = vpop.f32.mrb[0].mxu0
    %2983 = vmatprep.mubr.f32.mxu0 0.0
    %2984 = vmatmul.mubr.f32.gmra.mrb[0].mxu0 %v2890
    %v2985 = vpop.f32.mrb[0].mxu0
    %v2986 = vadd.f32 0.0, %v2985
    %v2987 = vpop.f32.mrb[0].mxu0
    %2988 = vmatprep.mubr.f32.mxu0 0.0
    %2989 = vmatmul.mubr.f32.gmra.mrb[0].mxu0 %v2893
    %v2990 = vpop.f32.mrb[0].mxu0
    %v2991 = vadd.f32 0.0, %v2990
    %v2992 = vpop.f32.mrb[0].mxu0
    %2993 = vmatprep.mubr.f32.mxu0 0.0
    %2994 = vmatmul.mubr.f32.gmra.mrb[0].mxu0 %v2896
    %v2995 = vpop.f32.mrb[0].mxu0
    %v2996 = vadd.f32 0.0, %v2995
    %v2997 = vpop.f32.mrb[0].mxu0
    %2998 = vmatprep.mubr.f32.mxu0 0.0
    %2999 = vmatmul.mubr.f32.gmra.mrb[0].mxu0 %v2899
    %v3000 = vpop.f32.mrb[0].mxu0
    %v3001 = vadd.f32 0.0, %v3000
    %v3002 = vpop.f32.mrb[0].mxu0
    %3003 = vmatprep.mubr.f32.mxu0 0.0
    %3004 = vmatmul.mubr.f32.gmra.mrb[0].mxu0 %v2902
    %v3005 = vpop.f32.mrb[0].mxu0
    %v3006 = vadd.f32 0.0, %v3005
    %v3007 = vpop.f32.mrb[0].mxu0
    %3008 = vdwg.mxu0
    %v3010 = vsel %vm670, %v2981, 0
    %v3013 = vsel %vm670, %v2986, 0
    %3015 = vmatprep.subr.mxu0 0.0
    %3016 = vmatpush1.msra.mxu0 %v2874
    %3017 = vmatprep.subr.mxu0 0.0
    %3018 = vmatpush1.msra.mxu0 0.0
    %3019 = vmatprep.subr.mxu0 0.0
    %3020 = vmatpush1.msra.mxu0 0.0
    %3021 = vmatprep.subr.mxu0 0.0
    %3022 = vmatpush1.msra.mxu0 0.0
    %3023 = vmatprep.subr.mxu0 0.0
    %3024 = vmatpush1.msra.mxu0 0.0
    %3025 = vmatprep.subr.mxu0 0.0
    %3026 = vmatpush1.msra.mxu0 0.0
    %3027 = vmatprep.subr.mxu0 0.0
    %3028 = vmatpush1.msra.mxu0 0.0
    %3029 = vmatprep.subr.mxu0 0.0
    %3030 = vmatpush1.msra.mxu0 0.0
    %3031 = vmatprep.subr.mxu0 0.0
    %3032 = vmatpush1.msra.mxu0 0.0
    %3033 = vmatprep.subr.mxu0 0.0
    %3034 = vmatpush1.msra.mxu0 0.0
    %3035 = vmatprep.subr.mxu0 0.0
    %3036 = vmatpush1.msra.mxu0 0.0
    %3037 = vmatprep.subr.mxu0 0.0
    %3038 = vmatpush1.msra.mxu0 0.0
    %3039 = vmatprep.subr.mxu0 0.0
    %3040 = vmatpush1.msra.mxu0 0.0
    %3041 = vmatprep.subr.mxu0 0.0
    %3042 = vmatpush1.msra.mxu0 0.0
    %3043 = vmatprep.subr.mxu0 0.0
    %3044 = vmatpush1.msra.mxu0 0.0
    %3045 = vmatprep.subr.mxu0 0.0
    %3046 = vmatpush1.msra.mxu0 0.0
    %3047 = vmatprep.subr.mxu0 0.0
    %3048 = vmatpush1.msra.mxu0 0.0
    %3049 = vmatprep.subr.mxu0 0.0
    %3050 = vmatpush1.msra.mxu0 0.0
    %3051 = vmatprep.subr.mxu0 0.0
    %3052 = vmatpush1.msra.mxu0 0.0
    %3053 = vmatprep.subr.mxu0 0.0
    %3054 = vmatpush1.msra.mxu0 0.0
    %3055 = vmatprep.subr.mxu0 0.0
    %3056 = vmatpush1.msra.mxu0 0.0
    %3057 = vmatprep.subr.mxu0 0.0
    %3058 = vmatpush1.msra.mxu0 0.0
    %3059 = vmatprep.subr.mxu0 0.0
    %3060 = vmatpush1.msra.mxu0 0.0
    %3061 = vmatprep.subr.mxu0 0.0
    %3062 = vmatpush1.msra.mxu0 0.0
    %3063 = vmatprep.subr.mxu0 0.0
    %3064 = vmatpush1.msra.mxu0 0.0
    %3065 = vmatprep.subr.mxu0 0.0
    %3066 = vmatpush1.msra.mxu0 0.0
    %3067 = vmatprep.subr.mxu0 0.0
    %3068 = vmatpush1.msra.mxu0 0.0
    %3069 = vmatprep.subr.mxu0 0.0
    %3070 = vmatpush1.msra.mxu0 0.0
    %3071 = vmatprep.subr.mxu0 0.0
    %3072 = vmatpush1.msra.mxu0 0.0
    %3073 = vmatprep.subr.mxu0 0.0
    %3074 = vmatpush1.msra.mxu0 0.0
    %3075 = vmatprep.subr.mxu0 0.0
    %3076 = vmatpush1.msra.mxu0 0.0
    %3077 = vmatprep.subr.mxu0 0.0
    %3078 = vmatpush1.msra.mxu0 0.0
    %3079 = vmatprep.mubr.f32.mxu0 0.0
    %3080 = vmatmul.mubr.f32.gmra.mrb[0].mxu0 %v3010
    %v3081 = vpop.f32.mrb[0].mxu0
    %v3082 = vadd.f32 0.0, %v3081
    %v3083 = vpop.f32.mrb[0].mxu0
    %3084 = vmatprep.mubr.f32.mxu0 0.0
    %3085 = vmatmul.mubr.f32.gmra.mrb[0].mxu0 %v3013
    %v3086 = vpop.f32.mrb[0].mxu0
    %v3087 = vadd.f32 0.0, %v3086
    %v3088 = vpop.f32.mrb[0].mxu0
    %3089 = vdwg.mxu0
    %v3091 = vsel %vm670, %v2971, 0
    %v3094 = vsel %vm670, %v2976, 0
    %3096 = vmatprep.subr.mxu0 0.0
    %3097 = vmatpush1.msra.mxu0 %v2873
    %3098 = vmatprep.subr.mxu0 0.0
    %3099 = vmatpush1.msra.mxu0 0.0
    %3100 = vmatprep.subr.mxu0 0.0
    %3101 = vmatpush1.msra.mxu0 0.0
    %3102 = vmatprep.subr.mxu0 0.0
    %3103 = vmatpush1.msra.mxu0 0.0
    %3104 = vmatprep.subr.mxu0 0.0
    %3105 = vmatpush1.msra.mxu0 0.0
    %3106 = vmatprep.subr.mxu0 0.0
    %3107 = vmatpush1.msra.mxu0 0.0
    %3108 = vmatprep.subr.mxu0 0.0
    %3109 = vmatpush1.msra.mxu0 0.0
    %3110 = vmatprep.subr.mxu0 0.0
    %3111 = vmatpush1.msra.mxu0 0.0
    %3112 = vmatprep.subr.mxu0 0.0
    %3113 = vmatpush1.msra.mxu0 0.0
    %3114 = vmatprep.subr.mxu0 0.0
    %3115 = vmatpush1.msra.mxu0 0.0
    %3116 = vmatprep.subr.mxu0 0.0
    %3117 = vmatpush1.msra.mxu0 0.0
    %3118 = vmatprep.subr.mxu0 0.0
    %3119 = vmatpush1.msra.mxu0 0.0
    %3120 = vmatprep.subr.mxu0 0.0
    %3121 = vmatpush1.msra.mxu0 0.0
    %3122 = vmatprep.subr.mxu0 0.0
    %3123 = vmatpush1.msra.mxu0 0.0
    %3124 = vmatprep.subr.mxu0 0.0
    %3125 = vmatpush1.msra.mxu0 0.0
    %3126 = vmatprep.subr.mxu0 0.0
    %3127 = vmatpush1.msra.mxu0 0.0
    %3128 = vmatprep.subr.mxu0 0.0
    %3129 = vmatpush1.msra.mxu0 0.0
    %3130 = vmatprep.subr.mxu0 0.0
    %3131 = vmatpush1.msra.mxu0 0.0
    %3132 = vmatprep.subr.mxu0 0.0
    %3133 = vmatpush1.msra.mxu0 0.0
    %3134 = vmatprep.subr.mxu0 0.0
    %3135 = vmatpush1.msra.mxu0 0.0
    %3136 = vmatprep.subr.mxu0 0.0
    %3137 = vmatpush1.msra.mxu0 0.0
    %3138 = vmatprep.subr.mxu0 0.0
    %3139 = vmatpush1.msra.mxu0 0.0
    %3140 = vmatprep.subr.mxu0 0.0
    %3141 = vmatpush1.msra.mxu0 0.0
    %3142 = vmatprep.subr.mxu0 0.0
    %3143 = vmatpush1.msra.mxu0 0.0
    %3144 = vmatprep.subr.mxu0 0.0
    %3145 = vmatpush1.msra.mxu0 0.0
    %3146 = vmatprep.subr.mxu0 0.0
    %3147 = vmatpush1.msra.mxu0 0.0
    %3148 = vmatprep.subr.mxu0 0.0
    %3149 = vmatpush1.msra.mxu0 0.0
    %3150 = vmatprep.subr.mxu0 0.0
    %3151 = vmatpush1.msra.mxu0 0.0
    %3152 = vmatprep.subr.mxu0 0.0
    %3153 = vmatpush1.msra.mxu0 0.0
    %3154 = vmatprep.subr.mxu0 0.0
    %3155 = vmatpush1.msra.mxu0 0.0
    %3156 = vmatprep.subr.mxu0 0.0
    %3157 = vmatpush1.msra.mxu0 0.0
    %3158 = vmatprep.subr.mxu0 0.0
    %3159 = vmatpush1.msra.mxu0 0.0
    %3160 = vmatprep.mubr.f32.mxu0 0.0
    %3161 = vmatmul.mubr.f32.gmra.mrb[0].mxu0 %v3091
    %v3162 = vpop.f32.mrb[0].mxu0
    %v3163 = vadd.f32 %v3082, %v3162
    %v3164 = vpop.f32.mrb[0].mxu0
    %3165 = vmatprep.mubr.f32.mxu0 0.0
    %3166 = vmatmul.mubr.f32.gmra.mrb[0].mxu0 %v3094
    %v3167 = vpop.f32.mrb[0].mxu0
    %v3168 = vadd.f32 %v3087, %v3167
    %v3169 = vpop.f32.mrb[0].mxu0
    %3170 = vdwg.mxu0
    %v3172 = vsel %vm670, %v2991, 0
    %v3175 = vsel %vm670, %v2996, 0
    %3177 = vmatprep.subr.mxu0 0.0
    %3178 = vmatpush1.msra.mxu0 %v2875
    %3179 = vmatprep.subr.mxu0 0.0
    %3180 = vmatpush1.msra.mxu0 0.0
    %3181 = vmatprep.subr.mxu0 0.0
    %3182 = vmatpush1.msra.mxu0 0.0
    %3183 = vmatprep.subr.mxu0 0.0
    %3184 = vmatpush1.msra.mxu0 0.0
    %3185 = vmatprep.subr.mxu0 0.0
    %3186 = vmatpush1.msra.mxu0 0.0
    %3187 = vmatprep.subr.mxu0 0.0
    %3188 = vmatpush1.msra.mxu0 0.0
    %3189 = vmatprep.subr.mxu0 0.0
    %3190 = vmatpush1.msra.mxu0 0.0
    %3191 = vmatprep.subr.mxu0 0.0
    %3192 = vmatpush1.msra.mxu0 0.0
    %3193 = vmatprep.subr.mxu0 0.0
    %3194 = vmatpush1.msra.mxu0 0.0
    %3195 = vmatprep.subr.mxu0 0.0
    %3196 = vmatpush1.msra.mxu0 0.0
    %3197 = vmatprep.subr.mxu0 0.0
    %3198 = vmatpush1.msra.mxu0 0.0
    %3199 = vmatprep.subr.mxu0 0.0
    %3200 = vmatpush1.msra.mxu0 0.0
    %3201 = vmatprep.subr.mxu0 0.0
    %3202 = vmatpush1.msra.mxu0 0.0
    %3203 = vmatprep.subr.mxu0 0.0
    %3204 = vmatpush1.msra.mxu0 0.0
    %3205 = vmatprep.subr.mxu0 0.0
    %3206 = vmatpush1.msra.mxu0 0.0
    %3207 = vmatprep.subr.mxu0 0.0
    %3208 = vmatpush1.msra.mxu0 0.0
    %3209 = vmatprep.subr.mxu0 0.0
    %3210 = vmatpush1.msra.mxu0 0.0
    %3211 = vmatprep.subr.mxu0 0.0
    %3212 = vmatpush1.msra.mxu0 0.0
    %3213 = vmatprep.subr.mxu0 0.0
    %3214 = vmatpush1.msra.mxu0 0.0
    %3215 = vmatprep.subr.mxu0 0.0
    %3216 = vmatpush1.msra.mxu0 0.0
    %3217 = vmatprep.subr.mxu0 0.0
    %3218 = vmatpush1.msra.mxu0 0.0
    %3219 = vmatprep.subr.mxu0 0.0
    %3220 = vmatpush1.msra.mxu0 0.0
    %3221 = vmatprep.subr.mxu0 0.0
    %3222 = vmatpush1.msra.mxu0 0.0
    %3223 = vmatprep.subr.mxu0 0.0
    %3224 = vmatpush1.msra.mxu0 0.0
    %3225 = vmatprep.subr.mxu0 0.0
    %3226 = vmatpush1.msra.mxu0 0.0
    %3227 = vmatprep.subr.mxu0 0.0
    %3228 = vmatpush1.msra.mxu0 0.0
    %3229 = vmatprep.subr.mxu0 0.0
    %3230 = vmatpush1.msra.mxu0 0.0
    %3231 = vmatprep.subr.mxu0 0.0
    %3232 = vmatpush1.msra.mxu0 0.0
    %3233 = vmatprep.subr.mxu0 0.0
    %3234 = vmatpush1.msra.mxu0 0.0
    %3235 = vmatprep.subr.mxu0 0.0
    %3236 = vmatpush1.msra.mxu0 0.0
    %3237 = vmatprep.subr.mxu0 0.0
    %3238 = vmatpush1.msra.mxu0 0.0
    %3239 = vmatprep.subr.mxu0 0.0
    %3240 = vmatpush1.msra.mxu0 0.0
    %3241 = vmatprep.mubr.f32.mxu0 0.0
    %3242 = vmatmul.mubr.f32.gmra.mrb[0].mxu0 %v3172
    %v3243 = vpop.f32.mrb[0].mxu0
    %v3244 = vadd.f32 0.0, %v3243
    %v3245 = vpop.f32.mrb[0].mxu0
    %3246 = vmatprep.mubr.f32.mxu0 0.0
    %3247 = vmatmul.mubr.f32.gmra.mrb[0].mxu0 %v3175
    %v3248 = vpop.f32.mrb[0].mxu0
    %v3249 = vadd.f32 0.0, %v3248
    %v3250 = vpop.f32.mrb[0].mxu0
    %3251 = vdwg.mxu0
    %v3252 = vadd.f32 %v3163, %v3244
    %v3253 = vadd.f32 %v3168, %v3249
    %v3255 = vsel %vm670, %v3001, 0
    %v3258 = vsel %vm670, %v3006, 0
    %3260 = vmatprep.subr.mxu0 0.0
    %3261 = vmatpush1.msra.mxu0 %v2876
    %3262 = vmatprep.subr.mxu0 0.0
    %3263 = vmatpush1.msra.mxu0 0.0
    %3264 = vmatprep.subr.mxu0 0.0
    %3265 = vmatpush1.msra.mxu0 0.0
    %3266 = vmatprep.subr.mxu0 0.0
    %3267 = vmatpush1.msra.mxu0 0.0
    %3268 = vmatprep.subr.mxu0 0.0
    %3269 = vmatpush1.msra.mxu0 0.0
    %3270 = vmatprep.subr.mxu0 0.0
    %3271 = vmatpush1.msra.mxu0 0.0
    %3272 = vmatprep.subr.mxu0 0.0
    %3273 = vmatpush1.msra.mxu0 0.0
    %3274 = vmatprep.subr.mxu0 0.0
    %3275 = vmatpush1.msra.mxu0 0.0
    %3276 = vmatprep.subr.mxu0 0.0
    %3277 = vmatpush1.msra.mxu0 0.0
    %3278 = vmatprep.subr.mxu0 0.0
    %3279 = vmatpush1.msra.mxu0 0.0
    %3280 = vmatprep.subr.mxu0 0.0
    %3281 = vmatpush1.msra.mxu0 0.0
    %3282 = vmatprep.subr.mxu0 0.0
    %3283 = vmatpush1.msra.mxu0 0.0
    %3284 = vmatprep.subr.mxu0 0.0
    %3285 = vmatpush1.msra.mxu0 0.0
    %3286 = vmatprep.subr.mxu0 0.0
    %3287 = vmatpush1.msra.mxu0 0.0
    %3288 = vmatprep.subr.mxu0 0.0
    %3289 = vmatpush1.msra.mxu0 0.0
    %3290 = vmatprep.subr.mxu0 0.0
    %3291 = vmatpush1.msra.mxu0 0.0
    %3292 = vmatprep.subr.mxu0 0.0
    %3293 = vmatpush1.msra.mxu0 0.0
    %3294 = vmatprep.subr.mxu0 0.0
    %3295 = vmatpush1.msra.mxu0 0.0
    %3296 = vmatprep.subr.mxu0 0.0
    %3297 = vmatpush1.msra.mxu0 0.0
    %3298 = vmatprep.subr.mxu0 0.0
    %3299 = vmatpush1.msra.mxu0 0.0
    %3300 = vmatprep.subr.mxu0 0.0
    %3301 = vmatpush1.msra.mxu0 0.0
    %3302 = vmatprep.subr.mxu0 0.0
    %3303 = vmatpush1.msra.mxu0 0.0
    %3304 = vmatprep.subr.mxu0 0.0
    %3305 = vmatpush1.msra.mxu0 0.0
    %3306 = vmatprep.subr.mxu0 0.0
    %3307 = vmatpush1.msra.mxu0 0.0
    %3308 = vmatprep.subr.mxu0 0.0
    %3309 = vmatpush1.msra.mxu0 0.0
    %3310 = vmatprep.subr.mxu0 0.0
    %3311 = vmatpush1.msra.mxu0 0.0
    %3312 = vmatprep.subr.mxu0 0.0
    %3313 = vmatpush1.msra.mxu0 0.0
    %3314 = vmatprep.subr.mxu0 0.0
    %3315 = vmatpush1.msra.mxu0 0.0
    %3316 = vmatprep.subr.mxu0 0.0
    %3317 = vmatpush1.msra.mxu0 0.0
    %3318 = vmatprep.subr.mxu0 0.0
    %3319 = vmatpush1.msra.mxu0 0.0
    %3320 = vmatprep.subr.mxu0 0.0
    %3321 = vmatpush1.msra.mxu0 0.0
    %3322 = vmatprep.subr.mxu0 0.0
    %3323 = vmatpush1.msra.mxu0 0.0
    %3324 = vmatprep.mubr.f32.mxu0 0.0
    %3325 = vmatmul.mubr.f32.gmra.mrb[0].mxu0 %v3255
    %v3326 = vpop.f32.mrb[0].mxu0
    %v3327 = vadd.f32 0.0, %v3326
    %v3328 = vpop.f32.mrb[0].mxu0
    %3329 = vmatprep.mubr.f32.mxu0 0.0
    %3330 = vmatmul.mubr.f32.gmra.mrb[0].mxu0 %v3258
    %v3331 = vpop.f32.mrb[0].mxu0
    %v3332 = vadd.f32 0.0, %v3331
    %v3333 = vpop.f32.mrb[0].mxu0
    %3334 = vdwg.mxu0
    %v3335 = vadd.f32 %v3252, %v3327
    %v3336 = vadd.f32 %v3253, %v3332
    %v3338 = vlaneseq
    %v3339 = vshrl.u32 %v3338, 7
    %v3340 = vsub.s32 0, %v3339
    %v3341 = vrot.slane %v2877, %v3340
    %v3343 = vadd.f32 %v3335, %v3341
    %v3344 = vadd.f32 %v3336, %v3341
    %v3345 = vmul.f32 %v3343, %v2228
    %v3346 = vmul.f32 %v3344, %v2229
    %v3348 = vlaneseq
    %v3349 = vshrl.u32 %v3348, 7
    %v3350 = vsub.s32 0, %v3349
    %v3351 = vrot.slane %v2879, %v3350
    %v3354 = vsel %vm670, %v2863, 0
    %v3357 = vsel %vm670, %v2864, 0
    %3359 = vmatprep.subr.mxu0 0.0
    %3360 = vmatpush1.msra.mxu0 %v2878
    %3361 = vmatprep.subr.mxu0 0.0
    %3362 = vmatpush1.msra.mxu0 0.0
    %3363 = vmatprep.subr.mxu0 0.0
    %3364 = vmatpush1.msra.mxu0 0.0
    %3365 = vmatprep.subr.mxu0 0.0
    %3366 = vmatpush1.msra.mxu0 0.0
    %3367 = vmatprep.subr.mxu0 0.0
    %3368 = vmatpush1.msra.mxu0 0.0
    %3369 = vmatprep.subr.mxu0 0.0
    %3370 = vmatpush1.msra.mxu0 0.0
    %3371 = vmatprep.subr.mxu0 0.0
    %3372 = vmatpush1.msra.mxu0 0.0
    %3373 = vmatprep.subr.mxu0 0.0
    %3374 = vmatpush1.msra.mxu0 0.0
    %3375 = vmatprep.subr.mxu0 0.0
    %3376 = vmatpush1.msra.mxu0 0.0
    %3377 = vmatprep.subr.mxu0 0.0
    %3378 = vmatpush1.msra.mxu0 0.0
    %3379 = vmatprep.subr.mxu0 0.0
    %3380 = vmatpush1.msra.mxu0 0.0
    %3381 = vmatprep.subr.mxu0 0.0
    %3382 = vmatpush1.msra.mxu0 0.0
    %3383 = vmatprep.subr.mxu0 0.0
    %3384 = vmatpush1.msra.mxu0 0.0
    %3385 = vmatprep.subr.mxu0 0.0
    %3386 = vmatpush1.msra.mxu0 0.0
    %3387 = vmatprep.subr.mxu0 0.0
    %3388 = vmatpush1.msra.mxu0 0.0
    %3389 = vmatprep.subr.mxu0 0.0
    %3390 = vmatpush1.msra.mxu0 0.0
    %3391 = vmatprep.subr.mxu0 0.0
    %3392 = vmatpush1.msra.mxu0 0.0
    %3393 = vmatprep.subr.mxu0 0.0
    %3394 = vmatpush1.msra.mxu0 0.0
    %3395 = vmatprep.subr.mxu0 0.0
    %3396 = vmatpush1.msra.mxu0 0.0
    %3397 = vmatprep.subr.mxu0 0.0
    %3398 = vmatpush1.msra.mxu0 0.0
    %3399 = vmatprep.subr.mxu0 0.0
    %3400 = vmatpush1.msra.mxu0 0.0
    %3401 = vmatprep.subr.mxu0 0.0
    %3402 = vmatpush1.msra.mxu0 0.0
    %3403 = vmatprep.subr.mxu0 0.0
    %3404 = vmatpush1.msra.mxu0 0.0
    %3405 = vmatprep.subr.mxu0 0.0
    %3406 = vmatpush1.msra.mxu0 0.0
    %3407 = vmatprep.subr.mxu0 0.0
    %3408 = vmatpush1.msra.mxu0 0.0
    %3409 = vmatprep.subr.mxu0 0.0
    %3410 = vmatpush1.msra.mxu0 0.0
    %3411 = vmatprep.subr.mxu0 0.0
    %3412 = vmatpush1.msra.mxu0 0.0
    %3413 = vmatprep.subr.mxu0 0.0
    %3414 = vmatpush1.msra.mxu0 0.0
    %3415 = vmatprep.subr.mxu0 0.0
    %3416 = vmatpush1.msra.mxu0 0.0
    %3417 = vmatprep.subr.mxu0 0.0
    %3418 = vmatpush1.msra.mxu0 0.0
    %3419 = vmatprep.subr.mxu0 0.0
    %3420 = vmatpush1.msra.mxu0 0.0
    %3421 = vmatprep.subr.mxu0 0.0
    %3422 = vmatpush1.msra.mxu0 0.0
    %3423 = vmatprep.mubr.f32.mxu0 0.0
    %3424 = vmatmul.mubr.f32.gmra.mrb[0].mxu0 %v3354
    %v3425 = vpop.f32.mrb[0].mxu0
    %v3426 = vadd.f32 %v3351, %v3425
    %v3427 = vpop.f32.mrb[0].mxu0
    %3428 = vmatprep.mubr.f32.mxu0 0.0
    %3429 = vmatmul.mubr.f32.gmra.mrb[0].mxu0 %v3357
    %v3430 = vpop.f32.mrb[0].mxu0
    %v3431 = vadd.f32 %v3351, %v3430
    %v3432 = vpop.f32.mrb[0].mxu0
    %3433 = vdwg.mxu0
    %v3434 = vadd.f32 %v3345, %v3426
    %v3435 = vadd.f32 %v3346, %v3431
    %vm3436 = vcmask 48128
    %3437 = vst.msk [vmem:[%s22] sm:$0xff] %vm3436, %v3434
    %3438 = vst.msk [vmem:[%s22 + $0x8] sm:$0xff] %vm3436, %v3435
    // Predicated region
    $region134: #{pai_autoencoder_forward.1} parent=1 // pred_check
      _
    $region135: #{pai_autoencoder_forward.1} parent=1 // pred_check_branch
      %3440 = sbr.rel (0) target = $region137
    $region136: #{pai_autoencoder_forward.1} parent=1 // pred_region
      _
    $region137: #{pai_autoencoder_forward.1} parent=1 // pred_fallthru
      _
    // Predicated region
    $region138: #{pai_autoencoder_forward.1} parent=1 // pred_check
      _
    $region139: #{pai_autoencoder_forward.1} parent=1 // pred_check_branch
      %3442 = sbr.rel (0) target = $region141
    $region140: #{pai_autoencoder_forward.1} parent=1 // pred_region
      _
    $region141: #{pai_autoencoder_forward.1} parent=1 // pred_fallthru
      _
    %3443 = vsyncpa [#allocation3], 1
    %3444 = vsyncpa [#allocation5], 1
    %3445 = vsyncpa [#allocation8], 1
    %3446 = vsyncpa [#allocation11], 1
    %3447 = vsyncpa [#allocation14], 1
    %3448 = vsyncpa [#allocation17], 1

</llo_original>
